<compile_context>
chip_gen: v6e
topology: v6e:2x2x1
jax: 0.10.0
libtpu: 0.0.40
codegen_flags: <defaults>
</compile_context>

<pallas_src>
import functools

import jax
import jax.numpy as jnp
from jax import lax
from jax.experimental import pallas as pl
from jax.experimental.pallas import tpu as pltpu

# ---------------- config ----------------
VOCAB = 100
MAX_POS = 32
TYPE_VOCAB = 2
HIDDEN = 32
N_HEADS = 4
HEAD_DIM = HIDDEN // N_HEADS
INTERMEDIATE = 64
N_LAYERS = 2
N_CLASSES = 3
EPS = 1e-12          # BERT LayerNorm eps
PAD_N = 128          # lane-dense logits slab width (classifier output padded to 128 lanes)


# ---------------- in-kernel math helpers (values, not refs; all f32) ----------------
def _layer_norm_f32(x, g, b):
    mean = jnp.mean(x, axis=-1, keepdims=True)
    var = jnp.mean(jnp.square(x - mean), axis=-1, keepdims=True)
    return (x - mean) * lax.rsqrt(var + EPS) * g + b


def _gelu_tanh(x):
    # TODO(synk): HF BERT uses exact erf-GELU; tanh approximation used here.
    return 0.5 * x * (1.0 + jnp.tanh(0.7978845608028654 * (x + 0.044715 * x * x * x)))


# ---------------- fully fused BERT kernel (one grid step == one encoder layer;
#                  pooler + classifier fused into the last step) ----------------
def _bert_kernel(h0_ref, mask_ref, eg_ref, eb_ref,
                 wqkv_ref, bqkv_ref, wo_ref, bo_ref, ln1g_ref, ln1b_ref,
                 wi_ref, bi_ref, wo2_ref, bo2_ref, ln2g_ref, ln2b_ref,
                 pw_ref, pb_ref, ow_ref, ob_ref,
                 logits_ref, h_scr, *, B, S):
    layer = pl.program_id(0)
    n_layers = pl.num_programs(0)

    # Layer 0: embedding LayerNorm seeds the VMEM-resident activation slab.
    @pl.when(layer == 0)
    def _():
        h_scr[...] = _layer_norm_f32(h0_ref[...], eg_ref[...], eb_ref[...])

    h = h_scr[...]                                   # (B*S, H) f32
    h_bf = h.astype(jnp.bfloat16)                    # bf16 MXU operands only

    # Q/K/V projections: weights stacked on a leading axis (3, H, H), so the
    # q/k/v split never needs lane-offset slices of a fused (M, 3H) result.
    # 1/sqrt(HEAD_DIM) is already folded into wq/bq (prepare_params).
    q = jnp.dot(h_bf, wqkv_ref[0, 0], preferred_element_type=jnp.float32) + bqkv_ref[0, 0]
    k = jnp.dot(h_bf, wqkv_ref[0, 1], preferred_element_type=jnp.float32) + bqkv_ref[0, 1]
    v = jnp.dot(h_bf, wqkv_ref[0, 2], preferred_element_type=jnp.float32) + bqkv_ref[0, 2]

    # Multi-head attention, entirely in registers/VMEM values.
    # Per head: one batched (B,S,D)x(B,S,D) score matmul and one batched p@v
    # matmul (batch dim = B), softmax amortized over the batch.
    mask3 = mask_ref[...][:, None, :]                # (B, 1, S) additive
    ctx_heads = []
    for hd in range(N_HEADS):
        cols = slice(hd * HEAD_DIM, (hd + 1) * HEAD_DIM)
        qh = q[:, cols].reshape(B, S, HEAD_DIM)      # leading-dim split (tile boundary)
        kh = k[:, cols].reshape(B, S, HEAD_DIM)
        vh = v[:, cols].reshape(B, S, HEAD_DIM)
        s = jnp.einsum('bqd,bkd->bqk', qh, kh, preferred_element_type=jnp.float32)
        s = s + mask3                                # scale already folded into wq/bq
        s = s - jnp.max(s, axis=-1, keepdims=True)
        p = jnp.exp(s)
        p = p * pl.reciprocal(jnp.sum(p, axis=-1, keepdims=True), approx=True)
        ch = jnp.einsum('bqk,bkd->bqd', p, vh, preferred_element_type=jnp.float32)
        ctx_heads.append(ch.reshape(B * S, HEAD_DIM))
    ctx = jnp.concatenate(ctx_heads, axis=-1)        # (B*S, H), no scratch round-trip

    # Attention output projection + residual + LayerNorm (fused).
    attn = jnp.dot(ctx.astype(jnp.bfloat16), wo_ref[0],
                   preferred_element_type=jnp.float32) + bo_ref[0]
    h = _layer_norm_f32(h + attn, ln1g_ref[0], ln1b_ref[0])

    # FFN (GELU) + residual + LayerNorm (fused).
    ff = jnp.dot(h.astype(jnp.bfloat16), wi_ref[0],
                 preferred_element_type=jnp.float32) + bi_ref[0]
    ff = _gelu_tanh(ff)
    ff = jnp.dot(ff.astype(jnp.bfloat16), wo2_ref[0],
                 preferred_element_type=jnp.float32) + bo2_ref[0]
    h = _layer_norm_f32(h + ff, ln2g_ref[0], ln2b_ref[0])

    h_scr[...] = h                                   # carry to next layer (VMEM-resident)

    # Last layer: fused pooler (tanh Linear on [CLS]) + dropout(identity) +
    # classifier, writing the lane-dense padded logits slab (only output).
    @pl.when(layer == n_layers - 1)
    def _():
        cls = jnp.concatenate([h[b * S:b * S + 1, :] for b in range(B)], axis=0)  # (B, H)
        pooled = jnp.tanh(
            jnp.dot(cls.astype(jnp.bfloat16), pw_ref[...],
                    preferred_element_type=jnp.float32) + pb_ref[...])
        logits_ref[...] = (
            jnp.dot(pooled.astype(jnp.bfloat16), ow_ref[...],
                    preferred_element_type=jnp.float32) + ob_ref[...]
        ).astype(logits_ref.dtype)


def bert_forward_pallas(p, h0, mask_add, B, S):
    M = B * S

    def per_layer(shape):
        nd = len(shape)
        return pl.BlockSpec((1,) + shape, lambda l, _n=nd: (l,) + (0,) * _n)

    def const(shape):
        nd = len(shape)
        return pl.BlockSpec(shape, lambda l, _n=nd: (0,) * _n)

    return pl.pallas_call(
        functools.partial(_bert_kernel, B=B, S=S),
        out_shape=jax.ShapeDtypeStruct((B, PAD_N), jnp.float32),
        grid=(N_LAYERS,),
        in_specs=[
            const((M, HIDDEN)),                       # h0 (pre-LN embeddings)
            const((B, S)),                            # additive attention mask
            const((1, HIDDEN)),                       # emb_ln_g
            const((1, HIDDEN)),                       # emb_ln_b
            per_layer((3, HIDDEN, HIDDEN)),           # wqkv (q scale pre-folded), bf16
            per_layer((3, 1, HIDDEN)),                # bqkv, f32
            per_layer((HIDDEN, HIDDEN)),              # wo, bf16
            per_layer((1, HIDDEN)),                   # bo
            per_layer((1, HIDDEN)),                   # ln1_g
            per_layer((1, HIDDEN)),                   # ln1_b
            per_layer((HIDDEN, INTERMEDIATE)),        # wi, bf16
            per_layer((1, INTERMEDIATE)),             # bi
            per_layer((INTERMEDIATE, HIDDEN)),        # wo2, bf16
            per_layer((1, HIDDEN)),                   # bo2
            per_layer((1, HIDDEN)),                   # ln2_g
            per_layer((1, HIDDEN)),                   # ln2_b
            const((HIDDEN, HIDDEN)),                  # pool_w, bf16
            const((1, HIDDEN)),                       # pool_b
            const((HIDDEN, PAD_N)),                   # out_w_pad, bf16
            const((1, PAD_N)),                        # out_b_pad
        ],
        out_specs=pl.BlockSpec((B, PAD_N), lambda l: (0, 0)),
        scratch_shapes=[
            pltpu.VMEM((M, HIDDEN), jnp.float32),     # activation carry (layer-to-layer)
        ],
        compiler_params=pltpu.CompilerParams(
            # Layer axis carries state through scratch -> must be sequential.
            dimension_semantics=("arbitrary",),
        ),
    )(h0, mask_add, p["emb_ln_g"], p["emb_ln_b"],
      p["wqkv"], p["bqkv"], p["wo"], p["bo"], p["ln1_g"], p["ln1_b"],
      p["wi"], p["bi"], p["wo2"], p["bo2"], p["ln2_g"], p["ln2_b"],
      p["pool_w"], p["pool_b"], p["out_w_pad"], p["out_b_pad"])


# ---------------- parameter construction (deterministic) ----------------
def init_params():
    key = jax.random.PRNGKey(0)

    def nrm(k, shape, scale=0.02):
        return scale * jax.random.normal(k, shape, dtype=jnp.float32)

    keys = iter(jax.random.split(key, 256))
    p = {
        "word_emb": nrm(next(keys), (VOCAB, HIDDEN)),
        "pos_emb": nrm(next(keys), (MAX_POS, HIDDEN)),
        "type_emb": nrm(next(keys), (TYPE_VOCAB, HIDDEN)),
        "emb_ln_g": jnp.ones((HIDDEN,), jnp.float32),
        "emb_ln_b": jnp.zeros((HIDDEN,), jnp.float32),
        "layers": [],
        "pool_w": nrm(next(keys), (HIDDEN, HIDDEN)),
        "pool_b": jnp.zeros((HIDDEN,), jnp.float32),
        "out_w": nrm(next(keys), (HIDDEN, N_CLASSES)),
        "out_b": jnp.zeros((N_CLASSES,), jnp.float32),
    }
    for _ in range(N_LAYERS):
        p["layers"].append({
            "wq": nrm(next(keys), (HIDDEN, HIDDEN)), "bq": jnp.zeros((HIDDEN,), jnp.float32),
            "wk": nrm(next(keys), (HIDDEN, HIDDEN)), "bk": jnp.zeros((HIDDEN,), jnp.float32),
            "wv": nrm(next(keys), (HIDDEN, HIDDEN)), "bv": jnp.zeros((HIDDEN,), jnp.float32),
            "wo": nrm(next(keys), (HIDDEN, HIDDEN)), "bo": jnp.zeros((HIDDEN,), jnp.float32),
            "ln1_g": jnp.ones((HIDDEN,), jnp.float32), "ln1_b": jnp.zeros((HIDDEN,), jnp.float32),
            "wi": nrm(next(keys), (HIDDEN, INTERMEDIATE)), "bi": jnp.zeros((INTERMEDIATE,), jnp.float32),
            "wo2": nrm(next(keys), (INTERMEDIATE, HIDDEN)), "bo2": jnp.zeros((HIDDEN,), jnp.float32),
            "ln2_g": jnp.ones((HIDDEN,), jnp.float32), "ln2_b": jnp.zeros((HIDDEN,), jnp.float32),
        })
    return p


def prepare_params(p):
    """One-time preprocessing: stack per-layer weights to (N_LAYERS, ...) with q/k/v
    on a LEADING axis, fold the 1/sqrt(head_dim) attention scale into wq/bq, hoist
    bias reshapes, lane-pad the classifier, and cast MXU weight operands to bf16
    (biases / LayerNorm params stay f32 so all elementwise math stays f32)."""
    ls = p["layers"]
    scale = HEAD_DIM ** -0.5

    def stack_vec(name, width):
        return jnp.stack([ls[i][name].reshape(1, width) for i in range(N_LAYERS)])

    wqkv = jnp.stack([jnp.stack([l["wq"] * scale, l["wk"], l["wv"]]) for l in ls])   # (L,3,H,H)
    bqkv = jnp.stack([jnp.stack([(l["bq"] * scale).reshape(1, HIDDEN),
                                 l["bk"].reshape(1, HIDDEN),
                                 l["bv"].reshape(1, HIDDEN)]) for l in ls])          # (L,3,1,H)

    return {
        "word_emb": p["word_emb"], "pos_emb": p["pos_emb"], "type_emb": p["type_emb"],
        "emb_ln_g": p["emb_ln_g"].reshape(1, HIDDEN),
        "emb_ln_b": p["emb_ln_b"].reshape(1, HIDDEN),
        "wqkv": wqkv.astype(jnp.bfloat16),
        "bqkv": bqkv,
        "wo": jnp.stack([l["wo"] for l in ls]).astype(jnp.bfloat16),
        "bo": stack_vec("bo", HIDDEN),
        "ln1_g": stack_vec("ln1_g", HIDDEN), "ln1_b": stack_vec("ln1_b", HIDDEN),
        "wi": jnp.stack([l["wi"] for l in ls]).astype(jnp.bfloat16),
        "bi": stack_vec("bi", INTERMEDIATE),
        "wo2": jnp.stack([l["wo2"] for l in ls]).astype(jnp.bfloat16),
        "bo2": stack_vec("bo2", HIDDEN),
        "ln2_g": stack_vec("ln2_g", HIDDEN), "ln2_b": stack_vec("ln2_b", HIDDEN),
        "pool_w": p["pool_w"].astype(jnp.bfloat16),
        "pool_b": p["pool_b"].reshape(1, HIDDEN),
        "out_w_pad": jnp.zeros((HIDDEN, PAD_N), jnp.float32)
                        .at[:, :N_CLASSES].set(p["out_w"]).astype(jnp.bfloat16),
        "out_b_pad": jnp.zeros((1, PAD_N), jnp.float32).at[0, :N_CLASSES].set(p["out_b"]),
    }


# ---------------- forward pass ----------------
def sentiment_classifier_forward(params, input_ids, attention_mask):
    B, S = input_ids.shape

    # Embedding gathers are plain-JAX glue (no clean Pallas gather at this size).
    # TODO(synk): token_type_ids hard-coded to type 0 (matches original synthetic setup).
    h0 = (params["word_emb"][input_ids]
          + params["pos_emb"][:S][None, :, :]
          + params["type_emb"][0][None, None, :]).reshape(B * S, HIDDEN)

    # Additive attention mask: 0 where attended, -10000 where masked (built once).
    mask_add = (1.0 - attention_mask.astype(jnp.float32)) * -10000.0       # (B, S)

    # Entire BERT forward (encoder stack + pooler + dropout(identity) + classifier)
    # in ONE pallas_call; lane-dense padded logits sliced back to N_CLASSES in JAX.
    logits_pad = bert_forward_pallas(params, h0, mask_add, B, S)           # (B, PAD_N)
    return logits_pad[:, :N_CLASSES]


if __name__ == "__main__":
    params = prepare_params(init_params())

    key = jax.random.PRNGKey(0)
    k_ids, _ = jax.random.split(key)
    B, S = 2, 8
    input_ids = jax.random.randint(k_ids, (B, S), 0, VOCAB, dtype=jnp.int32)
    attention_mask = jnp.ones((B, S), dtype=jnp.int32).at[1, 6:].set(0)    # pad last 2 of row 1

    fwd = jax.jit(functools.partial(sentiment_classifier_forward, params))
    logits = fwd(input_ids, attention_mask)
    jax.block_until_ready(logits)

    assert logits.shape == (B, N_CLASSES)
    assert bool(jnp.all(jnp.isfinite(logits)))
    print("KERNEL_OK")
</pallas_src>

<mosaic_0001>
module attributes {stable_mosaic.version = 11 : i64} {
  func.func @_bert_kernel(%arg0: i32, %arg1: memref<16x32xf32, #tpu.memory_space<vmem>>, %arg2: memref<2x8xf32, #tpu.memory_space<vmem>>, %arg3: memref<1x32xf32, #tpu.memory_space<vmem>>, %arg4: memref<1x32xf32, #tpu.memory_space<vmem>>, %arg5: memref<1x3x32x32xbf16, #tpu.memory_space<vmem>>, %arg6: memref<1x3x1x32xf32, #tpu.memory_space<vmem>>, %arg7: memref<1x32x32xbf16, #tpu.memory_space<vmem>>, %arg8: memref<1x1x32xf32, #tpu.memory_space<vmem>>, %arg9: memref<1x1x32xf32, #tpu.memory_space<vmem>>, %arg10: memref<1x1x32xf32, #tpu.memory_space<vmem>>, %arg11: memref<1x32x64xbf16, #tpu.memory_space<vmem>>, %arg12: memref<1x1x64xf32, #tpu.memory_space<vmem>>, %arg13: memref<1x64x32xbf16, #tpu.memory_space<vmem>>, %arg14: memref<1x1x32xf32, #tpu.memory_space<vmem>>, %arg15: memref<1x1x32xf32, #tpu.memory_space<vmem>>, %arg16: memref<1x1x32xf32, #tpu.memory_space<vmem>>, %arg17: memref<32x32xbf16, #tpu.memory_space<vmem>>, %arg18: memref<1x32xf32, #tpu.memory_space<vmem>>, %arg19: memref<32x128xbf16, #tpu.memory_space<vmem>>, %arg20: memref<1x128xf32, #tpu.memory_space<vmem>>, %arg21: memref<2x128xf32, #tpu.memory_space<vmem>>, %arg22: memref<16x32xf32, #tpu.memory_space<vmem>>) attributes {dimension_semantics = [#tpu.dimension_semantics<arbitrary>], iteration_bounds = array<i64: 2>, scalar_prefetch = 0 : i64, scratch_operands = 1 : i64, tpu.core_type = #tpu.core_type<tc>, window_params = [{pipeline_mode = #tpu.pipeline_mode<synchronous>, transform_indices = @transform_0, window_bounds = array<i64: 16, 32>}, {pipeline_mode = #tpu.pipeline_mode<synchronous>, transform_indices = @transform_1, window_bounds = array<i64: 2, 8>}, {pipeline_mode = #tpu.pipeline_mode<synchronous>, transform_indices = @transform_2, window_bounds = array<i64: 1, 32>}, {pipeline_mode = #tpu.pipeline_mode<synchronous>, transform_indices = @transform_3, window_bounds = array<i64: 1, 32>}, {transform_indices = @transform_4, window_bounds = array<i64: 1, 3, 32, 32>}, {transform_indices = @transform_5, window_bounds = array<i64: 1, 3, 1, 32>}, {transform_indices = @transform_6, window_bounds = array<i64: 1, 32, 32>}, {transform_indices = @transform_7, window_bounds = array<i64: 1, 1, 32>}, {transform_indices = @transform_8, window_bounds = array<i64: 1, 1, 32>}, {transform_indices = @transform_9, window_bounds = array<i64: 1, 1, 32>}, {transform_indices = @transform_10, window_bounds = array<i64: 1, 32, 64>}, {transform_indices = @transform_11, window_bounds = array<i64: 1, 1, 64>}, {transform_indices = @transform_12, window_bounds = array<i64: 1, 64, 32>}, {transform_indices = @transform_13, window_bounds = array<i64: 1, 1, 32>}, {transform_indices = @transform_14, window_bounds = array<i64: 1, 1, 32>}, {transform_indices = @transform_15, window_bounds = array<i64: 1, 1, 32>}, {pipeline_mode = #tpu.pipeline_mode<synchronous>, transform_indices = @transform_16, window_bounds = array<i64: 32, 32>}, {pipeline_mode = #tpu.pipeline_mode<synchronous>, transform_indices = @transform_17, window_bounds = array<i64: 1, 32>}, {pipeline_mode = #tpu.pipeline_mode<synchronous>, transform_indices = @transform_18, window_bounds = array<i64: 32, 128>}, {pipeline_mode = #tpu.pipeline_mode<synchronous>, transform_indices = @transform_19, window_bounds = array<i64: 1, 128>}, {pipeline_mode = #tpu.pipeline_mode<synchronous>, transform_indices = @transform_20, window_bounds = array<i64: 2, 128>}]} {
    %c0_i32 = arith.constant 0 : i32
    %0 = arith.cmpi eq, %arg0, %c0_i32 : i32
    %1 = arith.extui %0 : i1 to i32
    %c0_i32_0 = arith.constant 0 : i32
    %2 = arith.cmpi ne, %1, %c0_i32_0 : i32
    scf.if %2 {
      %c0_94 = arith.constant 0 : index
      %c0_95 = arith.constant 0 : index
      %208 = vector.load %arg1[%c0_94, %c0_95] : memref<16x32xf32, #tpu.memory_space<vmem>>, vector<16x32xf32>
      %c0_96 = arith.constant 0 : index
      %c0_97 = arith.constant 0 : index
      %209 = vector.load %arg3[%c0_96, %c0_97] : memref<1x32xf32, #tpu.memory_space<vmem>>, vector<1x32xf32>
      %c0_98 = arith.constant 0 : index
      %c0_99 = arith.constant 0 : index
      %210 = vector.load %arg4[%c0_98, %c0_99] : memref<1x32xf32, #tpu.memory_space<vmem>>, vector<1x32xf32>
      %cst_100 = arith.constant dense<0.000000e+00> : vector<16xf32>
      %211 = vector.multi_reduction <add>, %208, %cst_100 [1] : vector<16x32xf32> to vector<16xf32>
      %212 = vector.shape_cast %211 : vector<16xf32> to vector<16x1xf32>
      %cst_101 = arith.constant 3.200000e+01 : f32
      %213 = vector.broadcast %cst_101 : f32 to vector<16x1xf32>
      %214 = arith.divf %212, %213 : vector<16x1xf32>
      %215 = vector.broadcast %214 : vector<16x1xf32> to vector<16x32xf32>
      %216 = arith.subf %208, %215 : vector<16x32xf32>
      %217 = arith.mulf %216, %216 : vector<16x32xf32>
      %cst_102 = arith.constant dense<0.000000e+00> : vector<16xf32>
      %218 = vector.multi_reduction <add>, %217, %cst_102 [1] : vector<16x32xf32> to vector<16xf32>
      %219 = vector.shape_cast %218 : vector<16xf32> to vector<16x1xf32>
      %cst_103 = arith.constant 3.200000e+01 : f32
      %220 = vector.broadcast %cst_103 : f32 to vector<16x1xf32>
      %221 = arith.divf %219, %220 : vector<16x1xf32>
      %222 = vector.broadcast %214 : vector<16x1xf32> to vector<16x32xf32>
      %223 = arith.subf %208, %222 : vector<16x32xf32>
      %cst_104 = arith.constant 9.99999996E-13 : f32
      %224 = vector.broadcast %cst_104 : f32 to vector<16x1xf32>
      %225 = arith.addf %221, %224 : vector<16x1xf32>
      %226 = math.rsqrt %225 : vector<16x1xf32>
      %227 = vector.broadcast %226 : vector<16x1xf32> to vector<16x32xf32>
      %228 = arith.mulf %223, %227 : vector<16x32xf32>
      %229 = vector.broadcast %209 : vector<1x32xf32> to vector<16x32xf32>
      %230 = arith.mulf %228, %229 : vector<16x32xf32>
      %231 = vector.broadcast %210 : vector<1x32xf32> to vector<16x32xf32>
      %232 = arith.addf %230, %231 : vector<16x32xf32>
      %c0_105 = arith.constant 0 : index
      %c0_106 = arith.constant 0 : index
      %233 = vector.load %arg22[%c0_105, %c0_106] : memref<16x32xf32, #tpu.memory_space<vmem>>, vector<16x32xf32>
      tpu.vector_store %arg22[%c0_105, %c0_106], %232 {strides = array<i32>} : memref<16x32xf32, #tpu.memory_space<vmem>>, vector<16x32xf32>,
    } else {
    }
    %c0 = arith.constant 0 : index
    %c0_1 = arith.constant 0 : index
    %3 = vector.load %arg22[%c0, %c0_1] : memref<16x32xf32, #tpu.memory_space<vmem>>, vector<16x32xf32>
    %4 = arith.truncf %3 : vector<16x32xf32> to vector<16x32xbf16>
    %c0_2 = arith.constant 0 : index
    %c0_3 = arith.constant 0 : index
    %c0_4 = arith.constant 0 : index
    %c0_5 = arith.constant 0 : index
    %5 = vector.load %arg5[%c0_2, %c0_3, %c0_4, %c0_5] : memref<1x3x32x32xbf16, #tpu.memory_space<vmem>>, vector<1x1x32x32xbf16>
    %6 = vector.shape_cast %5 : vector<1x1x32x32xbf16> to vector<32x32xbf16>
    %cst = arith.constant dense<0.000000e+00> : vector<16x32xf32>
    %7 = tpu.matmul %4, %6, %cst {dimension_numbers = #tpu.dot_dimension_numbers<[1], [0], [0], [1], [0, 0, 1, 1], [], []>} : vector<16x32xbf16>, vector<32x32xbf16>, vector<16x32xf32> -> vector<16x32xf32>
    %c0_6 = arith.constant 0 : index
    %c0_7 = arith.constant 0 : index
    %c0_8 = arith.constant 0 : index
    %c0_9 = arith.constant 0 : index
    %8 = vector.load %arg6[%c0_6, %c0_7, %c0_8, %c0_9] : memref<1x3x1x32xf32, #tpu.memory_space<vmem>>, vector<1x1x1x32xf32>
    %9 = vector.shape_cast %8 : vector<1x1x1x32xf32> to vector<1x32xf32>
    %10 = vector.broadcast %9 : vector<1x32xf32> to vector<16x32xf32>
    %11 = arith.addf %7, %10 : vector<16x32xf32>
    %c0_10 = arith.constant 0 : index
    %c1 = arith.constant 1 : index
    %c0_11 = arith.constant 0 : index
    %c0_12 = arith.constant 0 : index
    %12 = vector.load %arg5[%c0_10, %c1, %c0_11, %c0_12] : memref<1x3x32x32xbf16, #tpu.memory_space<vmem>>, vector<1x1x32x32xbf16>
    %13 = vector.shape_cast %12 : vector<1x1x32x32xbf16> to vector<32x32xbf16>
    %cst_13 = arith.constant dense<0.000000e+00> : vector<16x32xf32>
    %14 = tpu.matmul %4, %13, %cst_13 {dimension_numbers = #tpu.dot_dimension_numbers<[1], [0], [0], [1], [0, 0, 1, 1], [], []>} : vector<16x32xbf16>, vector<32x32xbf16>, vector<16x32xf32> -> vector<16x32xf32>
    %c0_14 = arith.constant 0 : index
    %c1_15 = arith.constant 1 : index
    %c0_16 = arith.constant 0 : index
    %c0_17 = arith.constant 0 : index
    %15 = vector.load %arg6[%c0_14, %c1_15, %c0_16, %c0_17] : memref<1x3x1x32xf32, #tpu.memory_space<vmem>>, vector<1x1x1x32xf32>
    %16 = vector.shape_cast %15 : vector<1x1x1x32xf32> to vector<1x32xf32>
    %17 = vector.broadcast %16 : vector<1x32xf32> to vector<16x32xf32>
    %18 = arith.addf %14, %17 : vector<16x32xf32>
    %c0_18 = arith.constant 0 : index
    %c2 = arith.constant 2 : index
    %c0_19 = arith.constant 0 : index
    %c0_20 = arith.constant 0 : index
    %19 = vector.load %arg5[%c0_18, %c2, %c0_19, %c0_20] : memref<1x3x32x32xbf16, #tpu.memory_space<vmem>>, vector<1x1x32x32xbf16>
    %20 = vector.shape_cast %19 : vector<1x1x32x32xbf16> to vector<32x32xbf16>
    %cst_21 = arith.constant dense<0.000000e+00> : vector<16x32xf32>
    %21 = tpu.matmul %4, %20, %cst_21 {dimension_numbers = #tpu.dot_dimension_numbers<[1], [0], [0], [1], [0, 0, 1, 1], [], []>} : vector<16x32xbf16>, vector<32x32xbf16>, vector<16x32xf32> -> vector<16x32xf32>
    %c0_22 = arith.constant 0 : index
    %c2_23 = arith.constant 2 : index
    %c0_24 = arith.constant 0 : index
    %c0_25 = arith.constant 0 : index
    %22 = vector.load %arg6[%c0_22, %c2_23, %c0_24, %c0_25] : memref<1x3x1x32xf32, #tpu.memory_space<vmem>>, vector<1x1x1x32xf32>
    %23 = vector.shape_cast %22 : vector<1x1x1x32xf32> to vector<1x32xf32>
    %24 = vector.broadcast %23 : vector<1x32xf32> to vector<16x32xf32>
    %25 = arith.addf %21, %24 : vector<16x32xf32>
    %c0_26 = arith.constant 0 : index
    %c0_27 = arith.constant 0 : index
    %26 = vector.load %arg2[%c0_26, %c0_27] : memref<2x8xf32, #tpu.memory_space<vmem>>, vector<2x8xf32>
    %27 = vector.shape_cast %26 : vector<2x8xf32> to vector<2x1x8xf32>
    %28 = vector.extract_strided_slice %11 {offsets = [0, 0], sizes = [16, 8], strides = [1, 1]} : vector<16x32xf32> to vector<16x8xf32>
    %29 = vector.shape_cast %28 : vector<16x8xf32> to vector<2x8x8xf32>
    %30 = vector.extract_strided_slice %18 {offsets = [0, 0], sizes = [16, 8], strides = [1, 1]} : vector<16x32xf32> to vector<16x8xf32>
    %31 = vector.shape_cast %30 : vector<16x8xf32> to vector<2x8x8xf32>
    %32 = vector.extract_strided_slice %25 {offsets = [0, 0], sizes = [16, 8], strides = [1, 1]} : vector<16x32xf32> to vector<16x8xf32>
    %33 = vector.shape_cast %32 : vector<16x8xf32> to vector<2x8x8xf32>
    "tpu.trace_start"() <{level = 10 : i32, message = "bqd,bkd->bqk"}> : () -> ()
    %cst_28 = arith.constant dense<0.000000e+00> : vector<2x8x8xf32>
    %34 = tpu.matmul %29, %31, %cst_28 {dimension_numbers = #tpu.dot_dimension_numbers<[2], [2], [1], [1], [0, 0, 0, 1, 1, 1], [0], [0]>} : vector<2x8x8xf32>, vector<2x8x8xf32>, vector<2x8x8xf32> -> vector<2x8x8xf32>
    "tpu.trace_stop"() : () -> ()
    %35 = vector.broadcast %27 : vector<2x1x8xf32> to vector<2x8x8xf32>
    %36 = arith.addf %34, %35 : vector<2x8x8xf32>
    %cst_29 = arith.constant dense<0xFF800000> : vector<2x8xf32>
    %37 = vector.multi_reduction <maximumf>, %36, %cst_29 [2] : vector<2x8x8xf32> to vector<2x8xf32>
    %38 = vector.shape_cast %37 : vector<2x8xf32> to vector<2x8x1xf32>
    %39 = vector.broadcast %38 : vector<2x8x1xf32> to vector<2x8x8xf32>
    %40 = arith.subf %36, %39 : vector<2x8x8xf32>
    %41 = math.exp %40 : vector<2x8x8xf32>
    %cst_30 = arith.constant dense<0.000000e+00> : vector<2x8xf32>
    %42 = vector.multi_reduction <add>, %41, %cst_30 [2] : vector<2x8x8xf32> to vector<2x8xf32>
    %43 = vector.shape_cast %42 : vector<2x8xf32> to vector<2x8x1xf32>
    %44 = tpu.reciprocal %43 {approx = true} : vector<2x8x1xf32> -> vector<2x8x1xf32>
    %45 = vector.broadcast %44 : vector<2x8x1xf32> to vector<2x8x8xf32>
    %46 = arith.mulf %41, %45 : vector<2x8x8xf32>
    "tpu.trace_start"() <{level = 10 : i32, message = "bqk,bkd->bqd"}> : () -> ()
    %cst_31 = arith.constant dense<0.000000e+00> : vector<2x8x8xf32>
    %47 = tpu.matmul %46, %33, %cst_31 {dimension_numbers = #tpu.dot_dimension_numbers<[2], [1], [1], [2], [0, 0, 0, 1, 1, 2], [0], [0]>} : vector<2x8x8xf32>, vector<2x8x8xf32>, vector<2x8x8xf32> -> vector<2x8x8xf32>
    "tpu.trace_stop"() : () -> ()
    %48 = vector.shape_cast %47 : vector<2x8x8xf32> to vector<16x8xf32>
    %49 = vector.extract_strided_slice %11 {offsets = [0, 8], sizes = [16, 8], strides = [1, 1]} : vector<16x32xf32> to vector<16x8xf32>
    %50 = vector.shape_cast %49 : vector<16x8xf32> to vector<2x8x8xf32>
    %51 = vector.extract_strided_slice %18 {offsets = [0, 8], sizes = [16, 8], strides = [1, 1]} : vector<16x32xf32> to vector<16x8xf32>
    %52 = vector.shape_cast %51 : vector<16x8xf32> to vector<2x8x8xf32>
    %53 = vector.extract_strided_slice %25 {offsets = [0, 8], sizes = [16, 8], strides = [1, 1]} : vector<16x32xf32> to vector<16x8xf32>
    %54 = vector.shape_cast %53 : vector<16x8xf32> to vector<2x8x8xf32>
    "tpu.trace_start"() <{level = 10 : i32, message = "bqd,bkd->bqk"}> : () -> ()
    %cst_32 = arith.constant dense<0.000000e+00> : vector<2x8x8xf32>
    %55 = tpu.matmul %50, %52, %cst_32 {dimension_numbers = #tpu.dot_dimension_numbers<[2], [2], [1], [1], [0, 0, 0, 1, 1, 1], [0], [0]>} : vector<2x8x8xf32>, vector<2x8x8xf32>, vector<2x8x8xf32> -> vector<2x8x8xf32>
    "tpu.trace_stop"() : () -> ()
    %56 = vector.broadcast %27 : vector<2x1x8xf32> to vector<2x8x8xf32>
    %57 = arith.addf %55, %56 : vector<2x8x8xf32>
    %cst_33 = arith.constant dense<0xFF800000> : vector<2x8xf32>
    %58 = vector.multi_reduction <maximumf>, %57, %cst_33 [2] : vector<2x8x8xf32> to vector<2x8xf32>
    %59 = vector.shape_cast %58 : vector<2x8xf32> to vector<2x8x1xf32>
    %60 = vector.broadcast %59 : vector<2x8x1xf32> to vector<2x8x8xf32>
    %61 = arith.subf %57, %60 : vector<2x8x8xf32>
    %62 = math.exp %61 : vector<2x8x8xf32>
    %cst_34 = arith.constant dense<0.000000e+00> : vector<2x8xf32>
    %63 = vector.multi_reduction <add>, %62, %cst_34 [2] : vector<2x8x8xf32> to vector<2x8xf32>
    %64 = vector.shape_cast %63 : vector<2x8xf32> to vector<2x8x1xf32>
    %65 = tpu.reciprocal %64 {approx = true} : vector<2x8x1xf32> -> vector<2x8x1xf32>
    %66 = vector.broadcast %65 : vector<2x8x1xf32> to vector<2x8x8xf32>
    %67 = arith.mulf %62, %66 : vector<2x8x8xf32>
    "tpu.trace_start"() <{level = 10 : i32, message = "bqk,bkd->bqd"}> : () -> ()
    %cst_35 = arith.constant dense<0.000000e+00> : vector<2x8x8xf32>
    %68 = tpu.matmul %67, %54, %cst_35 {dimension_numbers = #tpu.dot_dimension_numbers<[2], [1], [1], [2], [0, 0, 0, 1, 1, 2], [0], [0]>} : vector<2x8x8xf32>, vector<2x8x8xf32>, vector<2x8x8xf32> -> vector<2x8x8xf32>
    "tpu.trace_stop"() : () -> ()
    %69 = vector.shape_cast %68 : vector<2x8x8xf32> to vector<16x8xf32>
    %70 = vector.extract_strided_slice %11 {offsets = [0, 16], sizes = [16, 8], strides = [1, 1]} : vector<16x32xf32> to vector<16x8xf32>
    %71 = vector.shape_cast %70 : vector<16x8xf32> to vector<2x8x8xf32>
    %72 = vector.extract_strided_slice %18 {offsets = [0, 16], sizes = [16, 8], strides = [1, 1]} : vector<16x32xf32> to vector<16x8xf32>
    %73 = vector.shape_cast %72 : vector<16x8xf32> to vector<2x8x8xf32>
    %74 = vector.extract_strided_slice %25 {offsets = [0, 16], sizes = [16, 8], strides = [1, 1]} : vector<16x32xf32> to vector<16x8xf32>
    %75 = vector.shape_cast %74 : vector<16x8xf32> to vector<2x8x8xf32>
    "tpu.trace_start"() <{level = 10 : i32, message = "bqd,bkd->bqk"}> : () -> ()
    %cst_36 = arith.constant dense<0.000000e+00> : vector<2x8x8xf32>
    %76 = tpu.matmul %71, %73, %cst_36 {dimension_numbers = #tpu.dot_dimension_numbers<[2], [2], [1], [1], [0, 0, 0, 1, 1, 1], [0], [0]>} : vector<2x8x8xf32>, vector<2x8x8xf32>, vector<2x8x8xf32> -> vector<2x8x8xf32>
    "tpu.trace_stop"() : () -> ()
    %77 = vector.broadcast %27 : vector<2x1x8xf32> to vector<2x8x8xf32>
    %78 = arith.addf %76, %77 : vector<2x8x8xf32>
    %cst_37 = arith.constant dense<0xFF800000> : vector<2x8xf32>
    %79 = vector.multi_reduction <maximumf>, %78, %cst_37 [2] : vector<2x8x8xf32> to vector<2x8xf32>
    %80 = vector.shape_cast %79 : vector<2x8xf32> to vector<2x8x1xf32>
    %81 = vector.broadcast %80 : vector<2x8x1xf32> to vector<2x8x8xf32>
    %82 = arith.subf %78, %81 : vector<2x8x8xf32>
    %83 = math.exp %82 : vector<2x8x8xf32>
    %cst_38 = arith.constant dense<0.000000e+00> : vector<2x8xf32>
    %84 = vector.multi_reduction <add>, %83, %cst_38 [2] : vector<2x8x8xf32> to vector<2x8xf32>
    %85 = vector.shape_cast %84 : vector<2x8xf32> to vector<2x8x1xf32>
    %86 = tpu.reciprocal %85 {approx = true} : vector<2x8x1xf32> -> vector<2x8x1xf32>
    %87 = vector.broadcast %86 : vector<2x8x1xf32> to vector<2x8x8xf32>
    %88 = arith.mulf %83, %87 : vector<2x8x8xf32>
    "tpu.trace_start"() <{level = 10 : i32, message = "bqk,bkd->bqd"}> : () -> ()
    %cst_39 = arith.constant dense<0.000000e+00> : vector<2x8x8xf32>
    %89 = tpu.matmul %88, %75, %cst_39 {dimension_numbers = #tpu.dot_dimension_numbers<[2], [1], [1], [2], [0, 0, 0, 1, 1, 2], [0], [0]>} : vector<2x8x8xf32>, vector<2x8x8xf32>, vector<2x8x8xf32> -> vector<2x8x8xf32>
    "tpu.trace_stop"() : () -> ()
    %90 = vector.shape_cast %89 : vector<2x8x8xf32> to vector<16x8xf32>
    %91 = vector.extract_strided_slice %11 {offsets = [0, 24], sizes = [16, 8], strides = [1, 1]} : vector<16x32xf32> to vector<16x8xf32>
    %92 = vector.shape_cast %91 : vector<16x8xf32> to vector<2x8x8xf32>
    %93 = vector.extract_strided_slice %18 {offsets = [0, 24], sizes = [16, 8], strides = [1, 1]} : vector<16x32xf32> to vector<16x8xf32>
    %94 = vector.shape_cast %93 : vector<16x8xf32> to vector<2x8x8xf32>
    %95 = vector.extract_strided_slice %25 {offsets = [0, 24], sizes = [16, 8], strides = [1, 1]} : vector<16x32xf32> to vector<16x8xf32>
    %96 = vector.shape_cast %95 : vector<16x8xf32> to vector<2x8x8xf32>
    "tpu.trace_start"() <{level = 10 : i32, message = "bqd,bkd->bqk"}> : () -> ()
    %cst_40 = arith.constant dense<0.000000e+00> : vector<2x8x8xf32>
    %97 = tpu.matmul %92, %94, %cst_40 {dimension_numbers = #tpu.dot_dimension_numbers<[2], [2], [1], [1], [0, 0, 0, 1, 1, 1], [0], [0]>} : vector<2x8x8xf32>, vector<2x8x8xf32>, vector<2x8x8xf32> -> vector<2x8x8xf32>
    "tpu.trace_stop"() : () -> ()
    %98 = vector.broadcast %27 : vector<2x1x8xf32> to vector<2x8x8xf32>
    %99 = arith.addf %97, %98 : vector<2x8x8xf32>
    %cst_41 = arith.constant dense<0xFF800000> : vector<2x8xf32>
    %100 = vector.multi_reduction <maximumf>, %99, %cst_41 [2] : vector<2x8x8xf32> to vector<2x8xf32>
    %101 = vector.shape_cast %100 : vector<2x8xf32> to vector<2x8x1xf32>
    %102 = vector.broadcast %101 : vector<2x8x1xf32> to vector<2x8x8xf32>
    %103 = arith.subf %99, %102 : vector<2x8x8xf32>
    %104 = math.exp %103 : vector<2x8x8xf32>
    %cst_42 = arith.constant dense<0.000000e+00> : vector<2x8xf32>
    %105 = vector.multi_reduction <add>, %104, %cst_42 [2] : vector<2x8x8xf32> to vector<2x8xf32>
    %106 = vector.shape_cast %105 : vector<2x8xf32> to vector<2x8x1xf32>
    %107 = tpu.reciprocal %106 {approx = true} : vector<2x8x1xf32> -> vector<2x8x1xf32>
    %108 = vector.broadcast %107 : vector<2x8x1xf32> to vector<2x8x8xf32>
    %109 = arith.mulf %104, %108 : vector<2x8x8xf32>
    "tpu.trace_start"() <{level = 10 : i32, message = "bqk,bkd->bqd"}> : () -> ()
    %cst_43 = arith.constant dense<0.000000e+00> : vector<2x8x8xf32>
    %110 = tpu.matmul %109, %96, %cst_43 {dimension_numbers = #tpu.dot_dimension_numbers<[2], [1], [1], [2], [0, 0, 0, 1, 1, 2], [0], [0]>} : vector<2x8x8xf32>, vector<2x8x8xf32>, vector<2x8x8xf32> -> vector<2x8x8xf32>
    "tpu.trace_stop"() : () -> ()
    %111 = vector.shape_cast %110 : vector<2x8x8xf32> to vector<16x8xf32>
    %112 = tpu.concatenate %48, %69, %90, %111 in 1 : vector<16x8xf32>, vector<16x8xf32>, vector<16x8xf32>, vector<16x8xf32> -> vector<16x32xf32>
    %113 = arith.truncf %112 : vector<16x32xf32> to vector<16x32xbf16>
    %c0_44 = arith.constant 0 : index
    %c0_45 = arith.constant 0 : index
    %c0_46 = arith.constant 0 : index
    %114 = vector.load %arg7[%c0_44, %c0_45, %c0_46] : memref<1x32x32xbf16, #tpu.memory_space<vmem>>, vector<1x32x32xbf16>
    %115 = vector.shape_cast %114 : vector<1x32x32xbf16> to vector<32x32xbf16>
    %cst_47 = arith.constant dense<0.000000e+00> : vector<16x32xf32>
    %116 = tpu.matmul %113, %115, %cst_47 {dimension_numbers = #tpu.dot_dimension_numbers<[1], [0], [0], [1], [0, 0, 1, 1], [], []>} : vector<16x32xbf16>, vector<32x32xbf16>, vector<16x32xf32> -> vector<16x32xf32>
    %c0_48 = arith.constant 0 : index
    %c0_49 = arith.constant 0 : index
    %c0_50 = arith.constant 0 : index
    %117 = vector.load %arg8[%c0_48, %c0_49, %c0_50] : memref<1x1x32xf32, #tpu.memory_space<vmem>>, vector<1x1x32xf32>
    %118 = vector.shape_cast %117 : vector<1x1x32xf32> to vector<1x32xf32>
    %119 = vector.broadcast %118 : vector<1x32xf32> to vector<16x32xf32>
    %120 = arith.addf %116, %119 : vector<16x32xf32>
    %121 = arith.addf %3, %120 : vector<16x32xf32>
    %c0_51 = arith.constant 0 : index
    %c0_52 = arith.constant 0 : index
    %c0_53 = arith.constant 0 : index
    %122 = vector.load %arg9[%c0_51, %c0_52, %c0_53] : memref<1x1x32xf32, #tpu.memory_space<vmem>>, vector<1x1x32xf32>
    %123 = vector.shape_cast %122 : vector<1x1x32xf32> to vector<1x32xf32>
    %c0_54 = arith.constant 0 : index
    %c0_55 = arith.constant 0 : index
    %c0_56 = arith.constant 0 : index
    %124 = vector.load %arg10[%c0_54, %c0_55, %c0_56] : memref<1x1x32xf32, #tpu.memory_space<vmem>>, vector<1x1x32xf32>
    %125 = vector.shape_cast %124 : vector<1x1x32xf32> to vector<1x32xf32>
    %cst_57 = arith.constant dense<0.000000e+00> : vector<16xf32>
    %126 = vector.multi_reduction <add>, %121, %cst_57 [1] : vector<16x32xf32> to vector<16xf32>
    %127 = vector.shape_cast %126 : vector<16xf32> to vector<16x1xf32>
    %cst_58 = arith.constant 3.200000e+01 : f32
    %128 = vector.broadcast %cst_58 : f32 to vector<16x1xf32>
    %129 = arith.divf %127, %128 : vector<16x1xf32>
    %130 = vector.broadcast %129 : vector<16x1xf32> to vector<16x32xf32>
    %131 = arith.subf %121, %130 : vector<16x32xf32>
    %132 = arith.mulf %131, %131 : vector<16x32xf32>
    %cst_59 = arith.constant dense<0.000000e+00> : vector<16xf32>
    %133 = vector.multi_reduction <add>, %132, %cst_59 [1] : vector<16x32xf32> to vector<16xf32>
    %134 = vector.shape_cast %133 : vector<16xf32> to vector<16x1xf32>
    %cst_60 = arith.constant 3.200000e+01 : f32
    %135 = vector.broadcast %cst_60 : f32 to vector<16x1xf32>
    %136 = arith.divf %134, %135 : vector<16x1xf32>
    %137 = vector.broadcast %129 : vector<16x1xf32> to vector<16x32xf32>
    %138 = arith.subf %121, %137 : vector<16x32xf32>
    %cst_61 = arith.constant 9.99999996E-13 : f32
    %139 = vector.broadcast %cst_61 : f32 to vector<16x1xf32>
    %140 = arith.addf %136, %139 : vector<16x1xf32>
    %141 = math.rsqrt %140 : vector<16x1xf32>
    %142 = vector.broadcast %141 : vector<16x1xf32> to vector<16x32xf32>
    %143 = arith.mulf %138, %142 : vector<16x32xf32>
    %144 = vector.broadcast %123 : vector<1x32xf32> to vector<16x32xf32>
    %145 = arith.mulf %143, %144 : vector<16x32xf32>
    %146 = vector.broadcast %125 : vector<1x32xf32> to vector<16x32xf32>
    %147 = arith.addf %145, %146 : vector<16x32xf32>
    %148 = arith.truncf %147 : vector<16x32xf32> to vector<16x32xbf16>
    %c0_62 = arith.constant 0 : index
    %c0_63 = arith.constant 0 : index
    %c0_64 = arith.constant 0 : index
    %149 = vector.load %arg11[%c0_62, %c0_63, %c0_64] : memref<1x32x64xbf16, #tpu.memory_space<vmem>>, vector<1x32x64xbf16>
    %150 = vector.shape_cast %149 : vector<1x32x64xbf16> to vector<32x64xbf16>
    %cst_65 = arith.constant dense<0.000000e+00> : vector<16x64xf32>
    %151 = tpu.matmul %148, %150, %cst_65 {dimension_numbers = #tpu.dot_dimension_numbers<[1], [0], [0], [1], [0, 0, 1, 1], [], []>} : vector<16x32xbf16>, vector<32x64xbf16>, vector<16x64xf32> -> vector<16x64xf32>
    %c0_66 = arith.constant 0 : index
    %c0_67 = arith.constant 0 : index
    %c0_68 = arith.constant 0 : index
    %152 = vector.load %arg12[%c0_66, %c0_67, %c0_68] : memref<1x1x64xf32, #tpu.memory_space<vmem>>, vector<1x1x64xf32>
    %153 = vector.shape_cast %152 : vector<1x1x64xf32> to vector<1x64xf32>
    %154 = vector.broadcast %153 : vector<1x64xf32> to vector<16x64xf32>
    %155 = arith.addf %151, %154 : vector<16x64xf32>
    %cst_69 = arith.constant 5.000000e-01 : f32
    %156 = vector.broadcast %cst_69 : f32 to vector<16x64xf32>
    %157 = arith.mulf %156, %155 : vector<16x64xf32>
    %cst_70 = arith.constant 4.471500e-02 : f32
    %158 = vector.broadcast %cst_70 : f32 to vector<16x64xf32>
    %159 = arith.mulf %158, %155 : vector<16x64xf32>
    %160 = arith.mulf %159, %155 : vector<16x64xf32>
    %161 = arith.mulf %160, %155 : vector<16x64xf32>
    %162 = arith.addf %155, %161 : vector<16x64xf32>
    %cst_71 = arith.constant 0.797884583 : f32
    %163 = vector.broadcast %cst_71 : f32 to vector<16x64xf32>
    %164 = arith.mulf %163, %162 : vector<16x64xf32>
    %165 = math.tanh %164 : vector<16x64xf32>
    %cst_72 = arith.constant 1.000000e+00 : f32
    %166 = vector.broadcast %cst_72 : f32 to vector<16x64xf32>
    %167 = arith.addf %166, %165 : vector<16x64xf32>
    %168 = arith.mulf %157, %167 : vector<16x64xf32>
    %169 = arith.truncf %168 : vector<16x64xf32> to vector<16x64xbf16>
    %c0_73 = arith.constant 0 : index
    %c0_74 = arith.constant 0 : index
    %c0_75 = arith.constant 0 : index
    %170 = vector.load %arg13[%c0_73, %c0_74, %c0_75] : memref<1x64x32xbf16, #tpu.memory_space<vmem>>, vector<1x64x32xbf16>
    %171 = vector.shape_cast %170 : vector<1x64x32xbf16> to vector<64x32xbf16>
    %cst_76 = arith.constant dense<0.000000e+00> : vector<16x32xf32>
    %172 = tpu.matmul %169, %171, %cst_76 {dimension_numbers = #tpu.dot_dimension_numbers<[1], [0], [0], [1], [0, 0, 1, 1], [], []>} : vector<16x64xbf16>, vector<64x32xbf16>, vector<16x32xf32> -> vector<16x32xf32>
    %c0_77 = arith.constant 0 : index
    %c0_78 = arith.constant 0 : index
    %c0_79 = arith.constant 0 : index
    %173 = vector.load %arg14[%c0_77, %c0_78, %c0_79] : memref<1x1x32xf32, #tpu.memory_space<vmem>>, vector<1x1x32xf32>
    %174 = vector.shape_cast %173 : vector<1x1x32xf32> to vector<1x32xf32>
    %175 = vector.broadcast %174 : vector<1x32xf32> to vector<16x32xf32>
    %176 = arith.addf %172, %175 : vector<16x32xf32>
    %177 = arith.addf %147, %176 : vector<16x32xf32>
    %c0_80 = arith.constant 0 : index
    %c0_81 = arith.constant 0 : index
    %c0_82 = arith.constant 0 : index
    %178 = vector.load %arg15[%c0_80, %c0_81, %c0_82] : memref<1x1x32xf32, #tpu.memory_space<vmem>>, vector<1x1x32xf32>
    %179 = vector.shape_cast %178 : vector<1x1x32xf32> to vector<1x32xf32>
    %c0_83 = arith.constant 0 : index
    %c0_84 = arith.constant 0 : index
    %c0_85 = arith.constant 0 : index
    %180 = vector.load %arg16[%c0_83, %c0_84, %c0_85] : memref<1x1x32xf32, #tpu.memory_space<vmem>>, vector<1x1x32xf32>
    %181 = vector.shape_cast %180 : vector<1x1x32xf32> to vector<1x32xf32>
    %cst_86 = arith.constant dense<0.000000e+00> : vector<16xf32>
    %182 = vector.multi_reduction <add>, %177, %cst_86 [1] : vector<16x32xf32> to vector<16xf32>
    %183 = vector.shape_cast %182 : vector<16xf32> to vector<16x1xf32>
    %cst_87 = arith.constant 3.200000e+01 : f32
    %184 = vector.broadcast %cst_87 : f32 to vector<16x1xf32>
    %185 = arith.divf %183, %184 : vector<16x1xf32>
    %186 = vector.broadcast %185 : vector<16x1xf32> to vector<16x32xf32>
    %187 = arith.subf %177, %186 : vector<16x32xf32>
    %188 = arith.mulf %187, %187 : vector<16x32xf32>
    %cst_88 = arith.constant dense<0.000000e+00> : vector<16xf32>
    %189 = vector.multi_reduction <add>, %188, %cst_88 [1] : vector<16x32xf32> to vector<16xf32>
    %190 = vector.shape_cast %189 : vector<16xf32> to vector<16x1xf32>
    %cst_89 = arith.constant 3.200000e+01 : f32
    %191 = vector.broadcast %cst_89 : f32 to vector<16x1xf32>
    %192 = arith.divf %190, %191 : vector<16x1xf32>
    %193 = vector.broadcast %185 : vector<16x1xf32> to vector<16x32xf32>
    %194 = arith.subf %177, %193 : vector<16x32xf32>
    %cst_90 = arith.constant 9.99999996E-13 : f32
    %195 = vector.broadcast %cst_90 : f32 to vector<16x1xf32>
    %196 = arith.addf %192, %195 : vector<16x1xf32>
    %197 = math.rsqrt %196 : vector<16x1xf32>
    %198 = vector.broadcast %197 : vector<16x1xf32> to vector<16x32xf32>
    %199 = arith.mulf %194, %198 : vector<16x32xf32>
    %200 = vector.broadcast %179 : vector<1x32xf32> to vector<16x32xf32>
    %201 = arith.mulf %199, %200 : vector<16x32xf32>
    %202 = vector.broadcast %181 : vector<1x32xf32> to vector<16x32xf32>
    %203 = arith.addf %201, %202 : vector<16x32xf32>
    %c0_91 = arith.constant 0 : index
    %c0_92 = arith.constant 0 : index
    %204 = vector.load %arg22[%c0_91, %c0_92] : memref<16x32xf32, #tpu.memory_space<vmem>>, vector<16x32xf32>
    tpu.vector_store %arg22[%c0_91, %c0_92], %203 {strides = array<i32>} : memref<16x32xf32, #tpu.memory_space<vmem>>, vector<16x32xf32>,
    %c1_i32 = arith.constant 1 : i32
    %205 = arith.cmpi eq, %arg0, %c1_i32 : i32
    %206 = arith.extui %205 : i1 to i32
    %c0_i32_93 = arith.constant 0 : i32
    %207 = arith.cmpi ne, %206, %c0_i32_93 : i32
    scf.if %207 {
      %208 = vector.extract_strided_slice %203 {offsets = [0, 0], sizes = [1, 32], strides = [1, 1]} : vector<16x32xf32> to vector<1x32xf32>
      %209 = vector.extract_strided_slice %203 {offsets = [8, 0], sizes = [1, 32], strides = [1, 1]} : vector<16x32xf32> to vector<1x32xf32>
      %210 = tpu.concatenate %208, %209 in 0 : vector<1x32xf32>, vector<1x32xf32> -> vector<2x32xf32>
      %211 = arith.truncf %210 : vector<2x32xf32> to vector<2x32xbf16>
      %c0_94 = arith.constant 0 : index
      %c0_95 = arith.constant 0 : index
      %212 = vector.load %arg17[%c0_94, %c0_95] : memref<32x32xbf16, #tpu.memory_space<vmem>>, vector<32x32xbf16>
      %cst_96 = arith.constant dense<0.000000e+00> : vector<2x32xf32>
      %213 = tpu.matmul %211, %212, %cst_96 {dimension_numbers = #tpu.dot_dimension_numbers<[1], [0], [0], [1], [0, 0, 1, 1], [], []>} : vector<2x32xbf16>, vector<32x32xbf16>, vector<2x32xf32> -> vector<2x32xf32>
      %c0_97 = arith.constant 0 : index
      %c0_98 = arith.constant 0 : index
      %214 = vector.load %arg18[%c0_97, %c0_98] : memref<1x32xf32, #tpu.memory_space<vmem>>, vector<1x32xf32>
      %215 = vector.broadcast %214 : vector<1x32xf32> to vector<2x32xf32>
      %216 = arith.addf %213, %215 : vector<2x32xf32>
      %217 = math.tanh %216 : vector<2x32xf32>
      %218 = arith.truncf %217 : vector<2x32xf32> to vector<2x32xbf16>
      %c0_99 = arith.constant 0 : index
      %c0_100 = arith.constant 0 : index
      %219 = vector.load %arg19[%c0_99, %c0_100] : memref<32x128xbf16, #tpu.memory_space<vmem>>, vector<32x128xbf16>
      %cst_101 = arith.constant dense<0.000000e+00> : vector<2x128xf32>
      %220 = tpu.matmul %218, %219, %cst_101 {dimension_numbers = #tpu.dot_dimension_numbers<[1], [0], [0], [1], [0, 0, 1, 1], [], []>} : vector<2x32xbf16>, vector<32x128xbf16>, vector<2x128xf32> -> vector<2x128xf32>
      %c0_102 = arith.constant 0 : index
      %c0_103 = arith.constant 0 : index
      %221 = vector.load %arg20[%c0_102, %c0_103] : memref<1x128xf32, #tpu.memory_space<vmem>>, vector<1x128xf32>
      %222 = vector.broadcast %221 : vector<1x128xf32> to vector<2x128xf32>
      %223 = arith.addf %220, %222 : vector<2x128xf32>
      %c0_104 = arith.constant 0 : index
      %c0_105 = arith.constant 0 : index
      %224 = vector.load %arg21[%c0_104, %c0_105] : memref<2x128xf32, #tpu.memory_space<vmem>>, vector<2x128xf32>
      tpu.vector_store %arg21[%c0_104, %c0_105], %223 {strides = array<i32>} : memref<2x128xf32, #tpu.memory_space<vmem>>, vector<2x128xf32>,
    } else {
    }
    return
  }
  func.func @transform_0(%arg0: i32) -> (i32, i32) {
    %c0_i32 = arith.constant 0 : i32
    %c0_i32_0 = arith.constant 0 : i32
    %c0_i32_1 = arith.constant 0 : i32
    return %c0_i32, %c0_i32_0 : i32, i32
  }
  func.func @transform_1(%arg0: i32) -> (i32, i32) {
    %c0_i32 = arith.constant 0 : i32
    %c0_i32_0 = arith.constant 0 : i32
    %c0_i32_1 = arith.constant 0 : i32
    return %c0_i32, %c0_i32_0 : i32, i32
  }
  func.func @transform_2(%arg0: i32) -> (i32, i32) {
    %c0_i32 = arith.constant 0 : i32
    %c0_i32_0 = arith.constant 0 : i32
    %c0_i32_1 = arith.constant 0 : i32
    return %c0_i32, %c0_i32_0 : i32, i32
  }
  func.func @transform_3(%arg0: i32) -> (i32, i32) {
    %c0_i32 = arith.constant 0 : i32
    %c0_i32_0 = arith.constant 0 : i32
    %c0_i32_1 = arith.constant 0 : i32
    return %c0_i32, %c0_i32_0 : i32, i32
  }
  func.func @transform_4(%arg0: i32) -> (i32, i32, i32, i32) {
    %c0_i32 = arith.constant 0 : i32
    %c0_i32_0 = arith.constant 0 : i32
    %c0_i32_1 = arith.constant 0 : i32
    %c0_i32_2 = arith.constant 0 : i32
    return %arg0, %c0_i32, %c0_i32_0, %c0_i32_1 : i32, i32, i32, i32
  }
  func.func @transform_5(%arg0: i32) -> (i32, i32, i32, i32) {
    %c0_i32 = arith.constant 0 : i32
    %c0_i32_0 = arith.constant 0 : i32
    %c0_i32_1 = arith.constant 0 : i32
    %c0_i32_2 = arith.constant 0 : i32
    return %arg0, %c0_i32, %c0_i32_0, %c0_i32_1 : i32, i32, i32, i32
  }
  func.func @transform_6(%arg0: i32) -> (i32, i32, i32) {
    %c0_i32 = arith.constant 0 : i32
    %c0_i32_0 = arith.constant 0 : i32
    %c0_i32_1 = arith.constant 0 : i32
    return %arg0, %c0_i32, %c0_i32_0 : i32, i32, i32
  }
  func.func @transform_7(%arg0: i32) -> (i32, i32, i32) {
    %c0_i32 = arith.constant 0 : i32
    %c0_i32_0 = arith.constant 0 : i32
    %c0_i32_1 = arith.constant 0 : i32
    return %arg0, %c0_i32, %c0_i32_0 : i32, i32, i32
  }
  func.func @transform_8(%arg0: i32) -> (i32, i32, i32) {
    %c0_i32 = arith.constant 0 : i32
    %c0_i32_0 = arith.constant 0 : i32
    %c0_i32_1 = arith.constant 0 : i32
    return %arg0, %c0_i32, %c0_i32_0 : i32, i32, i32
  }
  func.func @transform_9(%arg0: i32) -> (i32, i32, i32) {
    %c0_i32 = arith.constant 0 : i32
    %c0_i32_0 = arith.constant 0 : i32
    %c0_i32_1 = arith.constant 0 : i32
    return %arg0, %c0_i32, %c0_i32_0 : i32, i32, i32
  }
  func.func @transform_10(%arg0: i32) -> (i32, i32, i32) {
    %c0_i32 = arith.constant 0 : i32
    %c0_i32_0 = arith.constant 0 : i32
    %c0_i32_1 = arith.constant 0 : i32
    return %arg0, %c0_i32, %c0_i32_0 : i32, i32, i32
  }
  func.func @transform_11(%arg0: i32) -> (i32, i32, i32) {
    %c0_i32 = arith.constant 0 : i32
    %c0_i32_0 = arith.constant 0 : i32
    %c0_i32_1 = arith.constant 0 : i32
    return %arg0, %c0_i32, %c0_i32_0 : i32, i32, i32
  }
  func.func @transform_12(%arg0: i32) -> (i32, i32, i32) {
    %c0_i32 = arith.constant 0 : i32
    %c0_i32_0 = arith.constant 0 : i32
    %c0_i32_1 = arith.constant 0 : i32
    return %arg0, %c0_i32, %c0_i32_0 : i32, i32, i32
  }
  func.func @transform_13(%arg0: i32) -> (i32, i32, i32) {
    %c0_i32 = arith.constant 0 : i32
    %c0_i32_0 = arith.constant 0 : i32
    %c0_i32_1 = arith.constant 0 : i32
    return %arg0, %c0_i32, %c0_i32_0 : i32, i32, i32
  }
  func.func @transform_14(%arg0: i32) -> (i32, i32, i32) {
    %c0_i32 = arith.constant 0 : i32
    %c0_i32_0 = arith.constant 0 : i32
    %c0_i32_1 = arith.constant 0 : i32
    return %arg0, %c0_i32, %c0_i32_0 : i32, i32, i32
  }
  func.func @transform_15(%arg0: i32) -> (i32, i32, i32) {
    %c0_i32 = arith.constant 0 : i32
    %c0_i32_0 = arith.constant 0 : i32
    %c0_i32_1 = arith.constant 0 : i32
    return %arg0, %c0_i32, %c0_i32_0 : i32, i32, i32
  }
  func.func @transform_16(%arg0: i32) -> (i32, i32) {
    %c0_i32 = arith.constant 0 : i32
    %c0_i32_0 = arith.constant 0 : i32
    %c0_i32_1 = arith.constant 0 : i32
    return %c0_i32, %c0_i32_0 : i32, i32
  }
  func.func @transform_17(%arg0: i32) -> (i32, i32) {
    %c0_i32 = arith.constant 0 : i32
    %c0_i32_0 = arith.constant 0 : i32
    %c0_i32_1 = arith.constant 0 : i32
    return %c0_i32, %c0_i32_0 : i32, i32
  }
  func.func @transform_18(%arg0: i32) -> (i32, i32) {
    %c0_i32 = arith.constant 0 : i32
    %c0_i32_0 = arith.constant 0 : i32
    %c0_i32_1 = arith.constant 0 : i32
    return %c0_i32, %c0_i32_0 : i32, i32
  }
  func.func @transform_19(%arg0: i32) -> (i32, i32) {
    %c0_i32 = arith.constant 0 : i32
    %c0_i32_0 = arith.constant 0 : i32
    %c0_i32_1 = arith.constant 0 : i32
    return %c0_i32, %c0_i32_0 : i32, i32
  }
  func.func @transform_20(%arg0: i32) -> (i32, i32) {
    %c0_i32 = arith.constant 0 : i32
    %c0_i32_0 = arith.constant 0 : i32
    %c0_i32_1 = arith.constant 0 : i32
    return %c0_i32, %c0_i32_0 : i32, i32
  }
}

</mosaic_0001>

<llo_original>
// kernel: sentiment_classifier_forward.1
$region0: #{sentiment_classifier_forward.1}
  #allocation0 [shape = 'u32[]', space=smem, size = 0x4, offset = 0x4, fixed_abs, tag = 'smem constant byte address 0x4 - core index']
  #allocation1 [shape = 'u32[144,128]{1,0:T(1,128)}', space=vmem, size = 0x12000, scoped, tag = 'internal scratch']
  #allocation2 [shape = 'f32[16,32]{1,0:T(8,128)}', space=vmem, size = 0x2000, scoped, tag = 'scratch operand']
  %s0 = inlined_call_operand.vmem [shape: f32[16,32], index: 0, kind: input, shape index: {}]
  %s1 = inlined_call_operand.vmem [shape: f32[2,8], index: 1, kind: input, shape index: {}]
  %s2 = inlined_call_operand.vmem [shape: f32[1,32], index: 2, kind: input, shape index: {}]
  %s3 = inlined_call_operand.vmem [shape: f32[1,32], index: 3, kind: input, shape index: {}, may-alias: {3,17}]
  %s4 = inlined_call_operand.vmem [shape: bf16[2,3,32,32], index: 4, kind: input, shape index: {}]
  %s5 = inlined_call_operand.vmem [shape: f32[2,3,1,32], index: 5, kind: input, shape index: {}]
  %s6 = inlined_call_operand.vmem [shape: bf16[2,32,32], index: 6, kind: input, shape index: {}]
  %s7 = inlined_call_operand.vmem [shape: f32[2,1,32], index: 7, kind: input, shape index: {}, may-alias: {7,9,13,15}]
  %s8 = inlined_call_operand.vmem [shape: f32[2,1,32], index: 8, kind: input, shape index: {}, may-alias: {8,14}]
  %s9 = inlined_call_operand.vmem [shape: f32[2,1,32], index: 9, kind: input, shape index: {}, may-alias: {7,9,13,15}]
  %s10 = inlined_call_operand.vmem [shape: bf16[2,32,64], index: 10, kind: input, shape index: {}]
  %s11 = inlined_call_operand.vmem [shape: f32[2,1,64], index: 11, kind: input, shape index: {}]
  %s12 = inlined_call_operand.vmem [shape: bf16[2,64,32], index: 12, kind: input, shape index: {}]
  %s13 = inlined_call_operand.vmem [shape: f32[2,1,32], index: 13, kind: input, shape index: {}, may-alias: {7,9,13,15}]
  %s14 = inlined_call_operand.vmem [shape: f32[2,1,32], index: 14, kind: input, shape index: {}, may-alias: {8,14}]
  %s15 = inlined_call_operand.vmem [shape: f32[2,1,32], index: 15, kind: input, shape index: {}, may-alias: {7,9,13,15}]
  %s16 = inlined_call_operand.hbm [shape: bf16[32,32], index: 16, kind: input, shape index: {}]
  %s17 = inlined_call_operand.vmem [shape: f32[1,32], index: 17, kind: input, shape index: {}, may-alias: {3,17}]
  %s18 = inlined_call_operand.hbm [shape: bf16[32,128], index: 18, kind: input, shape index: {}]
  %s19 = inlined_call_operand.vmem [shape: f32[1,128], index: 19, kind: input, shape index: {}]
  %s20 = inlined_call_operand.hbm [shape: f32[2,128], index: 20, kind: output, shape index: {}]
  %s21 = sld [smem:[#allocation0]]
  $region129: #{sentiment_classifier_forward.1} parent=0
    _
  %s23 = ssub.s32 1, %s21
  %s24 = scalar_select 0, %s23, %s21
  $region1: #{sentiment_classifier_forward.1} parent=0
    #allocation3 [shape = 'u8[8192]{0}', space=vmem, size = 0x2000, scoped, tag = 'input window, operand 16, single buffered']
    #allocation4 [shape = 's32[2]{0}', space=sflag, size = 0x8, scoped, tag = 'scoped memory for sentiment_classifier_forward.1']
    #allocation5 [shape = 's32[2]{0}', space=sflag, size = 0x8, scoped, tag = 'scoped memory for sentiment_classifier_forward.1']
    #allocation6 [shape = 'u8[8192]{0}', space=vmem, size = 0x2000, scoped, tag = 'input window, operand 18, single buffered']
    #allocation7 [shape = 's32[1]{0}', space=sflag, size = 0x4, scoped, tag = 'scoped memory for sentiment_classifier_forward.1']
    #allocation8 [shape = 'u8[1024]{0}', space=vmem, size = 0x400, scoped, tag = 'output window, operand 0, single buffered']
    %25 = vsyncpa [#allocation4], 0
    %26 = vsyncpa [#allocation7], 0
    %27 = vsyncpa [#allocation5], 0
    loop: start=0, step=1, limit=4
    $region2: #{sentiment_classifier_forward.1} parent=1 // loop_pre_header
      _
    $region3: #{sentiment_classifier_forward.1} parent=1 // loop_header
      %s29 = sphi 0, %s33
      %p30 = scmp.ge.s32.totalorder %s29, 4
      %s37 = sphi 0, %s37
      %s39 = sphi 0, %s37
      %s40 = sphi 0, %s39
      %s54 = sphi 0, %s40
      %s58 = sphi 0, %s58
      %s60 = sphi 0, %s58
      %s61 = sphi 0, %s60
      %s75 = sphi 0, %s61
      %s79 = sphi 0, %s79
      %s81 = sphi 0, %s79
      %s82 = sphi 0, %s81
      %s96 = sphi 0, %s82
      %s100 = sphi 0, %s100
      %s102 = sphi 0, %s100
      %s103 = sphi 0, %s102
      %s117 = sphi 0, %s103
      %s123 = sphi 0, %s125
      %s126 = sphi 0, %s123
      %s127 = sphi 0, %s126
      %s143 = sphi 0, %s127
      %s149 = sphi 0, %s151
      %s152 = sphi 0, %s149
      %s153 = sphi 0, %s152
      %s169 = sphi 0, %s153
      %s175 = sphi 0, %s177
      %s178 = sphi 0, %s175
      %s179 = sphi 0, %s178
      %s195 = sphi 0, %s179
      %s201 = sphi 0, %s203
      %s204 = sphi 0, %s201
      %s205 = sphi 0, %s204
      %s221 = sphi 0, %s205
      %s227 = sphi 0, %s229
      %s230 = sphi 0, %s227
      %s231 = sphi 0, %s230
      %s247 = sphi 0, %s231
      %s253 = sphi 0, %s255
      %s256 = sphi 0, %s253
      %s257 = sphi 0, %s256
      %s273 = sphi 0, %s257
      %s279 = sphi 0, %s281
      %s282 = sphi 0, %s279
      %s283 = sphi 0, %s282
      %s299 = sphi 0, %s283
      %s305 = sphi 0, %s307
      %s308 = sphi 0, %s305
      %s309 = sphi 0, %s308
      %s325 = sphi 0, %s309
      %s331 = sphi 0, %s333
      %s334 = sphi 0, %s331
      %s335 = sphi 0, %s334
      %s351 = sphi 0, %s335
      %s357 = sphi 0, %s359
      %s360 = sphi 0, %s357
      %s361 = sphi 0, %s360
      %s377 = sphi 0, %s361
      %s383 = sphi 0, %s385
      %s386 = sphi 0, %s383
      %s387 = sphi 0, %s386
      %s403 = sphi 0, %s387
      %s409 = sphi 0, %s411
      %s412 = sphi 0, %s409
      %s413 = sphi 0, %s412
      %s429 = sphi 0, %s413
      %s433 = sphi 0, %s433
      %s435 = sphi 0, %s433
      %s436 = sphi 0, %s435
      %s450 = sphi 0, %s436
      %s454 = sphi 0, %s454
      %s456 = sphi 0, %s454
      %s457 = sphi 0, %s456
      %s471 = sphi 0, %s457
      %s475 = sphi 0, %s475
      %s477 = sphi 0, %s475
      %s478 = sphi 0, %s477
      %s492 = sphi 0, %s478
      %s496 = sphi 0, %s496
      %s498 = sphi 0, %s496
      %s499 = sphi 0, %s498
      %s513 = sphi 0, %s499
      %s517 = sphi 0, %s517
      %s519 = sphi 0, %s517
      %s520 = sphi 0, %s519
      %s534 = sphi 0, %s520
    $region4: #{sentiment_classifier_forward.1} parent=1 // loop_header_branch
      %32 = sbr.rel (%p30) target = $region8
    $region5: #{sentiment_classifier_forward.1} parent=1 // loop_body
      %s34 = ssub.s32 %s29, 1
      %s35 = ssub.s32 %s29, 2
      %s36 = sadd.s32 %s29, 1
      %s38 = sadd.s32 %s37, 1
      %p41 = scmp.eq.s32.totalorder %s29, 1
      %p42 = scmp.ne.s32.totalorder %s37, %s39
      %p43 = scmp.eq.s32.totalorder %s29, 0
      %p44 = por %p42, %p43
      %p45 = scmp.ne.s32.totalorder %s37, %s39
      %p46 = scmp.eq.s32.totalorder %s34, 1
      %p47 = por %p45, %p46
      %p48 = scmp.ne.s32.totalorder %s39, %s40
      %p49 = scmp.eq.s32.totalorder %s34, 0
      %p50 = por %p48, %p49
      %p51 = scmp.ne.s32.totalorder %s39, %s40
      %p52 = scmp.eq.s32.totalorder %s35, 1
      %p53 = por %p51, %p52
      %p55 = scmp.ne.s32.totalorder %s40, %s54
      %p56 = scmp.eq.s32.totalorder %s35, 0
      %p57 = por %p55, %p56
      %s59 = sadd.s32 %s58, 1
      %p62 = scmp.eq.s32.totalorder %s29, 1
      %p63 = scmp.ne.s32.totalorder %s58, %s60
      %p64 = scmp.eq.s32.totalorder %s29, 0
      %p65 = por %p63, %p64
      %p66 = scmp.ne.s32.totalorder %s58, %s60
      %p67 = scmp.eq.s32.totalorder %s34, 1
      %p68 = por %p66, %p67
      %p69 = scmp.ne.s32.totalorder %s60, %s61
      %p70 = scmp.eq.s32.totalorder %s34, 0
      %p71 = por %p69, %p70
      %p72 = scmp.ne.s32.totalorder %s60, %s61
      %p73 = scmp.eq.s32.totalorder %s35, 1
      %p74 = por %p72, %p73
      %p76 = scmp.ne.s32.totalorder %s61, %s75
      %p77 = scmp.eq.s32.totalorder %s35, 0
      %p78 = por %p76, %p77
      %s80 = sadd.s32 %s79, 1
      %p83 = scmp.eq.s32.totalorder %s29, 1
      %p84 = scmp.ne.s32.totalorder %s79, %s81
      %p85 = scmp.eq.s32.totalorder %s29, 0
      %p86 = por %p84, %p85
      %p87 = scmp.ne.s32.totalorder %s79, %s81
      %p88 = scmp.eq.s32.totalorder %s34, 1
      %p89 = por %p87, %p88
      %p90 = scmp.ne.s32.totalorder %s81, %s82
      %p91 = scmp.eq.s32.totalorder %s34, 0
      %p92 = por %p90, %p91
      %p93 = scmp.ne.s32.totalorder %s81, %s82
      %p94 = scmp.eq.s32.totalorder %s35, 1
      %p95 = por %p93, %p94
      %p97 = scmp.ne.s32.totalorder %s82, %s96
      %p98 = scmp.eq.s32.totalorder %s35, 0
      %p99 = por %p97, %p98
      %s101 = sadd.s32 %s100, 1
      %p104 = scmp.eq.s32.totalorder %s29, 1
      %p105 = scmp.ne.s32.totalorder %s100, %s102
      %p106 = scmp.eq.s32.totalorder %s29, 0
      %p107 = por %p105, %p106
      %p108 = scmp.ne.s32.totalorder %s100, %s102
      %p109 = scmp.eq.s32.totalorder %s34, 1
      %p110 = por %p108, %p109
      %p111 = scmp.ne.s32.totalorder %s102, %s103
      %p112 = scmp.eq.s32.totalorder %s34, 0
      %p113 = por %p111, %p112
      %p114 = scmp.ne.s32.totalorder %s102, %s103
      %p115 = scmp.eq.s32.totalorder %s35, 1
      %p116 = por %p114, %p115
      %p118 = scmp.ne.s32.totalorder %s103, %s117
      %p119 = scmp.eq.s32.totalorder %s35, 0
      %p120 = por %p118, %p119
      %s121 = ssub.s32 %s29, %s36
      %p122 = scmp.eq.s32.totalorder %s121, 0
      %s124 = sadd.s32 %s123, 1
      %s125 = scalar_select %p122, %s123, %s124
      %p128 = pneg %p122
      %p129 = scmp.eq.s32.totalorder %s29, 1
      %p130 = por %p128, %p129
      %p131 = scmp.ne.s32.totalorder %s123, %s126
      %p132 = scmp.eq.s32.totalorder %s29, 0
      %p133 = por %p131, %p132
      %p134 = scmp.ne.s32.totalorder %s123, %s126
      %p135 = scmp.eq.s32.totalorder %s34, 1
      %p136 = por %p134, %p135
      %p137 = scmp.ne.s32.totalorder %s126, %s127
      %p138 = scmp.eq.s32.totalorder %s34, 0
      %p139 = por %p137, %p138
      %p140 = scmp.ne.s32.totalorder %s126, %s127
      %p141 = scmp.eq.s32.totalorder %s35, 1
      %p142 = por %p140, %p141
      %p144 = scmp.ne.s32.totalorder %s127, %s143
      %p145 = scmp.eq.s32.totalorder %s35, 0
      %p146 = por %p144, %p145
      %s147 = ssub.s32 %s29, %s36
      %p148 = scmp.eq.s32.totalorder %s147, 0
      %s150 = sadd.s32 %s149, 1
      %s151 = scalar_select %p148, %s149, %s150
      %p154 = pneg %p148
      %p155 = scmp.eq.s32.totalorder %s29, 1
      %p156 = por %p154, %p155
      %p157 = scmp.ne.s32.totalorder %s149, %s152
      %p158 = scmp.eq.s32.totalorder %s29, 0
      %p159 = por %p157, %p158
      %p160 = scmp.ne.s32.totalorder %s149, %s152
      %p161 = scmp.eq.s32.totalorder %s34, 1
      %p162 = por %p160, %p161
      %p163 = scmp.ne.s32.totalorder %s152, %s153
      %p164 = scmp.eq.s32.totalorder %s34, 0
      %p165 = por %p163, %p164
      %p166 = scmp.ne.s32.totalorder %s152, %s153
      %p167 = scmp.eq.s32.totalorder %s35, 1
      %p168 = por %p166, %p167
      %p170 = scmp.ne.s32.totalorder %s153, %s169
      %p171 = scmp.eq.s32.totalorder %s35, 0
      %p172 = por %p170, %p171
      %s173 = ssub.s32 %s29, %s36
      %p174 = scmp.eq.s32.totalorder %s173, 0
      %s176 = sadd.s32 %s175, 1
      %s177 = scalar_select %p174, %s175, %s176
      %p180 = pneg %p174
      %p181 = scmp.eq.s32.totalorder %s29, 1
      %p182 = por %p180, %p181
      %p183 = scmp.ne.s32.totalorder %s175, %s178
      %p184 = scmp.eq.s32.totalorder %s29, 0
      %p185 = por %p183, %p184
      %p186 = scmp.ne.s32.totalorder %s175, %s178
      %p187 = scmp.eq.s32.totalorder %s34, 1
      %p188 = por %p186, %p187
      %p189 = scmp.ne.s32.totalorder %s178, %s179
      %p190 = scmp.eq.s32.totalorder %s34, 0
      %p191 = por %p189, %p190
      %p192 = scmp.ne.s32.totalorder %s178, %s179
      %p193 = scmp.eq.s32.totalorder %s35, 1
      %p194 = por %p192, %p193
      %p196 = scmp.ne.s32.totalorder %s179, %s195
      %p197 = scmp.eq.s32.totalorder %s35, 0
      %p198 = por %p196, %p197
      %s199 = ssub.s32 %s29, %s36
      %p200 = scmp.eq.s32.totalorder %s199, 0
      %s202 = sadd.s32 %s201, 1
      %s203 = scalar_select %p200, %s201, %s202
      %p206 = pneg %p200
      %p207 = scmp.eq.s32.totalorder %s29, 1
      %p208 = por %p206, %p207
      %p209 = scmp.ne.s32.totalorder %s201, %s204
      %p210 = scmp.eq.s32.totalorder %s29, 0
      %p211 = por %p209, %p210
      %p212 = scmp.ne.s32.totalorder %s201, %s204
      %p213 = scmp.eq.s32.totalorder %s34, 1
      %p214 = por %p212, %p213
      %p215 = scmp.ne.s32.totalorder %s204, %s205
      %p216 = scmp.eq.s32.totalorder %s34, 0
      %p217 = por %p215, %p216
      %p218 = scmp.ne.s32.totalorder %s204, %s205
      %p219 = scmp.eq.s32.totalorder %s35, 1
      %p220 = por %p218, %p219
      %p222 = scmp.ne.s32.totalorder %s205, %s221
      %p223 = scmp.eq.s32.totalorder %s35, 0
      %p224 = por %p222, %p223
      %s225 = ssub.s32 %s29, %s36
      %p226 = scmp.eq.s32.totalorder %s225, 0
      %s228 = sadd.s32 %s227, 1
      %s229 = scalar_select %p226, %s227, %s228
      %p232 = pneg %p226
      %p233 = scmp.eq.s32.totalorder %s29, 1
      %p234 = por %p232, %p233
      %p235 = scmp.ne.s32.totalorder %s227, %s230
      %p236 = scmp.eq.s32.totalorder %s29, 0
      %p237 = por %p235, %p236
      %p238 = scmp.ne.s32.totalorder %s227, %s230
      %p239 = scmp.eq.s32.totalorder %s34, 1
      %p240 = por %p238, %p239
      %p241 = scmp.ne.s32.totalorder %s230, %s231
      %p242 = scmp.eq.s32.totalorder %s34, 0
      %p243 = por %p241, %p242
      %p244 = scmp.ne.s32.totalorder %s230, %s231
      %p245 = scmp.eq.s32.totalorder %s35, 1
      %p246 = por %p244, %p245
      %p248 = scmp.ne.s32.totalorder %s231, %s247
      %p249 = scmp.eq.s32.totalorder %s35, 0
      %p250 = por %p248, %p249
      %s251 = ssub.s32 %s29, %s36
      %p252 = scmp.eq.s32.totalorder %s251, 0
      %s254 = sadd.s32 %s253, 1
      %s255 = scalar_select %p252, %s253, %s254
      %p258 = pneg %p252
      %p259 = scmp.eq.s32.totalorder %s29, 1
      %p260 = por %p258, %p259
      %p261 = scmp.ne.s32.totalorder %s253, %s256
      %p262 = scmp.eq.s32.totalorder %s29, 0
      %p263 = por %p261, %p262
      %p264 = scmp.ne.s32.totalorder %s253, %s256
      %p265 = scmp.eq.s32.totalorder %s34, 1
      %p266 = por %p264, %p265
      %p267 = scmp.ne.s32.totalorder %s256, %s257
      %p268 = scmp.eq.s32.totalorder %s34, 0
      %p269 = por %p267, %p268
      %p270 = scmp.ne.s32.totalorder %s256, %s257
      %p271 = scmp.eq.s32.totalorder %s35, 1
      %p272 = por %p270, %p271
      %p274 = scmp.ne.s32.totalorder %s257, %s273
      %p275 = scmp.eq.s32.totalorder %s35, 0
      %p276 = por %p274, %p275
      %s277 = ssub.s32 %s29, %s36
      %p278 = scmp.eq.s32.totalorder %s277, 0
      %s280 = sadd.s32 %s279, 1
      %s281 = scalar_select %p278, %s279, %s280
      %p284 = pneg %p278
      %p285 = scmp.eq.s32.totalorder %s29, 1
      %p286 = por %p284, %p285
      %p287 = scmp.ne.s32.totalorder %s279, %s282
      %p288 = scmp.eq.s32.totalorder %s29, 0
      %p289 = por %p287, %p288
      %p290 = scmp.ne.s32.totalorder %s279, %s282
      %p291 = scmp.eq.s32.totalorder %s34, 1
      %p292 = por %p290, %p291
      %p293 = scmp.ne.s32.totalorder %s282, %s283
      %p294 = scmp.eq.s32.totalorder %s34, 0
      %p295 = por %p293, %p294
      %p296 = scmp.ne.s32.totalorder %s282, %s283
      %p297 = scmp.eq.s32.totalorder %s35, 1
      %p298 = por %p296, %p297
      %p300 = scmp.ne.s32.totalorder %s283, %s299
      %p301 = scmp.eq.s32.totalorder %s35, 0
      %p302 = por %p300, %p301
      %s303 = ssub.s32 %s29, %s36
      %p304 = scmp.eq.s32.totalorder %s303, 0
      %s306 = sadd.s32 %s305, 1
      %s307 = scalar_select %p304, %s305, %s306
      %p310 = pneg %p304
      %p311 = scmp.eq.s32.totalorder %s29, 1
      %p312 = por %p310, %p311
      %p313 = scmp.ne.s32.totalorder %s305, %s308
      %p314 = scmp.eq.s32.totalorder %s29, 0
      %p315 = por %p313, %p314
      %p316 = scmp.ne.s32.totalorder %s305, %s308
      %p317 = scmp.eq.s32.totalorder %s34, 1
      %p318 = por %p316, %p317
      %p319 = scmp.ne.s32.totalorder %s308, %s309
      %p320 = scmp.eq.s32.totalorder %s34, 0
      %p321 = por %p319, %p320
      %p322 = scmp.ne.s32.totalorder %s308, %s309
      %p323 = scmp.eq.s32.totalorder %s35, 1
      %p324 = por %p322, %p323
      %p326 = scmp.ne.s32.totalorder %s309, %s325
      %p327 = scmp.eq.s32.totalorder %s35, 0
      %p328 = por %p326, %p327
      %s329 = ssub.s32 %s29, %s36
      %p330 = scmp.eq.s32.totalorder %s329, 0
      %s332 = sadd.s32 %s331, 1
      %s333 = scalar_select %p330, %s331, %s332
      %p336 = pneg %p330
      %p337 = scmp.eq.s32.totalorder %s29, 1
      %p338 = por %p336, %p337
      %p339 = scmp.ne.s32.totalorder %s331, %s334
      %p340 = scmp.eq.s32.totalorder %s29, 0
      %p341 = por %p339, %p340
      %p342 = scmp.ne.s32.totalorder %s331, %s334
      %p343 = scmp.eq.s32.totalorder %s34, 1
      %p344 = por %p342, %p343
      %p345 = scmp.ne.s32.totalorder %s334, %s335
      %p346 = scmp.eq.s32.totalorder %s34, 0
      %p347 = por %p345, %p346
      %p348 = scmp.ne.s32.totalorder %s334, %s335
      %p349 = scmp.eq.s32.totalorder %s35, 1
      %p350 = por %p348, %p349
      %p352 = scmp.ne.s32.totalorder %s335, %s351
      %p353 = scmp.eq.s32.totalorder %s35, 0
      %p354 = por %p352, %p353
      %s355 = ssub.s32 %s29, %s36
      %p356 = scmp.eq.s32.totalorder %s355, 0
      %s358 = sadd.s32 %s357, 1
      %s359 = scalar_select %p356, %s357, %s358
      %p362 = pneg %p356
      %p363 = scmp.eq.s32.totalorder %s29, 1
      %p364 = por %p362, %p363
      %p365 = scmp.ne.s32.totalorder %s357, %s360
      %p366 = scmp.eq.s32.totalorder %s29, 0
      %p367 = por %p365, %p366
      %p368 = scmp.ne.s32.totalorder %s357, %s360
      %p369 = scmp.eq.s32.totalorder %s34, 1
      %p370 = por %p368, %p369
      %p371 = scmp.ne.s32.totalorder %s360, %s361
      %p372 = scmp.eq.s32.totalorder %s34, 0
      %p373 = por %p371, %p372
      %p374 = scmp.ne.s32.totalorder %s360, %s361
      %p375 = scmp.eq.s32.totalorder %s35, 1
      %p376 = por %p374, %p375
      %p378 = scmp.ne.s32.totalorder %s361, %s377
      %p379 = scmp.eq.s32.totalorder %s35, 0
      %p380 = por %p378, %p379
      %s381 = ssub.s32 %s29, %s36
      %p382 = scmp.eq.s32.totalorder %s381, 0
      %s384 = sadd.s32 %s383, 1
      %s385 = scalar_select %p382, %s383, %s384
      %p388 = pneg %p382
      %p389 = scmp.eq.s32.totalorder %s29, 1
      %p390 = por %p388, %p389
      %p391 = scmp.ne.s32.totalorder %s383, %s386
      %p392 = scmp.eq.s32.totalorder %s29, 0
      %p393 = por %p391, %p392
      %p394 = scmp.ne.s32.totalorder %s383, %s386
      %p395 = scmp.eq.s32.totalorder %s34, 1
      %p396 = por %p394, %p395
      %p397 = scmp.ne.s32.totalorder %s386, %s387
      %p398 = scmp.eq.s32.totalorder %s34, 0
      %p399 = por %p397, %p398
      %p400 = scmp.ne.s32.totalorder %s386, %s387
      %p401 = scmp.eq.s32.totalorder %s35, 1
      %p402 = por %p400, %p401
      %p404 = scmp.ne.s32.totalorder %s387, %s403
      %p405 = scmp.eq.s32.totalorder %s35, 0
      %p406 = por %p404, %p405
      %s407 = ssub.s32 %s29, %s36
      %p408 = scmp.eq.s32.totalorder %s407, 0
      %s410 = sadd.s32 %s409, 1
      %s411 = scalar_select %p408, %s409, %s410
      %p414 = pneg %p408
      %p415 = scmp.eq.s32.totalorder %s29, 1
      %p416 = por %p414, %p415
      %p417 = scmp.ne.s32.totalorder %s409, %s412
      %p418 = scmp.eq.s32.totalorder %s29, 0
      %p419 = por %p417, %p418
      %p420 = scmp.ne.s32.totalorder %s409, %s412
      %p421 = scmp.eq.s32.totalorder %s34, 1
      %p422 = por %p420, %p421
      %p423 = scmp.ne.s32.totalorder %s412, %s413
      %p424 = scmp.eq.s32.totalorder %s34, 0
      %p425 = por %p423, %p424
      %p426 = scmp.ne.s32.totalorder %s412, %s413
      %p427 = scmp.eq.s32.totalorder %s35, 1
      %p428 = por %p426, %p427
      %p430 = scmp.ne.s32.totalorder %s413, %s429
      %p431 = scmp.eq.s32.totalorder %s35, 0
      %p432 = por %p430, %p431
      %s434 = sadd.s32 %s433, 1
      %p437 = scmp.eq.s32.totalorder %s29, 1
      %p438 = scmp.ne.s32.totalorder %s433, %s435
      %p439 = scmp.eq.s32.totalorder %s29, 0
      %p440 = por %p438, %p439
      %p441 = scmp.ne.s32.totalorder %s433, %s435
      %p442 = scmp.eq.s32.totalorder %s34, 1
      %p443 = por %p441, %p442
      %p444 = scmp.ne.s32.totalorder %s435, %s436
      %p445 = scmp.eq.s32.totalorder %s34, 0
      %p446 = por %p444, %p445
      %p447 = scmp.ne.s32.totalorder %s435, %s436
      %p448 = scmp.eq.s32.totalorder %s35, 1
      %p449 = por %p447, %p448
      %p451 = scmp.ne.s32.totalorder %s436, %s450
      %p452 = scmp.eq.s32.totalorder %s35, 0
      %p453 = por %p451, %p452
      %s455 = sadd.s32 %s454, 1
      %p458 = scmp.eq.s32.totalorder %s29, 1
      %p459 = scmp.ne.s32.totalorder %s454, %s456
      %p460 = scmp.eq.s32.totalorder %s29, 0
      %p461 = por %p459, %p460
      %p462 = scmp.ne.s32.totalorder %s454, %s456
      %p463 = scmp.eq.s32.totalorder %s34, 1
      %p464 = por %p462, %p463
      %p465 = scmp.ne.s32.totalorder %s456, %s457
      %p466 = scmp.eq.s32.totalorder %s34, 0
      %p467 = por %p465, %p466
      %p468 = scmp.ne.s32.totalorder %s456, %s457
      %p469 = scmp.eq.s32.totalorder %s35, 1
      %p470 = por %p468, %p469
      %p472 = scmp.ne.s32.totalorder %s457, %s471
      %p473 = scmp.eq.s32.totalorder %s35, 0
      %p474 = por %p472, %p473
      %s476 = sadd.s32 %s475, 1
      %p479 = scmp.eq.s32.totalorder %s29, 1
      %p480 = scmp.ne.s32.totalorder %s475, %s477
      %p481 = scmp.eq.s32.totalorder %s29, 0
      %p482 = por %p480, %p481
      %p483 = scmp.ne.s32.totalorder %s475, %s477
      %p484 = scmp.eq.s32.totalorder %s34, 1
      %p485 = por %p483, %p484
      %p486 = scmp.ne.s32.totalorder %s477, %s478
      %p487 = scmp.eq.s32.totalorder %s34, 0
      %p488 = por %p486, %p487
      %p489 = scmp.ne.s32.totalorder %s477, %s478
      %p490 = scmp.eq.s32.totalorder %s35, 1
      %p491 = por %p489, %p490
      %p493 = scmp.ne.s32.totalorder %s478, %s492
      %p494 = scmp.eq.s32.totalorder %s35, 0
      %p495 = por %p493, %p494
      %s497 = sadd.s32 %s496, 1
      %p500 = scmp.eq.s32.totalorder %s29, 1
      %p501 = scmp.ne.s32.totalorder %s496, %s498
      %p502 = scmp.eq.s32.totalorder %s29, 0
      %p503 = por %p501, %p502
      %p504 = scmp.ne.s32.totalorder %s496, %s498
      %p505 = scmp.eq.s32.totalorder %s34, 1
      %p506 = por %p504, %p505
      %p507 = scmp.ne.s32.totalorder %s498, %s499
      %p508 = scmp.eq.s32.totalorder %s34, 0
      %p509 = por %p507, %p508
      %p510 = scmp.ne.s32.totalorder %s498, %s499
      %p511 = scmp.eq.s32.totalorder %s35, 1
      %p512 = por %p510, %p511
      %p514 = scmp.ne.s32.totalorder %s499, %s513
      %p515 = scmp.eq.s32.totalorder %s35, 0
      %p516 = por %p514, %p515
      %s518 = sadd.s32 %s517, 1
      %p521 = scmp.eq.s32.totalorder %s29, 1
      %p522 = scmp.ne.s32.totalorder %s517, %s519
      %p523 = scmp.eq.s32.totalorder %s29, 0
      %p524 = por %p522, %p523
      %p525 = scmp.ne.s32.totalorder %s517, %s519
      %p526 = scmp.eq.s32.totalorder %s34, 1
      %p527 = por %p525, %p526
      %p528 = scmp.ne.s32.totalorder %s519, %s520
      %p529 = scmp.eq.s32.totalorder %s34, 0
      %p530 = por %p528, %p529
      %p531 = scmp.ne.s32.totalorder %s519, %s520
      %p532 = scmp.eq.s32.totalorder %s35, 1
      %p533 = por %p531, %p532
      %p535 = scmp.ne.s32.totalorder %s520, %s534
      %p536 = scmp.eq.s32.totalorder %s35, 0
      %p537 = por %p535, %p536
      %p538 = scmp.le.s32.totalorder 1, %s29
      %p539 = scmp.lt.s32.totalorder %s29, 3
      %p540 = pnand %p538, %p539
      %p541 = pneg %p540
      // Predicated region
      $region9: #{sentiment_classifier_forward.1} parent=5 // pred_check
        _
      $region10: #{sentiment_classifier_forward.1} parent=5 // pred_check_branch
        %543 = sbr.rel (%p540) target = $region12
      $region11: #{sentiment_classifier_forward.1} parent=5 // pred_region
        %s544 = ssub.s32 %s29, 1
        // Predicated region
        $region13: #{sentiment_classifier_forward.1} parent=11 // pred_check
          %p545 = pneg %p50
        $region14: #{sentiment_classifier_forward.1} parent=11 // pred_check_branch
          %547 = sbr.rel (%p545) target = $region16
        $region15: #{sentiment_classifier_forward.1} parent=11 // pred_region
          _
        $region16: #{sentiment_classifier_forward.1} parent=11 // pred_fallthru
          _
        // Predicated region
        $region17: #{sentiment_classifier_forward.1} parent=11 // pred_check
          %p548 = pneg %p71
        $region18: #{sentiment_classifier_forward.1} parent=11 // pred_check_branch
          %550 = sbr.rel (%p548) target = $region20
        $region19: #{sentiment_classifier_forward.1} parent=11 // pred_region
          _
        $region20: #{sentiment_classifier_forward.1} parent=11 // pred_fallthru
          _
        // Predicated region
        $region21: #{sentiment_classifier_forward.1} parent=11 // pred_check
          %p551 = pneg %p92
        $region22: #{sentiment_classifier_forward.1} parent=11 // pred_check_branch
          %553 = sbr.rel (%p551) target = $region24
        $region23: #{sentiment_classifier_forward.1} parent=11 // pred_region
          _
        $region24: #{sentiment_classifier_forward.1} parent=11 // pred_fallthru
          _
        // Predicated region
        $region25: #{sentiment_classifier_forward.1} parent=11 // pred_check
          %p554 = pneg %p113
        $region26: #{sentiment_classifier_forward.1} parent=11 // pred_check_branch
          %556 = sbr.rel (%p554) target = $region28
        $region27: #{sentiment_classifier_forward.1} parent=11 // pred_region
          _
        $region28: #{sentiment_classifier_forward.1} parent=11 // pred_fallthru
          _
        // Predicated region
        $region29: #{sentiment_classifier_forward.1} parent=11 // pred_check
          %p557 = pneg %p446
        $region30: #{sentiment_classifier_forward.1} parent=11 // pred_check_branch
          %559 = sbr.rel (%p557) target = $region32
        $region31: #{sentiment_classifier_forward.1} parent=11 // pred_region
          %s561 = ssub.s32 256, 256
          %562 = vsyncadd [#allocation4], %s561
          %s563 = sshll.u32 [#allocation3], 4
          %s564 = int_to_ptr.vmem [resolvable:$true] %s563
          %569 = dma.hbm_to_vmem [thread:$0]  %s16, 256, %s564, [#allocation4], 64, 64, 4
        $region32: #{sentiment_classifier_forward.1} parent=11 // pred_fallthru
          _
        // Predicated region
        $region33: #{sentiment_classifier_forward.1} parent=11 // pred_check
          %p570 = pneg %p467
        $region34: #{sentiment_classifier_forward.1} parent=11 // pred_check_branch
          %572 = sbr.rel (%p570) target = $region36
        $region35: #{sentiment_classifier_forward.1} parent=11 // pred_region
          _
        $region36: #{sentiment_classifier_forward.1} parent=11 // pred_fallthru
          _
        // Predicated region
        $region37: #{sentiment_classifier_forward.1} parent=11 // pred_check
          %p573 = pneg %p488
        $region38: #{sentiment_classifier_forward.1} parent=11 // pred_check_branch
          %575 = sbr.rel (%p573) target = $region40
        $region39: #{sentiment_classifier_forward.1} parent=11 // pred_region
          %s577 = ssub.s32 256, 256
          %578 = vsyncadd [#allocation7], %s577
          %s579 = sshll.u32 [#allocation6], 4
          %s580 = int_to_ptr.vmem [resolvable:$true] %s579
          %585 = dma.hbm_to_vmem [thread:$0]  %s18, 256, %s580, [#allocation7], 64, 64, 4
        $region40: #{sentiment_classifier_forward.1} parent=11 // pred_fallthru
          _
        // Predicated region
        $region41: #{sentiment_classifier_forward.1} parent=11 // pred_check
          %p586 = pneg %p509
        $region42: #{sentiment_classifier_forward.1} parent=11 // pred_check_branch
          %588 = sbr.rel (%p586) target = $region44
        $region43: #{sentiment_classifier_forward.1} parent=11 // pred_region
          _
        $region44: #{sentiment_classifier_forward.1} parent=11 // pred_fallthru
          _
      $region12: #{sentiment_classifier_forward.1} parent=5 // pred_fallthru
        _
      %p589 = scmp.lt.s32.totalorder %s29, 2
      // Predicated region
      $region45: #{sentiment_classifier_forward.1} parent=5 // pred_check
        %p590 = pneg %p589
      $region46: #{sentiment_classifier_forward.1} parent=5 // pred_check_branch
        %592 = sbr.rel (%p590) target = $region48
      $region47: #{sentiment_classifier_forward.1} parent=5 // pred_region
        // Predicated region
        $region49: #{sentiment_classifier_forward.1} parent=47 // pred_check
          %p593 = pneg %p133
        $region50: #{sentiment_classifier_forward.1} parent=47 // pred_check_branch
          %595 = sbr.rel (%p593) target = $region52
        $region51: #{sentiment_classifier_forward.1} parent=47 // pred_region
          %p596 = scmp.lt.s32.totalorder %s29, 1
          %s597 = scalar_select %p596, %s29, 1
          %s598 = smul.addr %s597, 12
          %s599 = smul.addr %s598, 4
          %s600 = scalar_lea.vmem %s4, %s599
        $region52: #{sentiment_classifier_forward.1} parent=47 // pred_fallthru
          _
        // Predicated region
        $region53: #{sentiment_classifier_forward.1} parent=47 // pred_check
          %p601 = pneg %p159
        $region54: #{sentiment_classifier_forward.1} parent=47 // pred_check_branch
          %603 = sbr.rel (%p601) target = $region56
        $region55: #{sentiment_classifier_forward.1} parent=47 // pred_region
          %p604 = scmp.lt.s32.totalorder %s29, 1
          %s605 = scalar_select %p604, %s29, 1
          %s606 = smul.addr %s605, 3
          %s607 = scalar_lea.vmem %s5, %s606
        $region56: #{sentiment_classifier_forward.1} parent=47 // pred_fallthru
          _
        // Predicated region
        $region57: #{sentiment_classifier_forward.1} parent=47 // pred_check
          %p608 = pneg %p185
        $region58: #{sentiment_classifier_forward.1} parent=47 // pred_check_branch
          %610 = sbr.rel (%p608) target = $region60
        $region59: #{sentiment_classifier_forward.1} parent=47 // pred_region
          %p611 = scmp.lt.s32.totalorder %s29, 1
          %s612 = scalar_select %p611, %s29, 1
          %s613 = smul.addr %s612, 4
          %s614 = smul.addr %s613, 4
          %s615 = scalar_lea.vmem %s6, %s614
        $region60: #{sentiment_classifier_forward.1} parent=47 // pred_fallthru
          _
        // Predicated region
        $region61: #{sentiment_classifier_forward.1} parent=47 // pred_check
          %p616 = pneg %p211
        $region62: #{sentiment_classifier_forward.1} parent=47 // pred_check_branch
          %618 = sbr.rel (%p616) target = $region64
        $region63: #{sentiment_classifier_forward.1} parent=47 // pred_region
          %p619 = scmp.lt.s32.totalorder %s29, 1
          %s620 = scalar_select %p619, %s29, 1
          %s621 = scalar_lea.vmem %s7, %s620
        $region64: #{sentiment_classifier_forward.1} parent=47 // pred_fallthru
          _
        // Predicated region
        $region65: #{sentiment_classifier_forward.1} parent=47 // pred_check
          %p622 = pneg %p237
        $region66: #{sentiment_classifier_forward.1} parent=47 // pred_check_branch
          %624 = sbr.rel (%p622) target = $region68
        $region67: #{sentiment_classifier_forward.1} parent=47 // pred_region
          %p625 = scmp.lt.s32.totalorder %s29, 1
          %s626 = scalar_select %p625, %s29, 1
          %s627 = scalar_lea.vmem %s8, %s626
        $region68: #{sentiment_classifier_forward.1} parent=47 // pred_fallthru
          _
        // Predicated region
        $region69: #{sentiment_classifier_forward.1} parent=47 // pred_check
          %p628 = pneg %p263
        $region70: #{sentiment_classifier_forward.1} parent=47 // pred_check_branch
          %630 = sbr.rel (%p628) target = $region72
        $region71: #{sentiment_classifier_forward.1} parent=47 // pred_region
          %p631 = scmp.lt.s32.totalorder %s29, 1
          %s632 = scalar_select %p631, %s29, 1
          %s633 = scalar_lea.vmem %s9, %s632
        $region72: #{sentiment_classifier_forward.1} parent=47 // pred_fallthru
          _
        // Predicated region
        $region73: #{sentiment_classifier_forward.1} parent=47 // pred_check
          %p634 = pneg %p289
        $region74: #{sentiment_classifier_forward.1} parent=47 // pred_check_branch
          %636 = sbr.rel (%p634) target = $region76
        $region75: #{sentiment_classifier_forward.1} parent=47 // pred_region
          %p637 = scmp.lt.s32.totalorder %s29, 1
          %s638 = scalar_select %p637, %s29, 1
          %s639 = smul.addr %s638, 4
          %s640 = smul.addr %s639, 4
          %s641 = scalar_lea.vmem %s10, %s640
        $region76: #{sentiment_classifier_forward.1} parent=47 // pred_fallthru
          _
        // Predicated region
        $region77: #{sentiment_classifier_forward.1} parent=47 // pred_check
          %p642 = pneg %p315
        $region78: #{sentiment_classifier_forward.1} parent=47 // pred_check_branch
          %644 = sbr.rel (%p642) target = $region80
        $region79: #{sentiment_classifier_forward.1} parent=47 // pred_region
          %p645 = scmp.lt.s32.totalorder %s29, 1
          %s646 = scalar_select %p645, %s29, 1
          %s647 = scalar_lea.vmem %s11, %s646
        $region80: #{sentiment_classifier_forward.1} parent=47 // pred_fallthru
          _
        // Predicated region
        $region81: #{sentiment_classifier_forward.1} parent=47 // pred_check
          %p648 = pneg %p341
        $region82: #{sentiment_classifier_forward.1} parent=47 // pred_check_branch
          %650 = sbr.rel (%p648) target = $region84
        $region83: #{sentiment_classifier_forward.1} parent=47 // pred_region
          %p651 = scmp.lt.s32.totalorder %s29, 1
          %s652 = scalar_select %p651, %s29, 1
          %s653 = smul.addr %s652, 8
          %s654 = smul.addr %s653, 4
          %s655 = scalar_lea.vmem %s12, %s654
        $region84: #{sentiment_classifier_forward.1} parent=47 // pred_fallthru
          _
        // Predicated region
        $region85: #{sentiment_classifier_forward.1} parent=47 // pred_check
          %p656 = pneg %p367
        $region86: #{sentiment_classifier_forward.1} parent=47 // pred_check_branch
          %658 = sbr.rel (%p656) target = $region88
        $region87: #{sentiment_classifier_forward.1} parent=47 // pred_region
          %p659 = scmp.lt.s32.totalorder %s29, 1
          %s660 = scalar_select %p659, %s29, 1
          %s661 = scalar_lea.vmem %s13, %s660
        $region88: #{sentiment_classifier_forward.1} parent=47 // pred_fallthru
          _
        // Predicated region
        $region89: #{sentiment_classifier_forward.1} parent=47 // pred_check
          %p662 = pneg %p393
        $region90: #{sentiment_classifier_forward.1} parent=47 // pred_check_branch
          %664 = sbr.rel (%p662) target = $region92
        $region91: #{sentiment_classifier_forward.1} parent=47 // pred_region
          %p665 = scmp.lt.s32.totalorder %s29, 1
          %s666 = scalar_select %p665, %s29, 1
          %s667 = scalar_lea.vmem %s14, %s666
        $region92: #{sentiment_classifier_forward.1} parent=47 // pred_fallthru
          _
        // Predicated region
        $region93: #{sentiment_classifier_forward.1} parent=47 // pred_check
          %p668 = pneg %p419
        $region94: #{sentiment_classifier_forward.1} parent=47 // pred_check_branch
          %670 = sbr.rel (%p668) target = $region96
        $region95: #{sentiment_classifier_forward.1} parent=47 // pred_region
          %p671 = scmp.lt.s32.totalorder %s29, 1
          %s672 = scalar_select %p671, %s29, 1
          %s673 = scalar_lea.vmem %s15, %s672
        $region96: #{sentiment_classifier_forward.1} parent=47 // pred_fallthru
          _
      $region48: #{sentiment_classifier_forward.1} parent=5 // pred_fallthru
        _
      %p674 = scmp.le.s32.totalorder 1, %s29
      %p675 = scmp.lt.s32.totalorder %s29, 3
      %p676 = pnand %p674, %p675
      %p677 = pneg %p676
      // Predicated region
      $region97: #{sentiment_classifier_forward.1} parent=5 // pred_check
        _
      $region98: #{sentiment_classifier_forward.1} parent=5 // pred_check_branch
        %679 = sbr.rel (%p676) target = $region100
      $region99: #{sentiment_classifier_forward.1} parent=5 // pred_region
        %s680 = ssub.s32 %s29, 1
        // Predicated region
        $region101: #{sentiment_classifier_forward.1} parent=99 // pred_check
          %p681 = pneg %p446
        $region102: #{sentiment_classifier_forward.1} parent=99 // pred_check_branch
          %683 = sbr.rel (%p681) target = $region104
        $region103: #{sentiment_classifier_forward.1} parent=99 // pred_region
          %684 = dma.done [#allocation4], 256
        $region104: #{sentiment_classifier_forward.1} parent=99 // pred_fallthru
          _
        // Predicated region
        $region105: #{sentiment_classifier_forward.1} parent=99 // pred_check
          %p685 = pneg %p488
        $region106: #{sentiment_classifier_forward.1} parent=99 // pred_check_branch
          %687 = sbr.rel (%p685) target = $region108
        $region107: #{sentiment_classifier_forward.1} parent=99 // pred_region
          %688 = dma.done [#allocation7], 256
        $region108: #{sentiment_classifier_forward.1} parent=99 // pred_fallthru
          _
        %p689 = pneg %p50
        %p690 = pneg %p47
        %p691 = pneg %p71
        %p692 = pneg %p68
        %p693 = pneg %p92
        %p694 = pneg %p89
        %p695 = pneg %p113
        %p696 = pneg %p110
        %p697 = scmp.lt.s32.totalorder %s34, 1
        %s698 = scalar_select %p697, %s34, 1
        %s699 = smul.addr %s698, 12
        %s700 = smul.addr %s699, 4
        %s701 = scalar_lea.vmem %s4, %s700
        %p702 = pneg %p139
        %p703 = pneg %p136
        %p704 = scmp.lt.s32.totalorder %s34, 1
        %s705 = scalar_select %p704, %s34, 1
        %s706 = smul.addr %s705, 3
        %s707 = scalar_lea.vmem %s5, %s706
        %p708 = pneg %p165
        %p709 = pneg %p162
        %p710 = scmp.lt.s32.totalorder %s34, 1
        %s711 = scalar_select %p710, %s34, 1
        %s712 = smul.addr %s711, 4
        %s713 = smul.addr %s712, 4
        %s714 = scalar_lea.vmem %s6, %s713
        %p715 = pneg %p191
        %p716 = pneg %p188
        %p717 = scmp.lt.s32.totalorder %s34, 1
        %s718 = scalar_select %p717, %s34, 1
        %s719 = scalar_lea.vmem %s7, %s718
        %p720 = pneg %p217
        %p721 = pneg %p214
        %p722 = scmp.lt.s32.totalorder %s34, 1
        %s723 = scalar_select %p722, %s34, 1
        %s724 = scalar_lea.vmem %s8, %s723
        %p725 = pneg %p243
        %p726 = pneg %p240
        %p727 = scmp.lt.s32.totalorder %s34, 1
        %s728 = scalar_select %p727, %s34, 1
        %s729 = scalar_lea.vmem %s9, %s728
        %p730 = pneg %p269
        %p731 = pneg %p266
        %p732 = scmp.lt.s32.totalorder %s34, 1
        %s733 = scalar_select %p732, %s34, 1
        %s734 = smul.addr %s733, 4
        %s735 = smul.addr %s734, 4
        %s736 = scalar_lea.vmem %s10, %s735
        %p737 = pneg %p295
        %p738 = pneg %p292
        %p739 = scmp.lt.s32.totalorder %s34, 1
        %s740 = scalar_select %p739, %s34, 1
        %s741 = scalar_lea.vmem %s11, %s740
        %p742 = pneg %p321
        %p743 = pneg %p318
        %p744 = scmp.lt.s32.totalorder %s34, 1
        %s745 = scalar_select %p744, %s34, 1
        %s746 = smul.addr %s745, 8
        %s747 = smul.addr %s746, 4
        %s748 = scalar_lea.vmem %s12, %s747
        %p749 = pneg %p347
        %p750 = pneg %p344
        %p751 = scmp.lt.s32.totalorder %s34, 1
        %s752 = scalar_select %p751, %s34, 1
        %s753 = scalar_lea.vmem %s13, %s752
        %p754 = pneg %p373
        %p755 = pneg %p370
        %p756 = scmp.lt.s32.totalorder %s34, 1
        %s757 = scalar_select %p756, %s34, 1
        %s758 = scalar_lea.vmem %s14, %s757
        %p759 = pneg %p399
        %p760 = pneg %p396
        %p761 = scmp.lt.s32.totalorder %s34, 1
        %s762 = scalar_select %p761, %s34, 1
        %s763 = scalar_lea.vmem %s15, %s762
        %p764 = pneg %p425
        %p765 = pneg %p422
        %p766 = pneg %p446
        %p767 = pneg %p443
        %p768 = pneg %p467
        %p769 = pneg %p464
        %p770 = pneg %p488
        %p771 = pneg %p485
        %p772 = pneg %p509
        %p773 = pneg %p506
        %p774 = pneg %p530
        %p775 = pneg %p527
        %p776 = scmp.lt.s32.totalorder %s34, 1
        %s777 = scalar_select %p776, %s34, 1
        %s778 = smul.addr %s777, 12
        %s779 = smul.addr %s778, 4
        %s780 = scalar_lea.vmem %s4, %s779
        %p781 = scmp.lt.s32.totalorder %s34, 1
        %s782 = scalar_select %p781, %s34, 1
        %s783 = smul.addr %s782, 3
        %s784 = scalar_lea.vmem %s5, %s783
        %p785 = scmp.lt.s32.totalorder %s34, 1
        %s786 = scalar_select %p785, %s34, 1
        %s787 = smul.addr %s786, 4
        %s788 = smul.addr %s787, 4
        %s789 = scalar_lea.vmem %s6, %s788
        %p790 = scmp.lt.s32.totalorder %s34, 1
        %s791 = scalar_select %p790, %s34, 1
        %s792 = scalar_lea.vmem %s7, %s791
        %p793 = scmp.lt.s32.totalorder %s34, 1
        %s794 = scalar_select %p793, %s34, 1
        %s795 = scalar_lea.vmem %s8, %s794
        %p796 = scmp.lt.s32.totalorder %s34, 1
        %s797 = scalar_select %p796, %s34, 1
        %s798 = scalar_lea.vmem %s9, %s797
        %p799 = scmp.lt.s32.totalorder %s34, 1
        %s800 = scalar_select %p799, %s34, 1
        %s801 = smul.addr %s800, 4
        %s802 = smul.addr %s801, 4
        %s803 = scalar_lea.vmem %s10, %s802
        %p804 = scmp.lt.s32.totalorder %s34, 1
        %s805 = scalar_select %p804, %s34, 1
        %s806 = scalar_lea.vmem %s11, %s805
        %p807 = scmp.lt.s32.totalorder %s34, 1
        %s808 = scalar_select %p807, %s34, 1
        %s809 = smul.addr %s808, 8
        %s810 = smul.addr %s809, 4
        %s811 = scalar_lea.vmem %s12, %s810
        %p812 = scmp.lt.s32.totalorder %s34, 1
        %s813 = scalar_select %p812, %s34, 1
        %s814 = scalar_lea.vmem %s13, %s813
        %p815 = scmp.lt.s32.totalorder %s34, 1
        %s816 = scalar_select %p815, %s34, 1
        %s817 = scalar_lea.vmem %s14, %s816
        %p818 = scmp.lt.s32.totalorder %s34, 1
        %s819 = scalar_select %p818, %s34, 1
        %s820 = scalar_lea.vmem %s15, %s819
        %p822 = scmp.eq.s32.totalorder %s34, 0
        // Predicated region
        $region109: #{sentiment_classifier_forward.1} parent=99 // pred_check
          %p823 = pneg %p822
        $region110: #{sentiment_classifier_forward.1} parent=99 // pred_check_branch
          %825 = sbr.rel (%p823) target = $region112
        $region111: #{sentiment_classifier_forward.1} parent=99 // pred_region
          %v826 = vld [vmem:[%s0] sm:$0xff]
          %v827 = vld [vmem:[%s0 + $0x8] sm:$0xff]
          %v828 = vld [vmem:[%s2] sm:$0x1]
          %v829 = vld [vmem:[%s3] sm:$0x1]
          %vm830 = vcmask 261120
          %v831 = vsel %vm830, %v826, 0.0
          %832 = vadd.xlane.f32.xlu0 %v831
          %v833 = vpop.xlane.xlu0 %832
          %v834 = vsel %vm830, %v827, 0.0
          %835 = vadd.xlane.f32.xlu0 %v834
          %v836 = vpop.xlane.xlu0 %835
          %v837 = vrcp.pop 32.0
          %v838 = vmul.f32 %v833, %v837
          %v839 = vmul.f32 %v836, %v837
          %v840 = vsub.f32 %v826, %v838
          %v841 = vsub.f32 %v827, %v839
          %v842 = vmul.f32 %v840, %v840
          %v843 = vmul.f32 %v841, %v841
          %v844 = vsel %vm830, %v842, 0.0
          %845 = vadd.xlane.f32.xlu0 %v844
          %v846 = vpop.xlane.xlu0 %845
          %v847 = vsel %vm830, %v843, 0.0
          %848 = vadd.xlane.f32.xlu0 %v847
          %v849 = vpop.xlane.xlu0 %848
          %v850 = vmul.f32 %v846, %v837
          %v851 = vmul.f32 %v849, %v837
          %v852 = vadd.f32 %v850, 1e-12
          %v853 = vadd.f32 %v851, 1e-12
          %v854 = vrsqrt.pop %v852
          %v855 = vrsqrt.pop %v853
          %v856 = vmul.f32 %v840, %v854
          %v857 = vmul.f32 %v841, %v855
          %v859 = vlaneseq
          %v860 = vshrl.u32 %v859, 7
          %v861 = vsub.s32 0, %v860
          %v862 = vrot.slane %v828, %v861
          %v864 = vmul.f32 %v856, %v862
          %v865 = vmul.f32 %v857, %v862
          %v867 = vlaneseq
          %v868 = vshrl.u32 %v867, 7
          %v869 = vsub.s32 0, %v868
          %v870 = vrot.slane %v829, %v869
          %v872 = vadd.f32 %v864, %v870
          %v873 = vadd.f32 %v865, %v870
          %874 = vst.msk [vmem:[#allocation2] sm:$0xff] %vm830, %v872
          %875 = vst.msk [vmem:[#allocation2 + $0x8] sm:$0xff] %vm830, %v873
        $region112: #{sentiment_classifier_forward.1} parent=99 // pred_fallthru
          _
        %v876 = vld [vmem:[#allocation2] sm:$0xff]
        %v877 = vld [vmem:[#allocation2 + $0x8] sm:$0xff]
        %v878 = vpack.c.bf16 %v877, %v876
        %v879 = vld [vmem:[%s780] sm:$0xf]
        %v880 = vld [vmem:[%s780 + $0x4] sm:$0xf]
        %v881 = vld [vmem:[%s780 + $0x8] sm:$0xf]
        %v882 = vld [vmem:[%s780 + $0xc] sm:$0xf]
        %v883 = vld [vmem:[%s784] sm:$0x1]
        %v885 = vlaneseq
        %v886 = vshrl.u32 %v885, 7
        %v887 = vsub.s32 0, %v886
        %v888 = vrot.slane %v883, %v887
        %v894 = vunpack.c.l.b16 %v879
        %v895 = vunpack.c.l.b16 %v880
        %v896 = vunpack.c.l.b16 %v881
        %v897 = vunpack.c.l.b16 %v882
        %v898 = vpack.c.b16 %v895, %v894
        %v899 = vpack.c.b16 %v897, %v896
        %vm902 = vcmask 261120
        %v904 = vsel %vm902, %v878, 0
        %906 = vmatprep.subr.bf16.mxu0 0
        %907 = vmatpush1.bf16.msra.mxu0 0
        %908 = vmatprep.subr.bf16.mxu0 0
        %909 = vmatpush1.bf16.msra.mxu0 0
        %910 = vmatprep.subr.bf16.mxu0 0
        %911 = vmatpush1.bf16.msra.mxu0 0
        %912 = vmatprep.subr.bf16.mxu0 0
        %913 = vmatpush1.bf16.msra.mxu0 0
        %914 = vmatprep.subr.bf16.mxu0 0
        %915 = vmatpush1.bf16.msra.mxu0 0
        %916 = vmatprep.subr.bf16.mxu0 0
        %917 = vmatpush1.bf16.msra.mxu0 0
        %918 = vmatprep.subr.bf16.mxu0 0
        %919 = vmatpush1.bf16.msra.mxu0 %v899
        %920 = vmatprep.subr.bf16.mxu0 0
        %921 = vmatpush1.bf16.msra.mxu0 %v898
        %922 = vmatprep.subr.bf16.mxu0 0
        %923 = vmatpush2.bf16.msra.mxu0 0
        %924 = vmatprep.subr.bf16.mxu0 0
        %925 = vmatpush2.bf16.msra.mxu0 0
        %926 = vmatprep.subr.bf16.mxu0 0
        %927 = vmatpush2.bf16.msra.mxu0 0
        %928 = vmatprep.subr.bf16.mxu0 0
        %929 = vmatpush2.bf16.msra.mxu0 0
        %930 = vmatprep.subr.bf16.mxu0 0
        %931 = vmatpush2.bf16.msra.mxu0 0
        %932 = vmatprep.subr.bf16.mxu0 0
        %933 = vmatpush2.bf16.msra.mxu0 0
        %934 = vmatprep.subr.bf16.mxu0 0
        %935 = vmatpush2.bf16.msra.mxu0 0
        %936 = vmatprep.subr.bf16.mxu0 0
        %937 = vmatpush2.bf16.msra.mxu0 0
        %938 = vmatprep.mubr.bf16.mxu0 0
        %939 = vmatmul.mubr.bf16.gmra.mxu0 %v904
        %v940 = vpop.f32.mrf.mxu0
        %v941 = vadd.f32 %v888, %v940
        %v942 = vpop.f32.mrf.mxu0
        %v943 = vpop.f32.mrf.mxu0
        %v944 = vadd.f32 %v888, %v943
        %v945 = vpop.f32.mrf.mxu0
        %946 = vdwg.mxu0
        %s947 = scalar_lea.vmem %s780, 16
        %v948 = vld [vmem:[%s947] sm:$0xf]
        %v949 = vld [vmem:[%s947 + $0x4] sm:$0xf]
        %v950 = vld [vmem:[%s947 + $0x8] sm:$0xf]
        %v951 = vld [vmem:[%s947 + $0xc] sm:$0xf]
        %s952 = scalar_lea.vmem %s784, 1
        %v953 = vld [vmem:[%s952] sm:$0x1]
        %v955 = vlaneseq
        %v956 = vshrl.u32 %v955, 7
        %v957 = vsub.s32 0, %v956
        %v958 = vrot.slane %v953, %v957
        %v964 = vunpack.c.l.b16 %v948
        %v965 = vunpack.c.l.b16 %v949
        %v966 = vunpack.c.l.b16 %v950
        %v967 = vunpack.c.l.b16 %v951
        %v968 = vpack.c.b16 %v965, %v964
        %v969 = vpack.c.b16 %v967, %v966
        %972 = vmatprep.subr.bf16.mxu0 0
        %973 = vmatpush1.bf16.msra.mxu0 0
        %974 = vmatprep.subr.bf16.mxu0 0
        %975 = vmatpush1.bf16.msra.mxu0 0
        %976 = vmatprep.subr.bf16.mxu0 0
        %977 = vmatpush1.bf16.msra.mxu0 0
        %978 = vmatprep.subr.bf16.mxu0 0
        %979 = vmatpush1.bf16.msra.mxu0 0
        %980 = vmatprep.subr.bf16.mxu0 0
        %981 = vmatpush1.bf16.msra.mxu0 0
        %982 = vmatprep.subr.bf16.mxu0 0
        %983 = vmatpush1.bf16.msra.mxu0 0
        %984 = vmatprep.subr.bf16.mxu0 0
        %985 = vmatpush1.bf16.msra.mxu0 %v969
        %986 = vmatprep.subr.bf16.mxu0 0
        %987 = vmatpush1.bf16.msra.mxu0 %v968
        %988 = vmatprep.subr.bf16.mxu0 0
        %989 = vmatpush2.bf16.msra.mxu0 0
        %990 = vmatprep.subr.bf16.mxu0 0
        %991 = vmatpush2.bf16.msra.mxu0 0
        %992 = vmatprep.subr.bf16.mxu0 0
        %993 = vmatpush2.bf16.msra.mxu0 0
        %994 = vmatprep.subr.bf16.mxu0 0
        %995 = vmatpush2.bf16.msra.mxu0 0
        %996 = vmatprep.subr.bf16.mxu0 0
        %997 = vmatpush2.bf16.msra.mxu0 0
        %998 = vmatprep.subr.bf16.mxu0 0
        %999 = vmatpush2.bf16.msra.mxu0 0
        %1000 = vmatprep.subr.bf16.mxu0 0
        %1001 = vmatpush2.bf16.msra.mxu0 0
        %1002 = vmatprep.subr.bf16.mxu0 0
        %1003 = vmatpush2.bf16.msra.mxu0 0
        %1004 = vmatprep.mubr.bf16.mxu0 0
        %1005 = vmatmul.mubr.bf16.gmra.mxu0 %v904
        %v1006 = vpop.f32.mrf.mxu0
        %v1007 = vadd.f32 %v958, %v1006
        %v1008 = vpop.f32.mrf.mxu0
        %v1009 = vpop.f32.mrf.mxu0
        %v1010 = vadd.f32 %v958, %v1009
        %v1011 = vpop.f32.mrf.mxu0
        %1012 = vdwg.mxu0
        %s1013 = scalar_lea.vmem %s780, 32
        %v1014 = vld [vmem:[%s1013] sm:$0xf]
        %v1015 = vld [vmem:[%s1013 + $0x4] sm:$0xf]
        %v1016 = vld [vmem:[%s1013 + $0x8] sm:$0xf]
        %v1017 = vld [vmem:[%s1013 + $0xc] sm:$0xf]
        %s1018 = scalar_lea.vmem %s784, 2
        %v1019 = vld [vmem:[%s1018] sm:$0x1]
        %v1021 = vlaneseq
        %v1022 = vshrl.u32 %v1021, 7
        %v1023 = vsub.s32 0, %v1022
        %v1024 = vrot.slane %v1019, %v1023
        %v1030 = vunpack.c.l.b16 %v1014
        %v1031 = vunpack.c.l.b16 %v1015
        %v1032 = vunpack.c.l.b16 %v1016
        %v1033 = vunpack.c.l.b16 %v1017
        %v1034 = vpack.c.b16 %v1031, %v1030
        %v1035 = vpack.c.b16 %v1033, %v1032
        %1038 = vmatprep.subr.bf16.mxu0 0
        %1039 = vmatpush1.bf16.msra.mxu0 0
        %1040 = vmatprep.subr.bf16.mxu0 0
        %1041 = vmatpush1.bf16.msra.mxu0 0
        %1042 = vmatprep.subr.bf16.mxu0 0
        %1043 = vmatpush1.bf16.msra.mxu0 0
        %1044 = vmatprep.subr.bf16.mxu0 0
        %1045 = vmatpush1.bf16.msra.mxu0 0
        %1046 = vmatprep.subr.bf16.mxu0 0
        %1047 = vmatpush1.bf16.msra.mxu0 0
        %1048 = vmatprep.subr.bf16.mxu0 0
        %1049 = vmatpush1.bf16.msra.mxu0 0
        %1050 = vmatprep.subr.bf16.mxu0 0
        %1051 = vmatpush1.bf16.msra.mxu0 %v1035
        %1052 = vmatprep.subr.bf16.mxu0 0
        %1053 = vmatpush1.bf16.msra.mxu0 %v1034
        %1054 = vmatprep.subr.bf16.mxu0 0
        %1055 = vmatpush2.bf16.msra.mxu0 0
        %1056 = vmatprep.subr.bf16.mxu0 0
        %1057 = vmatpush2.bf16.msra.mxu0 0
        %1058 = vmatprep.subr.bf16.mxu0 0
        %1059 = vmatpush2.bf16.msra.mxu0 0
        %1060 = vmatprep.subr.bf16.mxu0 0
        %1061 = vmatpush2.bf16.msra.mxu0 0
        %1062 = vmatprep.subr.bf16.mxu0 0
        %1063 = vmatpush2.bf16.msra.mxu0 0
        %1064 = vmatprep.subr.bf16.mxu0 0
        %1065 = vmatpush2.bf16.msra.mxu0 0
        %1066 = vmatprep.subr.bf16.mxu0 0
        %1067 = vmatpush2.bf16.msra.mxu0 0
        %1068 = vmatprep.subr.bf16.mxu0 0
        %1069 = vmatpush2.bf16.msra.mxu0 0
        %1070 = vmatprep.mubr.bf16.mxu0 0
        %1071 = vmatmul.mubr.bf16.gmra.mxu0 %v904
        %v1072 = vpop.f32.mrf.mxu0
        %v1073 = vadd.f32 %v1024, %v1072
        %v1074 = vpop.f32.mrf.mxu0
        %v1075 = vpop.f32.mrf.mxu0
        %v1076 = vadd.f32 %v1024, %v1075
        %v1077 = vpop.f32.mrf.mxu0
        %1078 = vdwg.mxu0
        %v1079 = vld [vmem:[%s1] sm:$0x3]
        %v1082 = vunpack.c.l.s4 1966171168
        %v1083 = vunpack.c.0.s8 %v1082
        %v1084 = vlaneseq
        %v1085 = vshrl.u32 %v1084, 7
        %v1086 = vsub.s32 %v1083, %v1085
        %v1087 = vrot.slane %v1079, %v1086
        %v1088 = vcombine.high %v1087, %v1087
        %v1090 = vunpack.c.l.s4 1966171168
        %v1091 = vunpack.c.0.s8 %v1090
        %v1092 = vlaneseq
        %v1093 = vshrl.u32 %v1092, 7
        %v1094 = vsub.s32 %v1091, %v1093
        %v1095 = vrot.slane %v1087, %v1094
        %v1097 = vunpack.c.l.s4 1966171168
        %v1098 = vunpack.c.0.s8 %v1097
        %v1099 = vlaneseq
        %v1100 = vshrl.u32 %v1099, 7
        %v1101 = vsub.s32 %v1098, %v1100
        %v1102 = vrot.slane %v1088, %v1101
        %v1103 = vlaneseq
        %v1104 = vshrl.u32 %v1103, 7
        %v1105 = vsub.s32 0, %v1104
        %v1106 = vrot.slane %v1095, %v1105
        %v1107 = vlaneseq
        %v1108 = vshrl.u32 %v1107, 7
        %v1109 = vsub.s32 0, %v1108
        %v1110 = vrot.slane %v1102, %v1109
        %vm1113 = vcmask 64512
        %v1115 = vsel %vm1113, %v941, 0
        %v1118 = vsel %vm1113, %v1007, 0
        %1120 = vmatprep.subr.mxu0 0.0
        %1121 = vmatpush1.xpose.msra.mxu0 0.0
        %1122 = vmatprep.subr.mxu0 0.0
        %1123 = vmatpush1.xpose.msra.mxu0 0.0
        %1124 = vmatprep.subr.mxu0 0.0
        %1125 = vmatpush1.xpose.msra.mxu0 0.0
        %1126 = vmatprep.subr.mxu0 0.0
        %1127 = vmatpush1.xpose.msra.mxu0 0.0
        %1128 = vmatprep.subr.mxu0 0.0
        %1129 = vmatpush1.xpose.msra.mxu0 0.0
        %1130 = vmatprep.subr.mxu0 0.0
        %1131 = vmatpush1.xpose.msra.mxu0 0.0
        %1132 = vmatprep.subr.mxu0 0.0
        %1133 = vmatpush1.xpose.msra.mxu0 0.0
        %1134 = vmatprep.subr.mxu0 0.0
        %1135 = vmatpush1.xpose.msra.mxu0 0.0
        %1136 = vmatprep.subr.mxu0 0.0
        %1137 = vmatpush1.xpose.msra.mxu0 0.0
        %1138 = vmatprep.subr.mxu0 0.0
        %1139 = vmatpush1.xpose.msra.mxu0 0.0
        %1140 = vmatprep.subr.mxu0 0.0
        %1141 = vmatpush1.xpose.msra.mxu0 0.0
        %1142 = vmatprep.subr.mxu0 0.0
        %1143 = vmatpush1.xpose.msra.mxu0 0.0
        %1144 = vmatprep.subr.mxu0 0.0
        %1145 = vmatpush1.xpose.msra.mxu0 0.0
        %1146 = vmatprep.subr.mxu0 0.0
        %1147 = vmatpush1.xpose.msra.mxu0 0.0
        %1148 = vmatprep.subr.mxu0 0.0
        %1149 = vmatpush1.xpose.msra.mxu0 0.0
        %1150 = vmatprep.subr.mxu0 0.0
        %1151 = vmatpush1.xpose.msra.mxu0 %v1118
        %1152 = vmatprep.subr.mxu0 0.0
        %1153 = vmatpush2.xpose.msra.mxu0 0.0
        %1154 = vmatprep.subr.mxu0 0.0
        %1155 = vmatpush2.xpose.msra.mxu0 0.0
        %1156 = vmatprep.subr.mxu0 0.0
        %1157 = vmatpush2.xpose.msra.mxu0 0.0
        %1158 = vmatprep.subr.mxu0 0.0
        %1159 = vmatpush2.xpose.msra.mxu0 0.0
        %1160 = vmatprep.subr.mxu0 0.0
        %1161 = vmatpush2.xpose.msra.mxu0 0.0
        %1162 = vmatprep.subr.mxu0 0.0
        %1163 = vmatpush2.xpose.msra.mxu0 0.0
        %1164 = vmatprep.subr.mxu0 0.0
        %1165 = vmatpush2.xpose.msra.mxu0 0.0
        %1166 = vmatprep.subr.mxu0 0.0
        %1167 = vmatpush2.xpose.msra.mxu0 0.0
        %1168 = vmatprep.subr.mxu0 0.0
        %1169 = vmatpush2.xpose.msra.mxu0 0.0
        %1170 = vmatprep.subr.mxu0 0.0
        %1171 = vmatpush2.xpose.msra.mxu0 0.0
        %1172 = vmatprep.subr.mxu0 0.0
        %1173 = vmatpush2.xpose.msra.mxu0 0.0
        %1174 = vmatprep.subr.mxu0 0.0
        %1175 = vmatpush2.xpose.msra.mxu0 0.0
        %1176 = vmatprep.subr.mxu0 0.0
        %1177 = vmatpush2.xpose.msra.mxu0 0.0
        %1178 = vmatprep.subr.mxu0 0.0
        %1179 = vmatpush2.xpose.msra.mxu0 0.0
        %1180 = vmatprep.subr.mxu0 0.0
        %1181 = vmatpush2.xpose.msra.mxu0 0.0
        %1182 = vmatprep.subr.mxu0 0.0
        %1183 = vmatpush2.xpose.msra.mxu0 0.0
        %1184 = vmatprep.mubr.f32.mxu0 0.0
        %1185 = vmatmul.mubr.f32.gmra.mxu0 %v1115
        %v1186 = vpop.f32.mrf.mxu0
        %v1187 = vadd.f32 %v1106, %v1186
        %v1188 = vpop.f32.mrf.mxu0
        %1189 = vdwg.mxu0
        %v1191 = vsel %vm1113, %v944, 0
        %v1194 = vsel %vm1113, %v1010, 0
        %1196 = vmatprep.subr.mxu0 0.0
        %1197 = vmatpush1.xpose.msra.mxu0 0.0
        %1198 = vmatprep.subr.mxu0 0.0
        %1199 = vmatpush1.xpose.msra.mxu0 0.0
        %1200 = vmatprep.subr.mxu0 0.0
        %1201 = vmatpush1.xpose.msra.mxu0 0.0
        %1202 = vmatprep.subr.mxu0 0.0
        %1203 = vmatpush1.xpose.msra.mxu0 0.0
        %1204 = vmatprep.subr.mxu0 0.0
        %1205 = vmatpush1.xpose.msra.mxu0 0.0
        %1206 = vmatprep.subr.mxu0 0.0
        %1207 = vmatpush1.xpose.msra.mxu0 0.0
        %1208 = vmatprep.subr.mxu0 0.0
        %1209 = vmatpush1.xpose.msra.mxu0 0.0
        %1210 = vmatprep.subr.mxu0 0.0
        %1211 = vmatpush1.xpose.msra.mxu0 0.0
        %1212 = vmatprep.subr.mxu0 0.0
        %1213 = vmatpush1.xpose.msra.mxu0 0.0
        %1214 = vmatprep.subr.mxu0 0.0
        %1215 = vmatpush1.xpose.msra.mxu0 0.0
        %1216 = vmatprep.subr.mxu0 0.0
        %1217 = vmatpush1.xpose.msra.mxu0 0.0
        %1218 = vmatprep.subr.mxu0 0.0
        %1219 = vmatpush1.xpose.msra.mxu0 0.0
        %1220 = vmatprep.subr.mxu0 0.0
        %1221 = vmatpush1.xpose.msra.mxu0 0.0
        %1222 = vmatprep.subr.mxu0 0.0
        %1223 = vmatpush1.xpose.msra.mxu0 0.0
        %1224 = vmatprep.subr.mxu0 0.0
        %1225 = vmatpush1.xpose.msra.mxu0 0.0
        %1226 = vmatprep.subr.mxu0 0.0
        %1227 = vmatpush1.xpose.msra.mxu0 %v1194
        %1228 = vmatprep.subr.mxu0 0.0
        %1229 = vmatpush2.xpose.msra.mxu0 0.0
        %1230 = vmatprep.subr.mxu0 0.0
        %1231 = vmatpush2.xpose.msra.mxu0 0.0
        %1232 = vmatprep.subr.mxu0 0.0
        %1233 = vmatpush2.xpose.msra.mxu0 0.0
        %1234 = vmatprep.subr.mxu0 0.0
        %1235 = vmatpush2.xpose.msra.mxu0 0.0
        %1236 = vmatprep.subr.mxu0 0.0
        %1237 = vmatpush2.xpose.msra.mxu0 0.0
        %1238 = vmatprep.subr.mxu0 0.0
        %1239 = vmatpush2.xpose.msra.mxu0 0.0
        %1240 = vmatprep.subr.mxu0 0.0
        %1241 = vmatpush2.xpose.msra.mxu0 0.0
        %1242 = vmatprep.subr.mxu0 0.0
        %1243 = vmatpush2.xpose.msra.mxu0 0.0
        %1244 = vmatprep.subr.mxu0 0.0
        %1245 = vmatpush2.xpose.msra.mxu0 0.0
        %1246 = vmatprep.subr.mxu0 0.0
        %1247 = vmatpush2.xpose.msra.mxu0 0.0
        %1248 = vmatprep.subr.mxu0 0.0
        %1249 = vmatpush2.xpose.msra.mxu0 0.0
        %1250 = vmatprep.subr.mxu0 0.0
        %1251 = vmatpush2.xpose.msra.mxu0 0.0
        %1252 = vmatprep.subr.mxu0 0.0
        %1253 = vmatpush2.xpose.msra.mxu0 0.0
        %1254 = vmatprep.subr.mxu0 0.0
        %1255 = vmatpush2.xpose.msra.mxu0 0.0
        %1256 = vmatprep.subr.mxu0 0.0
        %1257 = vmatpush2.xpose.msra.mxu0 0.0
        %1258 = vmatprep.subr.mxu0 0.0
        %1259 = vmatpush2.xpose.msra.mxu0 0.0
        %1260 = vmatprep.mubr.f32.mxu0 0.0
        %1261 = vmatmul.mubr.f32.gmra.mxu0 %v1191
        %v1262 = vpop.f32.mrf.mxu0
        %v1263 = vadd.f32 %v1110, %v1262
        %v1264 = vpop.f32.mrf.mxu0
        %1265 = vdwg.mxu0
        %v1266 = vsel %vm1113, %v1187, -inf
        %1267 = vmax.xlane.f32.xlu0 %v1266
        %v1268 = vpop.xlane.xlu0 %1267
        %v1269 = vsel %vm1113, %v1263, -inf
        %1270 = vmax.xlane.f32.xlu0 %v1269
        %v1271 = vpop.xlane.xlu0 %1270
        %v1272 = vsub.f32 %v1187, %v1268
        %v1273 = vsub.f32 %v1263, %v1271
        %v1274 = vmul.f32 %v1272, 1.442695
        %v1275 = vpow.pop %v1274
        %v1276 = vmul.f32 %v1273, 1.442695
        %v1277 = vpow.pop %v1276
        %v1278 = vsel %vm1113, %v1275, 0.0
        %1279 = vadd.xlane.f32.xlu0 %v1278
        %v1280 = vpop.xlane.xlu0 %1279
        %v1281 = vsel %vm1113, %v1277, 0.0
        %1282 = vadd.xlane.f32.xlu0 %v1281
        %v1283 = vpop.xlane.xlu0 %1282
        %v1284 = vrcp.pop %v1280
        %v1285 = vrcp.pop %v1283
        %v1286 = vmul.f32 %v1275, %v1284
        %v1287 = vmul.f32 %v1277, %v1285
        %v1289 = vsel %vm1113, %v1286, 0
        %1291 = vmatprep.subr.mxu0 0.0
        %1292 = vmatpush1.msra.mxu0 0.0
        %1293 = vmatprep.subr.mxu0 0.0
        %1294 = vmatpush1.msra.mxu0 0.0
        %1295 = vmatprep.subr.mxu0 0.0
        %1296 = vmatpush1.msra.mxu0 0.0
        %1297 = vmatprep.subr.mxu0 0.0
        %1298 = vmatpush1.msra.mxu0 0.0
        %1299 = vmatprep.subr.mxu0 0.0
        %1300 = vmatpush1.msra.mxu0 0.0
        %1301 = vmatprep.subr.mxu0 0.0
        %1302 = vmatpush1.msra.mxu0 0.0
        %1303 = vmatprep.subr.mxu0 0.0
        %1304 = vmatpush1.msra.mxu0 0.0
        %1305 = vmatprep.subr.mxu0 0.0
        %1306 = vmatpush1.msra.mxu0 0.0
        %1307 = vmatprep.subr.mxu0 0.0
        %1308 = vmatpush1.msra.mxu0 0.0
        %1309 = vmatprep.subr.mxu0 0.0
        %1310 = vmatpush1.msra.mxu0 0.0
        %1311 = vmatprep.subr.mxu0 0.0
        %1312 = vmatpush1.msra.mxu0 0.0
        %1313 = vmatprep.subr.mxu0 0.0
        %1314 = vmatpush1.msra.mxu0 0.0
        %1315 = vmatprep.subr.mxu0 0.0
        %1316 = vmatpush1.msra.mxu0 0.0
        %1317 = vmatprep.subr.mxu0 0.0
        %1318 = vmatpush1.msra.mxu0 0.0
        %1319 = vmatprep.subr.mxu0 0.0
        %1320 = vmatpush1.msra.mxu0 0.0
        %1321 = vmatprep.subr.mxu0 0.0
        %1322 = vmatpush1.msra.mxu0 %v1073
        %1323 = vmatprep.subr.mxu0 0.0
        %1324 = vmatpush2.msra.mxu0 0.0
        %1325 = vmatprep.subr.mxu0 0.0
        %1326 = vmatpush2.msra.mxu0 0.0
        %1327 = vmatprep.subr.mxu0 0.0
        %1328 = vmatpush2.msra.mxu0 0.0
        %1329 = vmatprep.subr.mxu0 0.0
        %1330 = vmatpush2.msra.mxu0 0.0
        %1331 = vmatprep.subr.mxu0 0.0
        %1332 = vmatpush2.msra.mxu0 0.0
        %1333 = vmatprep.subr.mxu0 0.0
        %1334 = vmatpush2.msra.mxu0 0.0
        %1335 = vmatprep.subr.mxu0 0.0
        %1336 = vmatpush2.msra.mxu0 0.0
        %1337 = vmatprep.subr.mxu0 0.0
        %1338 = vmatpush2.msra.mxu0 0.0
        %1339 = vmatprep.subr.mxu0 0.0
        %1340 = vmatpush2.msra.mxu0 0.0
        %1341 = vmatprep.subr.mxu0 0.0
        %1342 = vmatpush2.msra.mxu0 0.0
        %1343 = vmatprep.subr.mxu0 0.0
        %1344 = vmatpush2.msra.mxu0 0.0
        %1345 = vmatprep.subr.mxu0 0.0
        %1346 = vmatpush2.msra.mxu0 0.0
        %1347 = vmatprep.subr.mxu0 0.0
        %1348 = vmatpush2.msra.mxu0 0.0
        %1349 = vmatprep.subr.mxu0 0.0
        %1350 = vmatpush2.msra.mxu0 0.0
        %1351 = vmatprep.subr.mxu0 0.0
        %1352 = vmatpush2.msra.mxu0 0.0
        %1353 = vmatprep.subr.mxu0 0.0
        %1354 = vmatpush2.msra.mxu0 0.0
        %1355 = vmatprep.mubr.f32.mxu0 0.0
        %1356 = vmatmul.mubr.f32.gmra.mxu0 %v1289
        %v1357 = vpop.f32.mrf.mxu0
        %v1358 = vadd.f32 0.0, %v1357
        %v1359 = vpop.f32.mrf.mxu0
        %1360 = vdwg.mxu0
        %v1362 = vsel %vm1113, %v1287, 0
        %1364 = vmatprep.subr.mxu0 0.0
        %1365 = vmatpush1.msra.mxu0 0.0
        %1366 = vmatprep.subr.mxu0 0.0
        %1367 = vmatpush1.msra.mxu0 0.0
        %1368 = vmatprep.subr.mxu0 0.0
        %1369 = vmatpush1.msra.mxu0 0.0
        %1370 = vmatprep.subr.mxu0 0.0
        %1371 = vmatpush1.msra.mxu0 0.0
        %1372 = vmatprep.subr.mxu0 0.0
        %1373 = vmatpush1.msra.mxu0 0.0
        %1374 = vmatprep.subr.mxu0 0.0
        %1375 = vmatpush1.msra.mxu0 0.0
        %1376 = vmatprep.subr.mxu0 0.0
        %1377 = vmatpush1.msra.mxu0 0.0
        %1378 = vmatprep.subr.mxu0 0.0
        %1379 = vmatpush1.msra.mxu0 0.0
        %1380 = vmatprep.subr.mxu0 0.0
        %1381 = vmatpush1.msra.mxu0 0.0
        %1382 = vmatprep.subr.mxu0 0.0
        %1383 = vmatpush1.msra.mxu0 0.0
        %1384 = vmatprep.subr.mxu0 0.0
        %1385 = vmatpush1.msra.mxu0 0.0
        %1386 = vmatprep.subr.mxu0 0.0
        %1387 = vmatpush1.msra.mxu0 0.0
        %1388 = vmatprep.subr.mxu0 0.0
        %1389 = vmatpush1.msra.mxu0 0.0
        %1390 = vmatprep.subr.mxu0 0.0
        %1391 = vmatpush1.msra.mxu0 0.0
        %1392 = vmatprep.subr.mxu0 0.0
        %1393 = vmatpush1.msra.mxu0 0.0
        %1394 = vmatprep.subr.mxu0 0.0
        %1395 = vmatpush1.msra.mxu0 %v1076
        %1396 = vmatprep.subr.mxu0 0.0
        %1397 = vmatpush2.msra.mxu0 0.0
        %1398 = vmatprep.subr.mxu0 0.0
        %1399 = vmatpush2.msra.mxu0 0.0
        %1400 = vmatprep.subr.mxu0 0.0
        %1401 = vmatpush2.msra.mxu0 0.0
        %1402 = vmatprep.subr.mxu0 0.0
        %1403 = vmatpush2.msra.mxu0 0.0
        %1404 = vmatprep.subr.mxu0 0.0
        %1405 = vmatpush2.msra.mxu0 0.0
        %1406 = vmatprep.subr.mxu0 0.0
        %1407 = vmatpush2.msra.mxu0 0.0
        %1408 = vmatprep.subr.mxu0 0.0
        %1409 = vmatpush2.msra.mxu0 0.0
        %1410 = vmatprep.subr.mxu0 0.0
        %1411 = vmatpush2.msra.mxu0 0.0
        %1412 = vmatprep.subr.mxu0 0.0
        %1413 = vmatpush2.msra.mxu0 0.0
        %1414 = vmatprep.subr.mxu0 0.0
        %1415 = vmatpush2.msra.mxu0 0.0
        %1416 = vmatprep.subr.mxu0 0.0
        %1417 = vmatpush2.msra.mxu0 0.0
        %1418 = vmatprep.subr.mxu0 0.0
        %1419 = vmatpush2.msra.mxu0 0.0
        %1420 = vmatprep.subr.mxu0 0.0
        %1421 = vmatpush2.msra.mxu0 0.0
        %1422 = vmatprep.subr.mxu0 0.0
        %1423 = vmatpush2.msra.mxu0 0.0
        %1424 = vmatprep.subr.mxu0 0.0
        %1425 = vmatpush2.msra.mxu0 0.0
        %1426 = vmatprep.subr.mxu0 0.0
        %1427 = vmatpush2.msra.mxu0 0.0
        %1428 = vmatprep.mubr.f32.mxu0 0.0
        %1429 = vmatmul.mubr.f32.gmra.mxu0 %v1362
        %v1430 = vpop.f32.mrf.mxu0
        %v1431 = vadd.f32 0.0, %v1430
        %v1432 = vpop.f32.mrf.mxu0
        %1433 = vdwg.mxu0
        %1434 = vrot.lane.b32.xlu0 %v941, 120
        %v1435 = vpop.permute.xlu0 %1434
        %1436 = vrot.lane.b32.xlu0 %v1007, 120
        %v1437 = vpop.permute.xlu0 %1436
        %v1438 = vsel %vm1113, %v1435, 0
        %v1440 = vsel %vm1113, %v1437, 0
        %1442 = vmatprep.subr.mxu0 0.0
        %1443 = vmatpush1.xpose.msra.mxu0 0.0
        %1444 = vmatprep.subr.mxu0 0.0
        %1445 = vmatpush1.xpose.msra.mxu0 0.0
        %1446 = vmatprep.subr.mxu0 0.0
        %1447 = vmatpush1.xpose.msra.mxu0 0.0
        %1448 = vmatprep.subr.mxu0 0.0
        %1449 = vmatpush1.xpose.msra.mxu0 0.0
        %1450 = vmatprep.subr.mxu0 0.0
        %1451 = vmatpush1.xpose.msra.mxu0 0.0
        %1452 = vmatprep.subr.mxu0 0.0
        %1453 = vmatpush1.xpose.msra.mxu0 0.0
        %1454 = vmatprep.subr.mxu0 0.0
        %1455 = vmatpush1.xpose.msra.mxu0 0.0
        %1456 = vmatprep.subr.mxu0 0.0
        %1457 = vmatpush1.xpose.msra.mxu0 0.0
        %1458 = vmatprep.subr.mxu0 0.0
        %1459 = vmatpush1.xpose.msra.mxu0 0.0
        %1460 = vmatprep.subr.mxu0 0.0
        %1461 = vmatpush1.xpose.msra.mxu0 0.0
        %1462 = vmatprep.subr.mxu0 0.0
        %1463 = vmatpush1.xpose.msra.mxu0 0.0
        %1464 = vmatprep.subr.mxu0 0.0
        %1465 = vmatpush1.xpose.msra.mxu0 0.0
        %1466 = vmatprep.subr.mxu0 0.0
        %1467 = vmatpush1.xpose.msra.mxu0 0.0
        %1468 = vmatprep.subr.mxu0 0.0
        %1469 = vmatpush1.xpose.msra.mxu0 0.0
        %1470 = vmatprep.subr.mxu0 0.0
        %1471 = vmatpush1.xpose.msra.mxu0 0.0
        %1472 = vmatprep.subr.mxu0 0.0
        %1473 = vmatpush1.xpose.msra.mxu0 %v1440
        %1474 = vmatprep.subr.mxu0 0.0
        %1475 = vmatpush2.xpose.msra.mxu0 0.0
        %1476 = vmatprep.subr.mxu0 0.0
        %1477 = vmatpush2.xpose.msra.mxu0 0.0
        %1478 = vmatprep.subr.mxu0 0.0
        %1479 = vmatpush2.xpose.msra.mxu0 0.0
        %1480 = vmatprep.subr.mxu0 0.0
        %1481 = vmatpush2.xpose.msra.mxu0 0.0
        %1482 = vmatprep.subr.mxu0 0.0
        %1483 = vmatpush2.xpose.msra.mxu0 0.0
        %1484 = vmatprep.subr.mxu0 0.0
        %1485 = vmatpush2.xpose.msra.mxu0 0.0
        %1486 = vmatprep.subr.mxu0 0.0
        %1487 = vmatpush2.xpose.msra.mxu0 0.0
        %1488 = vmatprep.subr.mxu0 0.0
        %1489 = vmatpush2.xpose.msra.mxu0 0.0
        %1490 = vmatprep.subr.mxu0 0.0
        %1491 = vmatpush2.xpose.msra.mxu0 0.0
        %1492 = vmatprep.subr.mxu0 0.0
        %1493 = vmatpush2.xpose.msra.mxu0 0.0
        %1494 = vmatprep.subr.mxu0 0.0
        %1495 = vmatpush2.xpose.msra.mxu0 0.0
        %1496 = vmatprep.subr.mxu0 0.0
        %1497 = vmatpush2.xpose.msra.mxu0 0.0
        %1498 = vmatprep.subr.mxu0 0.0
        %1499 = vmatpush2.xpose.msra.mxu0 0.0
        %1500 = vmatprep.subr.mxu0 0.0
        %1501 = vmatpush2.xpose.msra.mxu0 0.0
        %1502 = vmatprep.subr.mxu0 0.0
        %1503 = vmatpush2.xpose.msra.mxu0 0.0
        %1504 = vmatprep.subr.mxu0 0.0
        %1505 = vmatpush2.xpose.msra.mxu0 0.0
        %1506 = vmatprep.mubr.f32.mxu0 0.0
        %1507 = vmatmul.mubr.f32.gmra.mxu0 %v1438
        %v1508 = vpop.f32.mrf.mxu0
        %v1509 = vadd.f32 %v1106, %v1508
        %v1510 = vpop.f32.mrf.mxu0
        %1511 = vdwg.mxu0
        %1512 = vrot.lane.b32.xlu0 %v944, 120
        %v1513 = vpop.permute.xlu0 %1512
        %1514 = vrot.lane.b32.xlu0 %v1010, 120
        %v1515 = vpop.permute.xlu0 %1514
        %v1516 = vsel %vm1113, %v1513, 0
        %v1518 = vsel %vm1113, %v1515, 0
        %1520 = vmatprep.subr.mxu0 0.0
        %1521 = vmatpush1.xpose.msra.mxu0 0.0
        %1522 = vmatprep.subr.mxu0 0.0
        %1523 = vmatpush1.xpose.msra.mxu0 0.0
        %1524 = vmatprep.subr.mxu0 0.0
        %1525 = vmatpush1.xpose.msra.mxu0 0.0
        %1526 = vmatprep.subr.mxu0 0.0
        %1527 = vmatpush1.xpose.msra.mxu0 0.0
        %1528 = vmatprep.subr.mxu0 0.0
        %1529 = vmatpush1.xpose.msra.mxu0 0.0
        %1530 = vmatprep.subr.mxu0 0.0
        %1531 = vmatpush1.xpose.msra.mxu0 0.0
        %1532 = vmatprep.subr.mxu0 0.0
        %1533 = vmatpush1.xpose.msra.mxu0 0.0
        %1534 = vmatprep.subr.mxu0 0.0
        %1535 = vmatpush1.xpose.msra.mxu0 0.0
        %1536 = vmatprep.subr.mxu0 0.0
        %1537 = vmatpush1.xpose.msra.mxu0 0.0
        %1538 = vmatprep.subr.mxu0 0.0
        %1539 = vmatpush1.xpose.msra.mxu0 0.0
        %1540 = vmatprep.subr.mxu0 0.0
        %1541 = vmatpush1.xpose.msra.mxu0 0.0
        %1542 = vmatprep.subr.mxu0 0.0
        %1543 = vmatpush1.xpose.msra.mxu0 0.0
        %1544 = vmatprep.subr.mxu0 0.0
        %1545 = vmatpush1.xpose.msra.mxu0 0.0
        %1546 = vmatprep.subr.mxu0 0.0
        %1547 = vmatpush1.xpose.msra.mxu0 0.0
        %1548 = vmatprep.subr.mxu0 0.0
        %1549 = vmatpush1.xpose.msra.mxu0 0.0
        %1550 = vmatprep.subr.mxu0 0.0
        %1551 = vmatpush1.xpose.msra.mxu0 %v1518
        %1552 = vmatprep.subr.mxu0 0.0
        %1553 = vmatpush2.xpose.msra.mxu0 0.0
        %1554 = vmatprep.subr.mxu0 0.0
        %1555 = vmatpush2.xpose.msra.mxu0 0.0
        %1556 = vmatprep.subr.mxu0 0.0
        %1557 = vmatpush2.xpose.msra.mxu0 0.0
        %1558 = vmatprep.subr.mxu0 0.0
        %1559 = vmatpush2.xpose.msra.mxu0 0.0
        %1560 = vmatprep.subr.mxu0 0.0
        %1561 = vmatpush2.xpose.msra.mxu0 0.0
        %1562 = vmatprep.subr.mxu0 0.0
        %1563 = vmatpush2.xpose.msra.mxu0 0.0
        %1564 = vmatprep.subr.mxu0 0.0
        %1565 = vmatpush2.xpose.msra.mxu0 0.0
        %1566 = vmatprep.subr.mxu0 0.0
        %1567 = vmatpush2.xpose.msra.mxu0 0.0
        %1568 = vmatprep.subr.mxu0 0.0
        %1569 = vmatpush2.xpose.msra.mxu0 0.0
        %1570 = vmatprep.subr.mxu0 0.0
        %1571 = vmatpush2.xpose.msra.mxu0 0.0
        %1572 = vmatprep.subr.mxu0 0.0
        %1573 = vmatpush2.xpose.msra.mxu0 0.0
        %1574 = vmatprep.subr.mxu0 0.0
        %1575 = vmatpush2.xpose.msra.mxu0 0.0
        %1576 = vmatprep.subr.mxu0 0.0
        %1577 = vmatpush2.xpose.msra.mxu0 0.0
        %1578 = vmatprep.subr.mxu0 0.0
        %1579 = vmatpush2.xpose.msra.mxu0 0.0
        %1580 = vmatprep.subr.mxu0 0.0
        %1581 = vmatpush2.xpose.msra.mxu0 0.0
        %1582 = vmatprep.subr.mxu0 0.0
        %1583 = vmatpush2.xpose.msra.mxu0 0.0
        %1584 = vmatprep.mubr.f32.mxu0 0.0
        %1585 = vmatmul.mubr.f32.gmra.mxu0 %v1516
        %v1586 = vpop.f32.mrf.mxu0
        %v1587 = vadd.f32 %v1110, %v1586
        %v1588 = vpop.f32.mrf.mxu0
        %1589 = vdwg.mxu0
        %v1590 = vsel %vm1113, %v1509, -inf
        %1591 = vmax.xlane.f32.xlu0 %v1590
        %v1592 = vpop.xlane.xlu0 %1591
        %v1593 = vsel %vm1113, %v1587, -inf
        %1594 = vmax.xlane.f32.xlu0 %v1593
        %v1595 = vpop.xlane.xlu0 %1594
        %v1596 = vsub.f32 %v1509, %v1592
        %v1597 = vsub.f32 %v1587, %v1595
        %v1598 = vmul.f32 %v1596, 1.442695
        %v1599 = vpow.pop %v1598
        %v1600 = vmul.f32 %v1597, 1.442695
        %v1601 = vpow.pop %v1600
        %v1602 = vsel %vm1113, %v1599, 0.0
        %1603 = vadd.xlane.f32.xlu0 %v1602
        %v1604 = vpop.xlane.xlu0 %1603
        %v1605 = vsel %vm1113, %v1601, 0.0
        %1606 = vadd.xlane.f32.xlu0 %v1605
        %v1607 = vpop.xlane.xlu0 %1606
        %v1608 = vrcp.pop %v1604
        %v1609 = vrcp.pop %v1607
        %v1610 = vmul.f32 %v1599, %v1608
        %v1611 = vmul.f32 %v1601, %v1609
        %1613 = vrot.lane.b32.xlu0 %v1073, 120
        %v1614 = vpop.permute.xlu0 %1613
        %v1617 = vsel %vm1113, %v1610, 0
        %1619 = vmatprep.subr.mxu0 0.0
        %1620 = vmatpush1.msra.mxu0 0.0
        %1621 = vmatprep.subr.mxu0 0.0
        %1622 = vmatpush1.msra.mxu0 0.0
        %1623 = vmatprep.subr.mxu0 0.0
        %1624 = vmatpush1.msra.mxu0 0.0
        %1625 = vmatprep.subr.mxu0 0.0
        %1626 = vmatpush1.msra.mxu0 0.0
        %1627 = vmatprep.subr.mxu0 0.0
        %1628 = vmatpush1.msra.mxu0 0.0
        %1629 = vmatprep.subr.mxu0 0.0
        %1630 = vmatpush1.msra.mxu0 0.0
        %1631 = vmatprep.subr.mxu0 0.0
        %1632 = vmatpush1.msra.mxu0 0.0
        %1633 = vmatprep.subr.mxu0 0.0
        %1634 = vmatpush1.msra.mxu0 0.0
        %1635 = vmatprep.subr.mxu0 0.0
        %1636 = vmatpush1.msra.mxu0 0.0
        %1637 = vmatprep.subr.mxu0 0.0
        %1638 = vmatpush1.msra.mxu0 0.0
        %1639 = vmatprep.subr.mxu0 0.0
        %1640 = vmatpush1.msra.mxu0 0.0
        %1641 = vmatprep.subr.mxu0 0.0
        %1642 = vmatpush1.msra.mxu0 0.0
        %1643 = vmatprep.subr.mxu0 0.0
        %1644 = vmatpush1.msra.mxu0 0.0
        %1645 = vmatprep.subr.mxu0 0.0
        %1646 = vmatpush1.msra.mxu0 0.0
        %1647 = vmatprep.subr.mxu0 0.0
        %1648 = vmatpush1.msra.mxu0 0.0
        %1649 = vmatprep.subr.mxu0 0.0
        %1650 = vmatpush1.msra.mxu0 %v1614
        %1651 = vmatprep.subr.mxu0 0.0
        %1652 = vmatpush2.msra.mxu0 0.0
        %1653 = vmatprep.subr.mxu0 0.0
        %1654 = vmatpush2.msra.mxu0 0.0
        %1655 = vmatprep.subr.mxu0 0.0
        %1656 = vmatpush2.msra.mxu0 0.0
        %1657 = vmatprep.subr.mxu0 0.0
        %1658 = vmatpush2.msra.mxu0 0.0
        %1659 = vmatprep.subr.mxu0 0.0
        %1660 = vmatpush2.msra.mxu0 0.0
        %1661 = vmatprep.subr.mxu0 0.0
        %1662 = vmatpush2.msra.mxu0 0.0
        %1663 = vmatprep.subr.mxu0 0.0
        %1664 = vmatpush2.msra.mxu0 0.0
        %1665 = vmatprep.subr.mxu0 0.0
        %1666 = vmatpush2.msra.mxu0 0.0
        %1667 = vmatprep.subr.mxu0 0.0
        %1668 = vmatpush2.msra.mxu0 0.0
        %1669 = vmatprep.subr.mxu0 0.0
        %1670 = vmatpush2.msra.mxu0 0.0
        %1671 = vmatprep.subr.mxu0 0.0
        %1672 = vmatpush2.msra.mxu0 0.0
        %1673 = vmatprep.subr.mxu0 0.0
        %1674 = vmatpush2.msra.mxu0 0.0
        %1675 = vmatprep.subr.mxu0 0.0
        %1676 = vmatpush2.msra.mxu0 0.0
        %1677 = vmatprep.subr.mxu0 0.0
        %1678 = vmatpush2.msra.mxu0 0.0
        %1679 = vmatprep.subr.mxu0 0.0
        %1680 = vmatpush2.msra.mxu0 0.0
        %1681 = vmatprep.subr.mxu0 0.0
        %1682 = vmatpush2.msra.mxu0 0.0
        %1683 = vmatprep.mubr.f32.mxu0 0.0
        %1684 = vmatmul.mubr.f32.gmra.mxu0 %v1617
        %v1685 = vpop.f32.mrf.mxu0
        %v1686 = vadd.f32 0.0, %v1685
        %v1687 = vpop.f32.mrf.mxu0
        %1688 = vdwg.mxu0
        %1690 = vrot.lane.b32.xlu0 %v1076, 120
        %v1691 = vpop.permute.xlu0 %1690
        %v1694 = vsel %vm1113, %v1611, 0
        %1696 = vmatprep.subr.mxu0 0.0
        %1697 = vmatpush1.msra.mxu0 0.0
        %1698 = vmatprep.subr.mxu0 0.0
        %1699 = vmatpush1.msra.mxu0 0.0
        %1700 = vmatprep.subr.mxu0 0.0
        %1701 = vmatpush1.msra.mxu0 0.0
        %1702 = vmatprep.subr.mxu0 0.0
        %1703 = vmatpush1.msra.mxu0 0.0
        %1704 = vmatprep.subr.mxu0 0.0
        %1705 = vmatpush1.msra.mxu0 0.0
        %1706 = vmatprep.subr.mxu0 0.0
        %1707 = vmatpush1.msra.mxu0 0.0
        %1708 = vmatprep.subr.mxu0 0.0
        %1709 = vmatpush1.msra.mxu0 0.0
        %1710 = vmatprep.subr.mxu0 0.0
        %1711 = vmatpush1.msra.mxu0 0.0
        %1712 = vmatprep.subr.mxu0 0.0
        %1713 = vmatpush1.msra.mxu0 0.0
        %1714 = vmatprep.subr.mxu0 0.0
        %1715 = vmatpush1.msra.mxu0 0.0
        %1716 = vmatprep.subr.mxu0 0.0
        %1717 = vmatpush1.msra.mxu0 0.0
        %1718 = vmatprep.subr.mxu0 0.0
        %1719 = vmatpush1.msra.mxu0 0.0
        %1720 = vmatprep.subr.mxu0 0.0
        %1721 = vmatpush1.msra.mxu0 0.0
        %1722 = vmatprep.subr.mxu0 0.0
        %1723 = vmatpush1.msra.mxu0 0.0
        %1724 = vmatprep.subr.mxu0 0.0
        %1725 = vmatpush1.msra.mxu0 0.0
        %1726 = vmatprep.subr.mxu0 0.0
        %1727 = vmatpush1.msra.mxu0 %v1691
        %1728 = vmatprep.subr.mxu0 0.0
        %1729 = vmatpush2.msra.mxu0 0.0
        %1730 = vmatprep.subr.mxu0 0.0
        %1731 = vmatpush2.msra.mxu0 0.0
        %1732 = vmatprep.subr.mxu0 0.0
        %1733 = vmatpush2.msra.mxu0 0.0
        %1734 = vmatprep.subr.mxu0 0.0
        %1735 = vmatpush2.msra.mxu0 0.0
        %1736 = vmatprep.subr.mxu0 0.0
        %1737 = vmatpush2.msra.mxu0 0.0
        %1738 = vmatprep.subr.mxu0 0.0
        %1739 = vmatpush2.msra.mxu0 0.0
        %1740 = vmatprep.subr.mxu0 0.0
        %1741 = vmatpush2.msra.mxu0 0.0
        %1742 = vmatprep.subr.mxu0 0.0
        %1743 = vmatpush2.msra.mxu0 0.0
        %1744 = vmatprep.subr.mxu0 0.0
        %1745 = vmatpush2.msra.mxu0 0.0
        %1746 = vmatprep.subr.mxu0 0.0
        %1747 = vmatpush2.msra.mxu0 0.0
        %1748 = vmatprep.subr.mxu0 0.0
        %1749 = vmatpush2.msra.mxu0 0.0
        %1750 = vmatprep.subr.mxu0 0.0
        %1751 = vmatpush2.msra.mxu0 0.0
        %1752 = vmatprep.subr.mxu0 0.0
        %1753 = vmatpush2.msra.mxu0 0.0
        %1754 = vmatprep.subr.mxu0 0.0
        %1755 = vmatpush2.msra.mxu0 0.0
        %1756 = vmatprep.subr.mxu0 0.0
        %1757 = vmatpush2.msra.mxu0 0.0
        %1758 = vmatprep.subr.mxu0 0.0
        %1759 = vmatpush2.msra.mxu0 0.0
        %1760 = vmatprep.mubr.f32.mxu0 0.0
        %1761 = vmatmul.mubr.f32.gmra.mxu0 %v1694
        %v1762 = vpop.f32.mrf.mxu0
        %v1763 = vadd.f32 0.0, %v1762
        %v1764 = vpop.f32.mrf.mxu0
        %1765 = vdwg.mxu0
        %1766 = vrot.lane.b32.xlu0 %v941, 112
        %v1767 = vpop.permute.xlu0 %1766
        %1768 = vrot.lane.b32.xlu0 %v1007, 112
        %v1769 = vpop.permute.xlu0 %1768
        %v1770 = vsel %vm1113, %v1767, 0
        %v1772 = vsel %vm1113, %v1769, 0
        %1774 = vmatprep.subr.mxu0 0.0
        %1775 = vmatpush1.xpose.msra.mxu0 0.0
        %1776 = vmatprep.subr.mxu0 0.0
        %1777 = vmatpush1.xpose.msra.mxu0 0.0
        %1778 = vmatprep.subr.mxu0 0.0
        %1779 = vmatpush1.xpose.msra.mxu0 0.0
        %1780 = vmatprep.subr.mxu0 0.0
        %1781 = vmatpush1.xpose.msra.mxu0 0.0
        %1782 = vmatprep.subr.mxu0 0.0
        %1783 = vmatpush1.xpose.msra.mxu0 0.0
        %1784 = vmatprep.subr.mxu0 0.0
        %1785 = vmatpush1.xpose.msra.mxu0 0.0
        %1786 = vmatprep.subr.mxu0 0.0
        %1787 = vmatpush1.xpose.msra.mxu0 0.0
        %1788 = vmatprep.subr.mxu0 0.0
        %1789 = vmatpush1.xpose.msra.mxu0 0.0
        %1790 = vmatprep.subr.mxu0 0.0
        %1791 = vmatpush1.xpose.msra.mxu0 0.0
        %1792 = vmatprep.subr.mxu0 0.0
        %1793 = vmatpush1.xpose.msra.mxu0 0.0
        %1794 = vmatprep.subr.mxu0 0.0
        %1795 = vmatpush1.xpose.msra.mxu0 0.0
        %1796 = vmatprep.subr.mxu0 0.0
        %1797 = vmatpush1.xpose.msra.mxu0 0.0
        %1798 = vmatprep.subr.mxu0 0.0
        %1799 = vmatpush1.xpose.msra.mxu0 0.0
        %1800 = vmatprep.subr.mxu0 0.0
        %1801 = vmatpush1.xpose.msra.mxu0 0.0
        %1802 = vmatprep.subr.mxu0 0.0
        %1803 = vmatpush1.xpose.msra.mxu0 0.0
        %1804 = vmatprep.subr.mxu0 0.0
        %1805 = vmatpush1.xpose.msra.mxu0 %v1772
        %1806 = vmatprep.subr.mxu0 0.0
        %1807 = vmatpush2.xpose.msra.mxu0 0.0
        %1808 = vmatprep.subr.mxu0 0.0
        %1809 = vmatpush2.xpose.msra.mxu0 0.0
        %1810 = vmatprep.subr.mxu0 0.0
        %1811 = vmatpush2.xpose.msra.mxu0 0.0
        %1812 = vmatprep.subr.mxu0 0.0
        %1813 = vmatpush2.xpose.msra.mxu0 0.0
        %1814 = vmatprep.subr.mxu0 0.0
        %1815 = vmatpush2.xpose.msra.mxu0 0.0
        %1816 = vmatprep.subr.mxu0 0.0
        %1817 = vmatpush2.xpose.msra.mxu0 0.0
        %1818 = vmatprep.subr.mxu0 0.0
        %1819 = vmatpush2.xpose.msra.mxu0 0.0
        %1820 = vmatprep.subr.mxu0 0.0
        %1821 = vmatpush2.xpose.msra.mxu0 0.0
        %1822 = vmatprep.subr.mxu0 0.0
        %1823 = vmatpush2.xpose.msra.mxu0 0.0
        %1824 = vmatprep.subr.mxu0 0.0
        %1825 = vmatpush2.xpose.msra.mxu0 0.0
        %1826 = vmatprep.subr.mxu0 0.0
        %1827 = vmatpush2.xpose.msra.mxu0 0.0
        %1828 = vmatprep.subr.mxu0 0.0
        %1829 = vmatpush2.xpose.msra.mxu0 0.0
        %1830 = vmatprep.subr.mxu0 0.0
        %1831 = vmatpush2.xpose.msra.mxu0 0.0
        %1832 = vmatprep.subr.mxu0 0.0
        %1833 = vmatpush2.xpose.msra.mxu0 0.0
        %1834 = vmatprep.subr.mxu0 0.0
        %1835 = vmatpush2.xpose.msra.mxu0 0.0
        %1836 = vmatprep.subr.mxu0 0.0
        %1837 = vmatpush2.xpose.msra.mxu0 0.0
        %1838 = vmatprep.mubr.f32.mxu0 0.0
        %1839 = vmatmul.mubr.f32.gmra.mxu0 %v1770
        %v1840 = vpop.f32.mrf.mxu0
        %v1841 = vadd.f32 %v1106, %v1840
        %v1842 = vpop.f32.mrf.mxu0
        %1843 = vdwg.mxu0
        %1844 = vrot.lane.b32.xlu0 %v944, 112
        %v1845 = vpop.permute.xlu0 %1844
        %1846 = vrot.lane.b32.xlu0 %v1010, 112
        %v1847 = vpop.permute.xlu0 %1846
        %v1848 = vsel %vm1113, %v1845, 0
        %v1850 = vsel %vm1113, %v1847, 0
        %1852 = vmatprep.subr.mxu0 0.0
        %1853 = vmatpush1.xpose.msra.mxu0 0.0
        %1854 = vmatprep.subr.mxu0 0.0
        %1855 = vmatpush1.xpose.msra.mxu0 0.0
        %1856 = vmatprep.subr.mxu0 0.0
        %1857 = vmatpush1.xpose.msra.mxu0 0.0
        %1858 = vmatprep.subr.mxu0 0.0
        %1859 = vmatpush1.xpose.msra.mxu0 0.0
        %1860 = vmatprep.subr.mxu0 0.0
        %1861 = vmatpush1.xpose.msra.mxu0 0.0
        %1862 = vmatprep.subr.mxu0 0.0
        %1863 = vmatpush1.xpose.msra.mxu0 0.0
        %1864 = vmatprep.subr.mxu0 0.0
        %1865 = vmatpush1.xpose.msra.mxu0 0.0
        %1866 = vmatprep.subr.mxu0 0.0
        %1867 = vmatpush1.xpose.msra.mxu0 0.0
        %1868 = vmatprep.subr.mxu0 0.0
        %1869 = vmatpush1.xpose.msra.mxu0 0.0
        %1870 = vmatprep.subr.mxu0 0.0
        %1871 = vmatpush1.xpose.msra.mxu0 0.0
        %1872 = vmatprep.subr.mxu0 0.0
        %1873 = vmatpush1.xpose.msra.mxu0 0.0
        %1874 = vmatprep.subr.mxu0 0.0
        %1875 = vmatpush1.xpose.msra.mxu0 0.0
        %1876 = vmatprep.subr.mxu0 0.0
        %1877 = vmatpush1.xpose.msra.mxu0 0.0
        %1878 = vmatprep.subr.mxu0 0.0
        %1879 = vmatpush1.xpose.msra.mxu0 0.0
        %1880 = vmatprep.subr.mxu0 0.0
        %1881 = vmatpush1.xpose.msra.mxu0 0.0
        %1882 = vmatprep.subr.mxu0 0.0
        %1883 = vmatpush1.xpose.msra.mxu0 %v1850
        %1884 = vmatprep.subr.mxu0 0.0
        %1885 = vmatpush2.xpose.msra.mxu0 0.0
        %1886 = vmatprep.subr.mxu0 0.0
        %1887 = vmatpush2.xpose.msra.mxu0 0.0
        %1888 = vmatprep.subr.mxu0 0.0
        %1889 = vmatpush2.xpose.msra.mxu0 0.0
        %1890 = vmatprep.subr.mxu0 0.0
        %1891 = vmatpush2.xpose.msra.mxu0 0.0
        %1892 = vmatprep.subr.mxu0 0.0
        %1893 = vmatpush2.xpose.msra.mxu0 0.0
        %1894 = vmatprep.subr.mxu0 0.0
        %1895 = vmatpush2.xpose.msra.mxu0 0.0
        %1896 = vmatprep.subr.mxu0 0.0
        %1897 = vmatpush2.xpose.msra.mxu0 0.0
        %1898 = vmatprep.subr.mxu0 0.0
        %1899 = vmatpush2.xpose.msra.mxu0 0.0
        %1900 = vmatprep.subr.mxu0 0.0
        %1901 = vmatpush2.xpose.msra.mxu0 0.0
        %1902 = vmatprep.subr.mxu0 0.0
        %1903 = vmatpush2.xpose.msra.mxu0 0.0
        %1904 = vmatprep.subr.mxu0 0.0
        %1905 = vmatpush2.xpose.msra.mxu0 0.0
        %1906 = vmatprep.subr.mxu0 0.0
        %1907 = vmatpush2.xpose.msra.mxu0 0.0
        %1908 = vmatprep.subr.mxu0 0.0
        %1909 = vmatpush2.xpose.msra.mxu0 0.0
        %1910 = vmatprep.subr.mxu0 0.0
        %1911 = vmatpush2.xpose.msra.mxu0 0.0
        %1912 = vmatprep.subr.mxu0 0.0
        %1913 = vmatpush2.xpose.msra.mxu0 0.0
        %1914 = vmatprep.subr.mxu0 0.0
        %1915 = vmatpush2.xpose.msra.mxu0 0.0
        %1916 = vmatprep.mubr.f32.mxu0 0.0
        %1917 = vmatmul.mubr.f32.gmra.mxu0 %v1848
        %v1918 = vpop.f32.mrf.mxu0
        %v1919 = vadd.f32 %v1110, %v1918
        %v1920 = vpop.f32.mrf.mxu0
        %1921 = vdwg.mxu0
        %v1922 = vsel %vm1113, %v1841, -inf
        %1923 = vmax.xlane.f32.xlu0 %v1922
        %v1924 = vpop.xlane.xlu0 %1923
        %v1925 = vsel %vm1113, %v1919, -inf
        %1926 = vmax.xlane.f32.xlu0 %v1925
        %v1927 = vpop.xlane.xlu0 %1926
        %v1928 = vsub.f32 %v1841, %v1924
        %v1929 = vsub.f32 %v1919, %v1927
        %v1930 = vmul.f32 %v1928, 1.442695
        %v1931 = vpow.pop %v1930
        %v1932 = vmul.f32 %v1929, 1.442695
        %v1933 = vpow.pop %v1932
        %v1934 = vsel %vm1113, %v1931, 0.0
        %1935 = vadd.xlane.f32.xlu0 %v1934
        %v1936 = vpop.xlane.xlu0 %1935
        %v1937 = vsel %vm1113, %v1933, 0.0
        %1938 = vadd.xlane.f32.xlu0 %v1937
        %v1939 = vpop.xlane.xlu0 %1938
        %v1940 = vrcp.pop %v1936
        %v1941 = vrcp.pop %v1939
        %v1942 = vmul.f32 %v1931, %v1940
        %v1943 = vmul.f32 %v1933, %v1941
        %1944 = vrot.lane.b32.xlu0 %v1073, 112
        %v1945 = vpop.permute.xlu0 %1944
        %v1948 = vsel %vm1113, %v1942, 0
        %1950 = vmatprep.subr.mxu0 0.0
        %1951 = vmatpush1.msra.mxu0 0.0
        %1952 = vmatprep.subr.mxu0 0.0
        %1953 = vmatpush1.msra.mxu0 0.0
        %1954 = vmatprep.subr.mxu0 0.0
        %1955 = vmatpush1.msra.mxu0 0.0
        %1956 = vmatprep.subr.mxu0 0.0
        %1957 = vmatpush1.msra.mxu0 0.0
        %1958 = vmatprep.subr.mxu0 0.0
        %1959 = vmatpush1.msra.mxu0 0.0
        %1960 = vmatprep.subr.mxu0 0.0
        %1961 = vmatpush1.msra.mxu0 0.0
        %1962 = vmatprep.subr.mxu0 0.0
        %1963 = vmatpush1.msra.mxu0 0.0
        %1964 = vmatprep.subr.mxu0 0.0
        %1965 = vmatpush1.msra.mxu0 0.0
        %1966 = vmatprep.subr.mxu0 0.0
        %1967 = vmatpush1.msra.mxu0 0.0
        %1968 = vmatprep.subr.mxu0 0.0
        %1969 = vmatpush1.msra.mxu0 0.0
        %1970 = vmatprep.subr.mxu0 0.0
        %1971 = vmatpush1.msra.mxu0 0.0
        %1972 = vmatprep.subr.mxu0 0.0
        %1973 = vmatpush1.msra.mxu0 0.0
        %1974 = vmatprep.subr.mxu0 0.0
        %1975 = vmatpush1.msra.mxu0 0.0
        %1976 = vmatprep.subr.mxu0 0.0
        %1977 = vmatpush1.msra.mxu0 0.0
        %1978 = vmatprep.subr.mxu0 0.0
        %1979 = vmatpush1.msra.mxu0 0.0
        %1980 = vmatprep.subr.mxu0 0.0
        %1981 = vmatpush1.msra.mxu0 %v1945
        %1982 = vmatprep.subr.mxu0 0.0
        %1983 = vmatpush2.msra.mxu0 0.0
        %1984 = vmatprep.subr.mxu0 0.0
        %1985 = vmatpush2.msra.mxu0 0.0
        %1986 = vmatprep.subr.mxu0 0.0
        %1987 = vmatpush2.msra.mxu0 0.0
        %1988 = vmatprep.subr.mxu0 0.0
        %1989 = vmatpush2.msra.mxu0 0.0
        %1990 = vmatprep.subr.mxu0 0.0
        %1991 = vmatpush2.msra.mxu0 0.0
        %1992 = vmatprep.subr.mxu0 0.0
        %1993 = vmatpush2.msra.mxu0 0.0
        %1994 = vmatprep.subr.mxu0 0.0
        %1995 = vmatpush2.msra.mxu0 0.0
        %1996 = vmatprep.subr.mxu0 0.0
        %1997 = vmatpush2.msra.mxu0 0.0
        %1998 = vmatprep.subr.mxu0 0.0
        %1999 = vmatpush2.msra.mxu0 0.0
        %2000 = vmatprep.subr.mxu0 0.0
        %2001 = vmatpush2.msra.mxu0 0.0
        %2002 = vmatprep.subr.mxu0 0.0
        %2003 = vmatpush2.msra.mxu0 0.0
        %2004 = vmatprep.subr.mxu0 0.0
        %2005 = vmatpush2.msra.mxu0 0.0
        %2006 = vmatprep.subr.mxu0 0.0
        %2007 = vmatpush2.msra.mxu0 0.0
        %2008 = vmatprep.subr.mxu0 0.0
        %2009 = vmatpush2.msra.mxu0 0.0
        %2010 = vmatprep.subr.mxu0 0.0
        %2011 = vmatpush2.msra.mxu0 0.0
        %2012 = vmatprep.subr.mxu0 0.0
        %2013 = vmatpush2.msra.mxu0 0.0
        %2014 = vmatprep.mubr.f32.mxu0 0.0
        %2015 = vmatmul.mubr.f32.gmra.mxu0 %v1948
        %v2016 = vpop.f32.mrf.mxu0
        %v2017 = vadd.f32 0.0, %v2016
        %v2018 = vpop.f32.mrf.mxu0
        %2019 = vdwg.mxu0
        %2020 = vrot.lane.b32.xlu0 %v1076, 112
        %v2021 = vpop.permute.xlu0 %2020
        %v2024 = vsel %vm1113, %v1943, 0
        %2026 = vmatprep.subr.mxu0 0.0
        %2027 = vmatpush1.msra.mxu0 0.0
        %2028 = vmatprep.subr.mxu0 0.0
        %2029 = vmatpush1.msra.mxu0 0.0
        %2030 = vmatprep.subr.mxu0 0.0
        %2031 = vmatpush1.msra.mxu0 0.0
        %2032 = vmatprep.subr.mxu0 0.0
        %2033 = vmatpush1.msra.mxu0 0.0
        %2034 = vmatprep.subr.mxu0 0.0
        %2035 = vmatpush1.msra.mxu0 0.0
        %2036 = vmatprep.subr.mxu0 0.0
        %2037 = vmatpush1.msra.mxu0 0.0
        %2038 = vmatprep.subr.mxu0 0.0
        %2039 = vmatpush1.msra.mxu0 0.0
        %2040 = vmatprep.subr.mxu0 0.0
        %2041 = vmatpush1.msra.mxu0 0.0
        %2042 = vmatprep.subr.mxu0 0.0
        %2043 = vmatpush1.msra.mxu0 0.0
        %2044 = vmatprep.subr.mxu0 0.0
        %2045 = vmatpush1.msra.mxu0 0.0
        %2046 = vmatprep.subr.mxu0 0.0
        %2047 = vmatpush1.msra.mxu0 0.0
        %2048 = vmatprep.subr.mxu0 0.0
        %2049 = vmatpush1.msra.mxu0 0.0
        %2050 = vmatprep.subr.mxu0 0.0
        %2051 = vmatpush1.msra.mxu0 0.0
        %2052 = vmatprep.subr.mxu0 0.0
        %2053 = vmatpush1.msra.mxu0 0.0
        %2054 = vmatprep.subr.mxu0 0.0
        %2055 = vmatpush1.msra.mxu0 0.0
        %2056 = vmatprep.subr.mxu0 0.0
        %2057 = vmatpush1.msra.mxu0 %v2021
        %2058 = vmatprep.subr.mxu0 0.0
        %2059 = vmatpush2.msra.mxu0 0.0
        %2060 = vmatprep.subr.mxu0 0.0
        %2061 = vmatpush2.msra.mxu0 0.0
        %2062 = vmatprep.subr.mxu0 0.0
        %2063 = vmatpush2.msra.mxu0 0.0
        %2064 = vmatprep.subr.mxu0 0.0
        %2065 = vmatpush2.msra.mxu0 0.0
        %2066 = vmatprep.subr.mxu0 0.0
        %2067 = vmatpush2.msra.mxu0 0.0
        %2068 = vmatprep.subr.mxu0 0.0
        %2069 = vmatpush2.msra.mxu0 0.0
        %2070 = vmatprep.subr.mxu0 0.0
        %2071 = vmatpush2.msra.mxu0 0.0
        %2072 = vmatprep.subr.mxu0 0.0
        %2073 = vmatpush2.msra.mxu0 0.0
        %2074 = vmatprep.subr.mxu0 0.0
        %2075 = vmatpush2.msra.mxu0 0.0
        %2076 = vmatprep.subr.mxu0 0.0
        %2077 = vmatpush2.msra.mxu0 0.0
        %2078 = vmatprep.subr.mxu0 0.0
        %2079 = vmatpush2.msra.mxu0 0.0
        %2080 = vmatprep.subr.mxu0 0.0
        %2081 = vmatpush2.msra.mxu0 0.0
        %2082 = vmatprep.subr.mxu0 0.0
        %2083 = vmatpush2.msra.mxu0 0.0
        %2084 = vmatprep.subr.mxu0 0.0
        %2085 = vmatpush2.msra.mxu0 0.0
        %2086 = vmatprep.subr.mxu0 0.0
        %2087 = vmatpush2.msra.mxu0 0.0
        %2088 = vmatprep.subr.mxu0 0.0
        %2089 = vmatpush2.msra.mxu0 0.0
        %2090 = vmatprep.mubr.f32.mxu0 0.0
        %2091 = vmatmul.mubr.f32.gmra.mxu0 %v2024
        %v2092 = vpop.f32.mrf.mxu0
        %v2093 = vadd.f32 0.0, %v2092
        %v2094 = vpop.f32.mrf.mxu0
        %2095 = vdwg.mxu0
        %2096 = vrot.lane.b32.xlu0 %v941, 104
        %v2097 = vpop.permute.xlu0 %2096
        %2098 = vrot.lane.b32.xlu0 %v1007, 104
        %v2099 = vpop.permute.xlu0 %2098
        %v2100 = vsel %vm1113, %v2097, 0
        %v2102 = vsel %vm1113, %v2099, 0
        %2104 = vmatprep.subr.mxu0 0.0
        %2105 = vmatpush1.xpose.msra.mxu0 0.0
        %2106 = vmatprep.subr.mxu0 0.0
        %2107 = vmatpush1.xpose.msra.mxu0 0.0
        %2108 = vmatprep.subr.mxu0 0.0
        %2109 = vmatpush1.xpose.msra.mxu0 0.0
        %2110 = vmatprep.subr.mxu0 0.0
        %2111 = vmatpush1.xpose.msra.mxu0 0.0
        %2112 = vmatprep.subr.mxu0 0.0
        %2113 = vmatpush1.xpose.msra.mxu0 0.0
        %2114 = vmatprep.subr.mxu0 0.0
        %2115 = vmatpush1.xpose.msra.mxu0 0.0
        %2116 = vmatprep.subr.mxu0 0.0
        %2117 = vmatpush1.xpose.msra.mxu0 0.0
        %2118 = vmatprep.subr.mxu0 0.0
        %2119 = vmatpush1.xpose.msra.mxu0 0.0
        %2120 = vmatprep.subr.mxu0 0.0
        %2121 = vmatpush1.xpose.msra.mxu0 0.0
        %2122 = vmatprep.subr.mxu0 0.0
        %2123 = vmatpush1.xpose.msra.mxu0 0.0
        %2124 = vmatprep.subr.mxu0 0.0
        %2125 = vmatpush1.xpose.msra.mxu0 0.0
        %2126 = vmatprep.subr.mxu0 0.0
        %2127 = vmatpush1.xpose.msra.mxu0 0.0
        %2128 = vmatprep.subr.mxu0 0.0
        %2129 = vmatpush1.xpose.msra.mxu0 0.0
        %2130 = vmatprep.subr.mxu0 0.0
        %2131 = vmatpush1.xpose.msra.mxu0 0.0
        %2132 = vmatprep.subr.mxu0 0.0
        %2133 = vmatpush1.xpose.msra.mxu0 0.0
        %2134 = vmatprep.subr.mxu0 0.0
        %2135 = vmatpush1.xpose.msra.mxu0 %v2102
        %2136 = vmatprep.subr.mxu0 0.0
        %2137 = vmatpush2.xpose.msra.mxu0 0.0
        %2138 = vmatprep.subr.mxu0 0.0
        %2139 = vmatpush2.xpose.msra.mxu0 0.0
        %2140 = vmatprep.subr.mxu0 0.0
        %2141 = vmatpush2.xpose.msra.mxu0 0.0
        %2142 = vmatprep.subr.mxu0 0.0
        %2143 = vmatpush2.xpose.msra.mxu0 0.0
        %2144 = vmatprep.subr.mxu0 0.0
        %2145 = vmatpush2.xpose.msra.mxu0 0.0
        %2146 = vmatprep.subr.mxu0 0.0
        %2147 = vmatpush2.xpose.msra.mxu0 0.0
        %2148 = vmatprep.subr.mxu0 0.0
        %2149 = vmatpush2.xpose.msra.mxu0 0.0
        %2150 = vmatprep.subr.mxu0 0.0
        %2151 = vmatpush2.xpose.msra.mxu0 0.0
        %2152 = vmatprep.subr.mxu0 0.0
        %2153 = vmatpush2.xpose.msra.mxu0 0.0
        %2154 = vmatprep.subr.mxu0 0.0
        %2155 = vmatpush2.xpose.msra.mxu0 0.0
        %2156 = vmatprep.subr.mxu0 0.0
        %2157 = vmatpush2.xpose.msra.mxu0 0.0
        %2158 = vmatprep.subr.mxu0 0.0
        %2159 = vmatpush2.xpose.msra.mxu0 0.0
        %2160 = vmatprep.subr.mxu0 0.0
        %2161 = vmatpush2.xpose.msra.mxu0 0.0
        %2162 = vmatprep.subr.mxu0 0.0
        %2163 = vmatpush2.xpose.msra.mxu0 0.0
        %2164 = vmatprep.subr.mxu0 0.0
        %2165 = vmatpush2.xpose.msra.mxu0 0.0
        %2166 = vmatprep.subr.mxu0 0.0
        %2167 = vmatpush2.xpose.msra.mxu0 0.0
        %2168 = vmatprep.mubr.f32.mxu0 0.0
        %2169 = vmatmul.mubr.f32.gmra.mxu0 %v2100
        %v2170 = vpop.f32.mrf.mxu0
        %v2171 = vadd.f32 %v1106, %v2170
        %v2172 = vpop.f32.mrf.mxu0
        %2173 = vdwg.mxu0
        %2174 = vrot.lane.b32.xlu0 %v944, 104
        %v2175 = vpop.permute.xlu0 %2174
        %2176 = vrot.lane.b32.xlu0 %v1010, 104
        %v2177 = vpop.permute.xlu0 %2176
        %v2178 = vsel %vm1113, %v2175, 0
        %v2180 = vsel %vm1113, %v2177, 0
        %2182 = vmatprep.subr.mxu0 0.0
        %2183 = vmatpush1.xpose.msra.mxu0 0.0
        %2184 = vmatprep.subr.mxu0 0.0
        %2185 = vmatpush1.xpose.msra.mxu0 0.0
        %2186 = vmatprep.subr.mxu0 0.0
        %2187 = vmatpush1.xpose.msra.mxu0 0.0
        %2188 = vmatprep.subr.mxu0 0.0
        %2189 = vmatpush1.xpose.msra.mxu0 0.0
        %2190 = vmatprep.subr.mxu0 0.0
        %2191 = vmatpush1.xpose.msra.mxu0 0.0
        %2192 = vmatprep.subr.mxu0 0.0
        %2193 = vmatpush1.xpose.msra.mxu0 0.0
        %2194 = vmatprep.subr.mxu0 0.0
        %2195 = vmatpush1.xpose.msra.mxu0 0.0
        %2196 = vmatprep.subr.mxu0 0.0
        %2197 = vmatpush1.xpose.msra.mxu0 0.0
        %2198 = vmatprep.subr.mxu0 0.0
        %2199 = vmatpush1.xpose.msra.mxu0 0.0
        %2200 = vmatprep.subr.mxu0 0.0
        %2201 = vmatpush1.xpose.msra.mxu0 0.0
        %2202 = vmatprep.subr.mxu0 0.0
        %2203 = vmatpush1.xpose.msra.mxu0 0.0
        %2204 = vmatprep.subr.mxu0 0.0
        %2205 = vmatpush1.xpose.msra.mxu0 0.0
        %2206 = vmatprep.subr.mxu0 0.0
        %2207 = vmatpush1.xpose.msra.mxu0 0.0
        %2208 = vmatprep.subr.mxu0 0.0
        %2209 = vmatpush1.xpose.msra.mxu0 0.0
        %2210 = vmatprep.subr.mxu0 0.0
        %2211 = vmatpush1.xpose.msra.mxu0 0.0
        %2212 = vmatprep.subr.mxu0 0.0
        %2213 = vmatpush1.xpose.msra.mxu0 %v2180
        %2214 = vmatprep.subr.mxu0 0.0
        %2215 = vmatpush2.xpose.msra.mxu0 0.0
        %2216 = vmatprep.subr.mxu0 0.0
        %2217 = vmatpush2.xpose.msra.mxu0 0.0
        %2218 = vmatprep.subr.mxu0 0.0
        %2219 = vmatpush2.xpose.msra.mxu0 0.0
        %2220 = vmatprep.subr.mxu0 0.0
        %2221 = vmatpush2.xpose.msra.mxu0 0.0
        %2222 = vmatprep.subr.mxu0 0.0
        %2223 = vmatpush2.xpose.msra.mxu0 0.0
        %2224 = vmatprep.subr.mxu0 0.0
        %2225 = vmatpush2.xpose.msra.mxu0 0.0
        %2226 = vmatprep.subr.mxu0 0.0
        %2227 = vmatpush2.xpose.msra.mxu0 0.0
        %2228 = vmatprep.subr.mxu0 0.0
        %2229 = vmatpush2.xpose.msra.mxu0 0.0
        %2230 = vmatprep.subr.mxu0 0.0
        %2231 = vmatpush2.xpose.msra.mxu0 0.0
        %2232 = vmatprep.subr.mxu0 0.0
        %2233 = vmatpush2.xpose.msra.mxu0 0.0
        %2234 = vmatprep.subr.mxu0 0.0
        %2235 = vmatpush2.xpose.msra.mxu0 0.0
        %2236 = vmatprep.subr.mxu0 0.0
        %2237 = vmatpush2.xpose.msra.mxu0 0.0
        %2238 = vmatprep.subr.mxu0 0.0
        %2239 = vmatpush2.xpose.msra.mxu0 0.0
        %2240 = vmatprep.subr.mxu0 0.0
        %2241 = vmatpush2.xpose.msra.mxu0 0.0
        %2242 = vmatprep.subr.mxu0 0.0
        %2243 = vmatpush2.xpose.msra.mxu0 0.0
        %2244 = vmatprep.subr.mxu0 0.0
        %2245 = vmatpush2.xpose.msra.mxu0 0.0
        %2246 = vmatprep.mubr.f32.mxu0 0.0
        %2247 = vmatmul.mubr.f32.gmra.mxu0 %v2178
        %v2248 = vpop.f32.mrf.mxu0
        %v2249 = vadd.f32 %v1110, %v2248
        %v2250 = vpop.f32.mrf.mxu0
        %2251 = vdwg.mxu0
        %v2252 = vsel %vm1113, %v2171, -inf
        %2253 = vmax.xlane.f32.xlu0 %v2252
        %v2254 = vpop.xlane.xlu0 %2253
        %v2255 = vsel %vm1113, %v2249, -inf
        %2256 = vmax.xlane.f32.xlu0 %v2255
        %v2257 = vpop.xlane.xlu0 %2256
        %v2258 = vsub.f32 %v2171, %v2254
        %v2259 = vsub.f32 %v2249, %v2257
        %v2260 = vmul.f32 %v2258, 1.442695
        %v2261 = vpow.pop %v2260
        %v2262 = vmul.f32 %v2259, 1.442695
        %v2263 = vpow.pop %v2262
        %v2264 = vsel %vm1113, %v2261, 0.0
        %2265 = vadd.xlane.f32.xlu0 %v2264
        %v2266 = vpop.xlane.xlu0 %2265
        %v2267 = vsel %vm1113, %v2263, 0.0
        %2268 = vadd.xlane.f32.xlu0 %v2267
        %v2269 = vpop.xlane.xlu0 %2268
        %v2270 = vrcp.pop %v2266
        %v2271 = vrcp.pop %v2269
        %v2272 = vmul.f32 %v2261, %v2270
        %v2273 = vmul.f32 %v2263, %v2271
        %2274 = vrot.lane.b32.xlu0 %v1073, 104
        %v2275 = vpop.permute.xlu0 %2274
        %v2278 = vsel %vm1113, %v2272, 0
        %2280 = vmatprep.subr.mxu0 0.0
        %2281 = vmatpush1.msra.mxu0 0.0
        %2282 = vmatprep.subr.mxu0 0.0
        %2283 = vmatpush1.msra.mxu0 0.0
        %2284 = vmatprep.subr.mxu0 0.0
        %2285 = vmatpush1.msra.mxu0 0.0
        %2286 = vmatprep.subr.mxu0 0.0
        %2287 = vmatpush1.msra.mxu0 0.0
        %2288 = vmatprep.subr.mxu0 0.0
        %2289 = vmatpush1.msra.mxu0 0.0
        %2290 = vmatprep.subr.mxu0 0.0
        %2291 = vmatpush1.msra.mxu0 0.0
        %2292 = vmatprep.subr.mxu0 0.0
        %2293 = vmatpush1.msra.mxu0 0.0
        %2294 = vmatprep.subr.mxu0 0.0
        %2295 = vmatpush1.msra.mxu0 0.0
        %2296 = vmatprep.subr.mxu0 0.0
        %2297 = vmatpush1.msra.mxu0 0.0
        %2298 = vmatprep.subr.mxu0 0.0
        %2299 = vmatpush1.msra.mxu0 0.0
        %2300 = vmatprep.subr.mxu0 0.0
        %2301 = vmatpush1.msra.mxu0 0.0
        %2302 = vmatprep.subr.mxu0 0.0
        %2303 = vmatpush1.msra.mxu0 0.0
        %2304 = vmatprep.subr.mxu0 0.0
        %2305 = vmatpush1.msra.mxu0 0.0
        %2306 = vmatprep.subr.mxu0 0.0
        %2307 = vmatpush1.msra.mxu0 0.0
        %2308 = vmatprep.subr.mxu0 0.0
        %2309 = vmatpush1.msra.mxu0 0.0
        %2310 = vmatprep.subr.mxu0 0.0
        %2311 = vmatpush1.msra.mxu0 %v2275
        %2312 = vmatprep.subr.mxu0 0.0
        %2313 = vmatpush2.msra.mxu0 0.0
        %2314 = vmatprep.subr.mxu0 0.0
        %2315 = vmatpush2.msra.mxu0 0.0
        %2316 = vmatprep.subr.mxu0 0.0
        %2317 = vmatpush2.msra.mxu0 0.0
        %2318 = vmatprep.subr.mxu0 0.0
        %2319 = vmatpush2.msra.mxu0 0.0
        %2320 = vmatprep.subr.mxu0 0.0
        %2321 = vmatpush2.msra.mxu0 0.0
        %2322 = vmatprep.subr.mxu0 0.0
        %2323 = vmatpush2.msra.mxu0 0.0
        %2324 = vmatprep.subr.mxu0 0.0
        %2325 = vmatpush2.msra.mxu0 0.0
        %2326 = vmatprep.subr.mxu0 0.0
        %2327 = vmatpush2.msra.mxu0 0.0
        %2328 = vmatprep.subr.mxu0 0.0
        %2329 = vmatpush2.msra.mxu0 0.0
        %2330 = vmatprep.subr.mxu0 0.0
        %2331 = vmatpush2.msra.mxu0 0.0
        %2332 = vmatprep.subr.mxu0 0.0
        %2333 = vmatpush2.msra.mxu0 0.0
        %2334 = vmatprep.subr.mxu0 0.0
        %2335 = vmatpush2.msra.mxu0 0.0
        %2336 = vmatprep.subr.mxu0 0.0
        %2337 = vmatpush2.msra.mxu0 0.0
        %2338 = vmatprep.subr.mxu0 0.0
        %2339 = vmatpush2.msra.mxu0 0.0
        %2340 = vmatprep.subr.mxu0 0.0
        %2341 = vmatpush2.msra.mxu0 0.0
        %2342 = vmatprep.subr.mxu0 0.0
        %2343 = vmatpush2.msra.mxu0 0.0
        %2344 = vmatprep.mubr.f32.mxu0 0.0
        %2345 = vmatmul.mubr.f32.gmra.mxu0 %v2278
        %v2346 = vpop.f32.mrf.mxu0
        %v2347 = vadd.f32 0.0, %v2346
        %v2348 = vpop.f32.mrf.mxu0
        %2349 = vdwg.mxu0
        %2350 = vrot.lane.b32.xlu0 %v1076, 104
        %v2351 = vpop.permute.xlu0 %2350
        %v2354 = vsel %vm1113, %v2273, 0
        %2356 = vmatprep.subr.mxu0 0.0
        %2357 = vmatpush1.msra.mxu0 0.0
        %2358 = vmatprep.subr.mxu0 0.0
        %2359 = vmatpush1.msra.mxu0 0.0
        %2360 = vmatprep.subr.mxu0 0.0
        %2361 = vmatpush1.msra.mxu0 0.0
        %2362 = vmatprep.subr.mxu0 0.0
        %2363 = vmatpush1.msra.mxu0 0.0
        %2364 = vmatprep.subr.mxu0 0.0
        %2365 = vmatpush1.msra.mxu0 0.0
        %2366 = vmatprep.subr.mxu0 0.0
        %2367 = vmatpush1.msra.mxu0 0.0
        %2368 = vmatprep.subr.mxu0 0.0
        %2369 = vmatpush1.msra.mxu0 0.0
        %2370 = vmatprep.subr.mxu0 0.0
        %2371 = vmatpush1.msra.mxu0 0.0
        %2372 = vmatprep.subr.mxu0 0.0
        %2373 = vmatpush1.msra.mxu0 0.0
        %2374 = vmatprep.subr.mxu0 0.0
        %2375 = vmatpush1.msra.mxu0 0.0
        %2376 = vmatprep.subr.mxu0 0.0
        %2377 = vmatpush1.msra.mxu0 0.0
        %2378 = vmatprep.subr.mxu0 0.0
        %2379 = vmatpush1.msra.mxu0 0.0
        %2380 = vmatprep.subr.mxu0 0.0
        %2381 = vmatpush1.msra.mxu0 0.0
        %2382 = vmatprep.subr.mxu0 0.0
        %2383 = vmatpush1.msra.mxu0 0.0
        %2384 = vmatprep.subr.mxu0 0.0
        %2385 = vmatpush1.msra.mxu0 0.0
        %2386 = vmatprep.subr.mxu0 0.0
        %2387 = vmatpush1.msra.mxu0 %v2351
        %2388 = vmatprep.subr.mxu0 0.0
        %2389 = vmatpush2.msra.mxu0 0.0
        %2390 = vmatprep.subr.mxu0 0.0
        %2391 = vmatpush2.msra.mxu0 0.0
        %2392 = vmatprep.subr.mxu0 0.0
        %2393 = vmatpush2.msra.mxu0 0.0
        %2394 = vmatprep.subr.mxu0 0.0
        %2395 = vmatpush2.msra.mxu0 0.0
        %2396 = vmatprep.subr.mxu0 0.0
        %2397 = vmatpush2.msra.mxu0 0.0
        %2398 = vmatprep.subr.mxu0 0.0
        %2399 = vmatpush2.msra.mxu0 0.0
        %2400 = vmatprep.subr.mxu0 0.0
        %2401 = vmatpush2.msra.mxu0 0.0
        %2402 = vmatprep.subr.mxu0 0.0
        %2403 = vmatpush2.msra.mxu0 0.0
        %2404 = vmatprep.subr.mxu0 0.0
        %2405 = vmatpush2.msra.mxu0 0.0
        %2406 = vmatprep.subr.mxu0 0.0
        %2407 = vmatpush2.msra.mxu0 0.0
        %2408 = vmatprep.subr.mxu0 0.0
        %2409 = vmatpush2.msra.mxu0 0.0
        %2410 = vmatprep.subr.mxu0 0.0
        %2411 = vmatpush2.msra.mxu0 0.0
        %2412 = vmatprep.subr.mxu0 0.0
        %2413 = vmatpush2.msra.mxu0 0.0
        %2414 = vmatprep.subr.mxu0 0.0
        %2415 = vmatpush2.msra.mxu0 0.0
        %2416 = vmatprep.subr.mxu0 0.0
        %2417 = vmatpush2.msra.mxu0 0.0
        %2418 = vmatprep.subr.mxu0 0.0
        %2419 = vmatpush2.msra.mxu0 0.0
        %2420 = vmatprep.mubr.f32.mxu0 0.0
        %2421 = vmatmul.mubr.f32.gmra.mxu0 %v2354
        %v2422 = vpop.f32.mrf.mxu0
        %v2423 = vadd.f32 0.0, %v2422
        %v2424 = vpop.f32.mrf.mxu0
        %2425 = vdwg.mxu0
        %2428 = vrot.lane.b32.xlu0 %v1686, 8
        %v2429 = vpop.permute.xlu0 %2428
        %2430 = vrot.lane.b32.xlu0 %v1763, 8
        %v2431 = vpop.permute.xlu0 %2430
        %2436 = vrot.lane.b32.xlu0 %v2017, 16
        %v2437 = vpop.permute.xlu0 %2436
        %2438 = vrot.lane.b32.xlu0 %v2093, 16
        %v2439 = vpop.permute.xlu0 %2438
        %2444 = vrot.lane.b32.xlu0 %v2347, 24
        %v2445 = vpop.permute.xlu0 %2444
        %2446 = vrot.lane.b32.xlu0 %v2423, 24
        %v2447 = vpop.permute.xlu0 %2446
        %v2450 = vsel %vm1113, %v1358, %v2429
        %v2451 = vsel %vm1113, %v1431, %v2431
        %vm2452 = vcmask 130048
        %v2453 = vsel %vm2452, %v2450, %v2437
        %v2454 = vsel %vm2452, %v2451, %v2439
        %vm2455 = vcmask 195584
        %v2456 = vsel %vm2455, %v2453, %v2445
        %v2457 = vsel %vm2455, %v2454, %v2447
        %v2458 = vpack.c.bf16 %v2457, %v2456
        %v2459 = vld [vmem:[%s789] sm:$0xf]
        %v2460 = vld [vmem:[%s789 + $0x4] sm:$0xf]
        %v2461 = vld [vmem:[%s789 + $0x8] sm:$0xf]
        %v2462 = vld [vmem:[%s789 + $0xc] sm:$0xf]
        %v2463 = vld [vmem:[%s792] sm:$0x1]
        %v2465 = vlaneseq
        %v2466 = vshrl.u32 %v2465, 7
        %v2467 = vsub.s32 0, %v2466
        %v2468 = vrot.slane %v2463, %v2467
        %v2474 = vunpack.c.l.b16 %v2459
        %v2475 = vunpack.c.l.b16 %v2460
        %v2476 = vunpack.c.l.b16 %v2461
        %v2477 = vunpack.c.l.b16 %v2462
        %v2478 = vpack.c.b16 %v2475, %v2474
        %v2479 = vpack.c.b16 %v2477, %v2476
        %v2483 = vsel %vm902, %v2458, 0
        %2485 = vmatprep.subr.bf16.mxu0 0
        %2486 = vmatpush1.bf16.msra.mxu0 0
        %2487 = vmatprep.subr.bf16.mxu0 0
        %2488 = vmatpush1.bf16.msra.mxu0 0
        %2489 = vmatprep.subr.bf16.mxu0 0
        %2490 = vmatpush1.bf16.msra.mxu0 0
        %2491 = vmatprep.subr.bf16.mxu0 0
        %2492 = vmatpush1.bf16.msra.mxu0 0
        %2493 = vmatprep.subr.bf16.mxu0 0
        %2494 = vmatpush1.bf16.msra.mxu0 0
        %2495 = vmatprep.subr.bf16.mxu0 0
        %2496 = vmatpush1.bf16.msra.mxu0 0
        %2497 = vmatprep.subr.bf16.mxu0 0
        %2498 = vmatpush1.bf16.msra.mxu0 %v2479
        %2499 = vmatprep.subr.bf16.mxu0 0
        %2500 = vmatpush1.bf16.msra.mxu0 %v2478
        %2501 = vmatprep.subr.bf16.mxu0 0
        %2502 = vmatpush2.bf16.msra.mxu0 0
        %2503 = vmatprep.subr.bf16.mxu0 0
        %2504 = vmatpush2.bf16.msra.mxu0 0
        %2505 = vmatprep.subr.bf16.mxu0 0
        %2506 = vmatpush2.bf16.msra.mxu0 0
        %2507 = vmatprep.subr.bf16.mxu0 0
        %2508 = vmatpush2.bf16.msra.mxu0 0
        %2509 = vmatprep.subr.bf16.mxu0 0
        %2510 = vmatpush2.bf16.msra.mxu0 0
        %2511 = vmatprep.subr.bf16.mxu0 0
        %2512 = vmatpush2.bf16.msra.mxu0 0
        %2513 = vmatprep.subr.bf16.mxu0 0
        %2514 = vmatpush2.bf16.msra.mxu0 0
        %2515 = vmatprep.subr.bf16.mxu0 0
        %2516 = vmatpush2.bf16.msra.mxu0 0
        %2517 = vmatprep.mubr.bf16.mxu0 0
        %2518 = vmatmul.mubr.bf16.gmra.mxu0 %v2483
        %v2519 = vpop.f32.mrf.mxu0
        %v2520 = vadd.f32 %v2468, %v2519
        %v2521 = vpop.f32.mrf.mxu0
        %v2522 = vpop.f32.mrf.mxu0
        %v2523 = vadd.f32 %v2468, %v2522
        %v2524 = vpop.f32.mrf.mxu0
        %2525 = vdwg.mxu0
        %v2526 = vadd.f32 %v876, %v2520
        %v2527 = vadd.f32 %v877, %v2523
        %v2528 = vld [vmem:[%s795] sm:$0x1]
        %v2529 = vld [vmem:[%s798] sm:$0x1]
        %v2530 = vsel %vm902, %v2526, 0.0
        %2531 = vadd.xlane.f32.xlu0 %v2530
        %v2532 = vpop.xlane.xlu0 %2531
        %v2533 = vsel %vm902, %v2527, 0.0
        %2534 = vadd.xlane.f32.xlu0 %v2533
        %v2535 = vpop.xlane.xlu0 %2534
        %v2536 = vrcp.pop 32.0
        %v2537 = vmul.f32 %v2532, %v2536
        %v2538 = vmul.f32 %v2535, %v2536
        %v2539 = vsub.f32 %v2526, %v2537
        %v2540 = vsub.f32 %v2527, %v2538
        %v2541 = vmul.f32 %v2539, %v2539
        %v2542 = vmul.f32 %v2540, %v2540
        %v2543 = vsel %vm902, %v2541, 0.0
        %2544 = vadd.xlane.f32.xlu0 %v2543
        %v2545 = vpop.xlane.xlu0 %2544
        %v2546 = vsel %vm902, %v2542, 0.0
        %2547 = vadd.xlane.f32.xlu0 %v2546
        %v2548 = vpop.xlane.xlu0 %2547
        %v2549 = vmul.f32 %v2545, %v2536
        %v2550 = vmul.f32 %v2548, %v2536
        %v2551 = vadd.f32 %v2549, 1e-12
        %v2552 = vadd.f32 %v2550, 1e-12
        %v2553 = vrsqrt.pop %v2551
        %v2554 = vrsqrt.pop %v2552
        %v2555 = vmul.f32 %v2539, %v2553
        %v2556 = vmul.f32 %v2540, %v2554
        %v2558 = vlaneseq
        %v2559 = vshrl.u32 %v2558, 7
        %v2560 = vsub.s32 0, %v2559
        %v2561 = vrot.slane %v2528, %v2560
        %v2563 = vmul.f32 %v2555, %v2561
        %v2564 = vmul.f32 %v2556, %v2561
        %v2566 = vlaneseq
        %v2567 = vshrl.u32 %v2566, 7
        %v2568 = vsub.s32 0, %v2567
        %v2569 = vrot.slane %v2529, %v2568
        %v2571 = vadd.f32 %v2563, %v2569
        %v2572 = vadd.f32 %v2564, %v2569
        %v2573 = vpack.c.bf16 %v2572, %v2571
        %v2574 = vld [vmem:[%s803] sm:$0xf]
        %v2575 = vld [vmem:[%s803 + $0x4] sm:$0xf]
        %v2576 = vld [vmem:[%s803 + $0x8] sm:$0xf]
        %v2577 = vld [vmem:[%s803 + $0xc] sm:$0xf]
        %v2578 = vld [vmem:[%s806] sm:$0x1]
        %v2580 = vlaneseq
        %v2581 = vshrl.u32 %v2580, 7
        %v2582 = vsub.s32 0, %v2581
        %v2583 = vrot.slane %v2578, %v2582
        %v2589 = vunpack.c.l.b16 %v2574
        %v2590 = vunpack.c.l.b16 %v2575
        %v2591 = vunpack.c.l.b16 %v2576
        %v2592 = vunpack.c.l.b16 %v2577
        %v2593 = vpack.c.b16 %v2590, %v2589
        %v2594 = vpack.c.b16 %v2592, %v2591
        %v2598 = vsel %vm902, %v2573, 0
        %2600 = vmatprep.subr.bf16.mxu0 0
        %2601 = vmatpush1.bf16.msra.mxu0 0
        %2602 = vmatprep.subr.bf16.mxu0 0
        %2603 = vmatpush1.bf16.msra.mxu0 0
        %2604 = vmatprep.subr.bf16.mxu0 0
        %2605 = vmatpush1.bf16.msra.mxu0 0
        %2606 = vmatprep.subr.bf16.mxu0 0
        %2607 = vmatpush1.bf16.msra.mxu0 0
        %2608 = vmatprep.subr.bf16.mxu0 0
        %2609 = vmatpush1.bf16.msra.mxu0 0
        %2610 = vmatprep.subr.bf16.mxu0 0
        %2611 = vmatpush1.bf16.msra.mxu0 0
        %2612 = vmatprep.subr.bf16.mxu0 0
        %2613 = vmatpush1.bf16.msra.mxu0 %v2594
        %2614 = vmatprep.subr.bf16.mxu0 0
        %2615 = vmatpush1.bf16.msra.mxu0 %v2593
        %2616 = vmatprep.subr.bf16.mxu0 0
        %2617 = vmatpush2.bf16.msra.mxu0 0
        %2618 = vmatprep.subr.bf16.mxu0 0
        %2619 = vmatpush2.bf16.msra.mxu0 0
        %2620 = vmatprep.subr.bf16.mxu0 0
        %2621 = vmatpush2.bf16.msra.mxu0 0
        %2622 = vmatprep.subr.bf16.mxu0 0
        %2623 = vmatpush2.bf16.msra.mxu0 0
        %2624 = vmatprep.subr.bf16.mxu0 0
        %2625 = vmatpush2.bf16.msra.mxu0 0
        %2626 = vmatprep.subr.bf16.mxu0 0
        %2627 = vmatpush2.bf16.msra.mxu0 0
        %2628 = vmatprep.subr.bf16.mxu0 0
        %2629 = vmatpush2.bf16.msra.mxu0 0
        %2630 = vmatprep.subr.bf16.mxu0 0
        %2631 = vmatpush2.bf16.msra.mxu0 0
        %2632 = vmatprep.mubr.bf16.mxu0 0
        %2633 = vmatmul.mubr.bf16.gmra.mxu0 %v2598
        %v2634 = vpop.f32.mrf.mxu0
        %v2635 = vadd.f32 %v2583, %v2634
        %v2636 = vpop.f32.mrf.mxu0
        %v2637 = vpop.f32.mrf.mxu0
        %v2638 = vadd.f32 %v2583, %v2637
        %v2639 = vpop.f32.mrf.mxu0
        %2640 = vdwg.mxu0
        %v2641 = vmul.f32 %v2635, 0.5
        %v2642 = vmul.f32 %v2638, 0.5
        %v2643 = vmul.f32 %v2635, 0.044715
        %v2644 = vmul.f32 %v2638, 0.044715
        %v2645 = vmul.f32 %v2643, %v2635
        %v2646 = vmul.f32 %v2644, %v2638
        %v2647 = vmul.f32 %v2645, %v2635
        %v2648 = vmul.f32 %v2646, %v2638
        %v2649 = vadd.f32 %v2635, %v2647
        %v2650 = vadd.f32 %v2638, %v2648
        %v2651 = vmul.f32 %v2649, 0.7978846
        %v2652 = vmul.f32 %v2650, 0.7978846
        %v2653 = vtanh.pop %v2651
        %v2654 = vtanh.pop %v2652
        %v2655 = vadd.f32 %v2653, 1.0
        %v2656 = vadd.f32 %v2654, 1.0
        %v2657 = vmul.f32 %v2641, %v2655
        %v2658 = vmul.f32 %v2642, %v2656
        %v2659 = vpack.c.bf16 %v2658, %v2657
        %v2660 = vld [vmem:[%s811] sm:$0xf]
        %v2661 = vld [vmem:[%s811 + $0x4] sm:$0xf]
        %v2662 = vld [vmem:[%s811 + $0x8] sm:$0xf]
        %v2663 = vld [vmem:[%s811 + $0xc] sm:$0xf]
        %v2664 = vld [vmem:[%s811 + $0x10] sm:$0xf]
        %v2665 = vld [vmem:[%s811 + $0x14] sm:$0xf]
        %v2666 = vld [vmem:[%s811 + $0x18] sm:$0xf]
        %v2667 = vld [vmem:[%s811 + $0x1c] sm:$0xf]
        %v2668 = vld [vmem:[%s814] sm:$0x1]
        %v2670 = vlaneseq
        %v2671 = vshrl.u32 %v2670, 7
        %v2672 = vsub.s32 0, %v2671
        %v2673 = vrot.slane %v2668, %v2672
        %v2683 = vunpack.c.l.b16 %v2660
        %v2684 = vunpack.c.l.b16 %v2661
        %v2685 = vunpack.c.l.b16 %v2662
        %v2686 = vunpack.c.l.b16 %v2663
        %v2687 = vunpack.c.l.b16 %v2664
        %v2688 = vunpack.c.l.b16 %v2665
        %v2689 = vunpack.c.l.b16 %v2666
        %v2690 = vunpack.c.l.b16 %v2667
        %v2691 = vpack.c.b16 %v2684, %v2683
        %v2692 = vpack.c.b16 %v2686, %v2685
        %v2693 = vpack.c.b16 %v2688, %v2687
        %v2694 = vpack.c.b16 %v2690, %v2689
        %vm2699 = vcmask 523264
        %v2701 = vsel %vm2699, %v2659, 0
        %2703 = vmatprep.subr.bf16.mxu0 0
        %2704 = vmatpush1.bf16.msra.mxu0 0
        %2705 = vmatprep.subr.bf16.mxu0 0
        %2706 = vmatpush1.bf16.msra.mxu0 0
        %2707 = vmatprep.subr.bf16.mxu0 0
        %2708 = vmatpush1.bf16.msra.mxu0 0
        %2709 = vmatprep.subr.bf16.mxu0 0
        %2710 = vmatpush1.bf16.msra.mxu0 0
        %2711 = vmatprep.subr.bf16.mxu0 0
        %2712 = vmatpush1.bf16.msra.mxu0 %v2694
        %2713 = vmatprep.subr.bf16.mxu0 0
        %2714 = vmatpush1.bf16.msra.mxu0 %v2693
        %2715 = vmatprep.subr.bf16.mxu0 0
        %2716 = vmatpush1.bf16.msra.mxu0 %v2692
        %2717 = vmatprep.subr.bf16.mxu0 0
        %2718 = vmatpush1.bf16.msra.mxu0 %v2691
        %2719 = vmatprep.subr.bf16.mxu0 0
        %2720 = vmatpush2.bf16.msra.mxu0 0
        %2721 = vmatprep.subr.bf16.mxu0 0
        %2722 = vmatpush2.bf16.msra.mxu0 0
        %2723 = vmatprep.subr.bf16.mxu0 0
        %2724 = vmatpush2.bf16.msra.mxu0 0
        %2725 = vmatprep.subr.bf16.mxu0 0
        %2726 = vmatpush2.bf16.msra.mxu0 0
        %2727 = vmatprep.subr.bf16.mxu0 0
        %2728 = vmatpush2.bf16.msra.mxu0 0
        %2729 = vmatprep.subr.bf16.mxu0 0
        %2730 = vmatpush2.bf16.msra.mxu0 0
        %2731 = vmatprep.subr.bf16.mxu0 0
        %2732 = vmatpush2.bf16.msra.mxu0 0
        %2733 = vmatprep.subr.bf16.mxu0 0
        %2734 = vmatpush2.bf16.msra.mxu0 0
        %2735 = vmatprep.mubr.bf16.mxu0 0
        %2736 = vmatmul.mubr.bf16.gmra.mxu0 %v2701
        %v2737 = vpop.f32.mrf.mxu0
        %v2738 = vadd.f32 %v2673, %v2737
        %v2739 = vpop.f32.mrf.mxu0
        %v2740 = vpop.f32.mrf.mxu0
        %v2741 = vadd.f32 %v2673, %v2740
        %v2742 = vpop.f32.mrf.mxu0
        %2743 = vdwg.mxu0
        %v2744 = vadd.f32 %v2571, %v2738
        %v2745 = vadd.f32 %v2572, %v2741
        %v2746 = vld [vmem:[%s817] sm:$0x1]
        %v2747 = vld [vmem:[%s820] sm:$0x1]
        %v2748 = vsel %vm902, %v2744, 0.0
        %2749 = vadd.xlane.f32.xlu0 %v2748
        %v2750 = vpop.xlane.xlu0 %2749
        %v2751 = vsel %vm902, %v2745, 0.0
        %2752 = vadd.xlane.f32.xlu0 %v2751
        %v2753 = vpop.xlane.xlu0 %2752
        %v2754 = vmul.f32 %v2750, %v2536
        %v2755 = vmul.f32 %v2753, %v2536
        %v2756 = vsub.f32 %v2744, %v2754
        %v2757 = vsub.f32 %v2745, %v2755
        %v2758 = vmul.f32 %v2756, %v2756
        %v2759 = vmul.f32 %v2757, %v2757
        %v2760 = vsel %vm902, %v2758, 0.0
        %2761 = vadd.xlane.f32.xlu0 %v2760
        %v2762 = vpop.xlane.xlu0 %2761
        %v2763 = vsel %vm902, %v2759, 0.0
        %2764 = vadd.xlane.f32.xlu0 %v2763
        %v2765 = vpop.xlane.xlu0 %2764
        %v2766 = vmul.f32 %v2762, %v2536
        %v2767 = vmul.f32 %v2765, %v2536
        %v2768 = vadd.f32 %v2766, 1e-12
        %v2769 = vadd.f32 %v2767, 1e-12
        %v2770 = vrsqrt.pop %v2768
        %v2771 = vrsqrt.pop %v2769
        %v2772 = vmul.f32 %v2756, %v2770
        %v2773 = vmul.f32 %v2757, %v2771
        %v2775 = vlaneseq
        %v2776 = vshrl.u32 %v2775, 7
        %v2777 = vsub.s32 0, %v2776
        %v2778 = vrot.slane %v2746, %v2777
        %v2780 = vmul.f32 %v2772, %v2778
        %v2781 = vmul.f32 %v2773, %v2778
        %v2783 = vlaneseq
        %v2784 = vshrl.u32 %v2783, 7
        %v2785 = vsub.s32 0, %v2784
        %v2786 = vrot.slane %v2747, %v2785
        %v2788 = vadd.f32 %v2780, %v2786
        %v2789 = vadd.f32 %v2781, %v2786
        %2790 = vst.msk [vmem:[#allocation2] sm:$0xff] %vm902, %v2788
        %2791 = vst.msk [vmem:[#allocation2 + $0x8] sm:$0xff] %vm902, %v2789
        %p2792 = scmp.eq.s32.totalorder %s34, 1
        // Predicated region
        $region113: #{sentiment_classifier_forward.1} parent=99 // pred_check
          %p2793 = pneg %p2792
        $region114: #{sentiment_classifier_forward.1} parent=99 // pred_check_branch
          %2795 = sbr.rel (%p2793) target = $region116
        $region115: #{sentiment_classifier_forward.1} parent=99 // pred_region
          %v2797 = vrot.slane %v2789, 7
          %vm2799 = vcmask 1040384
          %v2800 = vsel %vm2799, %v2788, %v2797
          %v2801 = vpack.c.bf16 %v2800, %v2800
          %v2802 = vld [vmem:[#allocation3] sm:$0xf]
          %v2803 = vld [vmem:[#allocation3 + $0x4] sm:$0xf]
          %v2804 = vld [vmem:[#allocation3 + $0x8] sm:$0xf]
          %v2805 = vld [vmem:[#allocation3 + $0xc] sm:$0xf]
          %v2806 = vld [vmem:[%s17] sm:$0x1]
          %v2808 = vlaneseq
          %v2809 = vshrl.u32 %v2808, 7
          %v2810 = vsub.s32 0, %v2809
          %v2811 = vrot.slane %v2806, %v2810
          %v2817 = vunpack.c.l.b16 %v2802
          %v2818 = vunpack.c.l.b16 %v2803
          %v2819 = vunpack.c.l.b16 %v2804
          %v2820 = vunpack.c.l.b16 %v2805
          %v2821 = vpack.c.b16 %v2818, %v2817
          %v2822 = vpack.c.b16 %v2820, %v2819
          %v2826 = vsel %vm902, %v2801, 0
          %2828 = vmatprep.subr.bf16.mxu0 0
          %2829 = vmatpush1.bf16.msra.mxu0 0
          %2830 = vmatprep.subr.bf16.mxu0 0
          %2831 = vmatpush1.bf16.msra.mxu0 0
          %2832 = vmatprep.subr.bf16.mxu0 0
          %2833 = vmatpush1.bf16.msra.mxu0 0
          %2834 = vmatprep.subr.bf16.mxu0 0
          %2835 = vmatpush1.bf16.msra.mxu0 0
          %2836 = vmatprep.subr.bf16.mxu0 0
          %2837 = vmatpush1.bf16.msra.mxu0 0
          %2838 = vmatprep.subr.bf16.mxu0 0
          %2839 = vmatpush1.bf16.msra.mxu0 0
          %2840 = vmatprep.subr.bf16.mxu0 0
          %2841 = vmatpush1.bf16.msra.mxu0 %v2822
          %2842 = vmatprep.subr.bf16.mxu0 0
          %2843 = vmatpush1.bf16.msra.mxu0 %v2821
          %2844 = vmatprep.subr.bf16.mxu0 0
          %2845 = vmatpush2.bf16.msra.mxu0 0
          %2846 = vmatprep.subr.bf16.mxu0 0
          %2847 = vmatpush2.bf16.msra.mxu0 0
          %2848 = vmatprep.subr.bf16.mxu0 0
          %2849 = vmatpush2.bf16.msra.mxu0 0
          %2850 = vmatprep.subr.bf16.mxu0 0
          %2851 = vmatpush2.bf16.msra.mxu0 0
          %2852 = vmatprep.subr.bf16.mxu0 0
          %2853 = vmatpush2.bf16.msra.mxu0 0
          %2854 = vmatprep.subr.bf16.mxu0 0
          %2855 = vmatpush2.bf16.msra.mxu0 0
          %2856 = vmatprep.subr.bf16.mxu0 0
          %2857 = vmatpush2.bf16.msra.mxu0 0
          %2858 = vmatprep.subr.bf16.mxu0 0
          %2859 = vmatpush2.bf16.msra.mxu0 0
          %2860 = vmatprep.mubr.bf16.mxu0 0
          %2861 = vmatmul.mubr.bf16.gmra.mxu0 %v2826
          %v2862 = vpop.f32.mrf.mxu0
          %v2863 = vadd.f32 %v2811, %v2862
          %v2864 = vpop.f32.mrf.mxu0
          %v2865 = vpop.f32.mrf.mxu0
          %v2866 = vpop.f32.mrf.mxu0
          %2867 = vdwg.mxu0
          %v2868 = vtanh.pop %v2863
          %v2869 = vpack.c.bf16 %v2868, %v2868
          %v2870 = vld [vmem:[#allocation6] sm:$0xf]
          %v2871 = vld [vmem:[#allocation6 + $0x4] sm:$0xf]
          %v2872 = vld [vmem:[#allocation6 + $0x8] sm:$0xf]
          %v2873 = vld [vmem:[#allocation6 + $0xc] sm:$0xf]
          %v2874 = vld [vmem:[%s19] sm:$0x1]
          %v2876 = vlaneseq
          %v2877 = vshrl.u32 %v2876, 7
          %v2878 = vsub.s32 0, %v2877
          %v2879 = vrot.slane %v2874, %v2878
          %v2885 = vunpack.c.l.b16 %v2870
          %v2886 = vunpack.c.l.b16 %v2871
          %v2887 = vunpack.c.l.b16 %v2872
          %v2888 = vunpack.c.l.b16 %v2873
          %v2889 = vpack.c.b16 %v2886, %v2885
          %v2890 = vpack.c.b16 %v2888, %v2887
          %v2894 = vsel %vm902, %v2869, 0
          %2896 = vmatprep.subr.bf16.mxu0 0
          %2897 = vmatpush1.bf16.msra.mxu0 0
          %2898 = vmatprep.subr.bf16.mxu0 0
          %2899 = vmatpush1.bf16.msra.mxu0 0
          %2900 = vmatprep.subr.bf16.mxu0 0
          %2901 = vmatpush1.bf16.msra.mxu0 0
          %2902 = vmatprep.subr.bf16.mxu0 0
          %2903 = vmatpush1.bf16.msra.mxu0 0
          %2904 = vmatprep.subr.bf16.mxu0 0
          %2905 = vmatpush1.bf16.msra.mxu0 0
          %2906 = vmatprep.subr.bf16.mxu0 0
          %2907 = vmatpush1.bf16.msra.mxu0 0
          %2908 = vmatprep.subr.bf16.mxu0 0
          %2909 = vmatpush1.bf16.msra.mxu0 %v2890
          %2910 = vmatprep.subr.bf16.mxu0 0
          %2911 = vmatpush1.bf16.msra.mxu0 %v2889
          %2912 = vmatprep.subr.bf16.mxu0 0
          %2913 = vmatpush2.bf16.msra.mxu0 0
          %2914 = vmatprep.subr.bf16.mxu0 0
          %2915 = vmatpush2.bf16.msra.mxu0 0
          %2916 = vmatprep.subr.bf16.mxu0 0
          %2917 = vmatpush2.bf16.msra.mxu0 0
          %2918 = vmatprep.subr.bf16.mxu0 0
          %2919 = vmatpush2.bf16.msra.mxu0 0
          %2920 = vmatprep.subr.bf16.mxu0 0
          %2921 = vmatpush2.bf16.msra.mxu0 0
          %2922 = vmatprep.subr.bf16.mxu0 0
          %2923 = vmatpush2.bf16.msra.mxu0 0
          %2924 = vmatprep.subr.bf16.mxu0 0
          %2925 = vmatpush2.bf16.msra.mxu0 0
          %2926 = vmatprep.subr.bf16.mxu0 0
          %2927 = vmatpush2.bf16.msra.mxu0 0
          %2928 = vmatprep.mubr.bf16.mxu0 0
          %2929 = vmatmul.mubr.bf16.gmra.mxu0 %v2894
          %v2930 = vpop.f32.mrf.mxu0
          %v2931 = vadd.f32 %v2879, %v2930
          %v2932 = vpop.f32.mrf.mxu0
          %v2933 = vpop.f32.mrf.mxu0
          %v2934 = vpop.f32.mrf.mxu0
          %2935 = vdwg.mxu0
          %2936 = vst [vmem:[#allocation8] sm:$0x3] %v2931
        $region116: #{sentiment_classifier_forward.1} parent=99 // pred_fallthru
          _
        // Predicated region
        $region117: #{sentiment_classifier_forward.1} parent=99 // pred_check
          %p2937 = pneg %p527
        $region118: #{sentiment_classifier_forward.1} parent=99 // pred_check_branch
          %2939 = sbr.rel (%p2937) target = $region120
        $region119: #{sentiment_classifier_forward.1} parent=99 // pred_region
          %s2941 = ssub.s32 32, 32
          %2942 = vsyncadd [#allocation5], %s2941
          %s2944 = sshll.u32 [#allocation8], 4
          %s2945 = int_to_ptr.vmem [resolvable:$true] %s2944
          %2947 = dma.vmem_to_hbm [thread:$0]  %s2945, 32, %s20, [#allocation5]
        $region120: #{sentiment_classifier_forward.1} parent=99 // pred_fallthru
          _
        // Predicated region
        $region121: #{sentiment_classifier_forward.1} parent=99 // pred_check
          %p2948 = pneg %p527
        $region122: #{sentiment_classifier_forward.1} parent=99 // pred_check_branch
          %2950 = sbr.rel (%p2948) target = $region124
        $region123: #{sentiment_classifier_forward.1} parent=99 // pred_region
          %2951 = dma.done [#allocation5], 32
        $region124: #{sentiment_classifier_forward.1} parent=99 // pred_fallthru
          _
      $region100: #{sentiment_classifier_forward.1} parent=5 // pred_fallthru
        _
      %p2952 = scmp.le.s32.totalorder 2, %s29
      // Predicated region
      $region125: #{sentiment_classifier_forward.1} parent=5 // pred_check
        %p2953 = pneg %p2952
      $region126: #{sentiment_classifier_forward.1} parent=5 // pred_check_branch
        %2955 = sbr.rel (%p2953) target = $region128
      $region127: #{sentiment_classifier_forward.1} parent=5 // pred_region
        %s2956 = ssub.s32 %s29, 2
      $region128: #{sentiment_classifier_forward.1} parent=5 // pred_fallthru
        _
    $region6: #{sentiment_classifier_forward.1} parent=1 // loop_footer
      %s33 = sadd.s32 1, %s29
    $region7: #{sentiment_classifier_forward.1} parent=1 // loop_footer_branch
      %28 = sbr.rel target = $region3
    $region8: #{sentiment_classifier_forward.1} parent=1 // loop_exit
      _
    %2957 = vsyncpa [#allocation4], 1
    %s2958 = scalar_lea.sflag [#allocation4], 1
    %2959 = vsyncpa %s2958, 1
    %2960 = vsyncpa [#allocation7], 1
    %2961 = vsyncpa [#allocation5], 1
    %s2962 = scalar_lea.sflag [#allocation5], 1
    %2963 = vsyncpa %s2962, 1

</llo_original>
